<compile_context>
chip_gen: v7x
topology: tpu7x:2x2x1
jax: 0.10.0
libtpu: 0.0.40
codegen_flags: <defaults>
</compile_context>

<pallas_src>
import functools

import jax
import jax.numpy as jnp
from jax.experimental import pallas as pl
from jax.experimental.pallas import tpu as pltpu


_VMEM_LIMIT = 48 * 1024 * 1024   # explicit scoped-VMEM budget, safe on v5e-v7x


def _pick_tile(dim, max_tile, quantum):
    """Pick a tile size for `dim`.

    Returns (tile, padded_dim).  Prefers the full extent when dim <= max_tile,
    otherwise the largest multiple of `quantum` <= max_tile that divides `dim`
    exactly (no padding); falls back to padding only if no divisor exists.
    """
    if dim <= max_tile:
        return dim, dim
    t = (max_tile // quantum) * quantum
    while t >= quantum:
        if dim % t == 0:
            return t, dim
        t -= quantum
    t = (max_tile // quantum) * quantum
    return t, pl.cdiv(dim, t) * t


# ----------------------------- Pallas kernels -----------------------------

def _mm_stats_kernel(a_ref, b_ref, o_ref, stats_ref):
    """One (tm, tn) output tile: matmul + per-tile column sum / sum-of-squares.

    stats block is (8, tn): row 0 = column sums, row 1 = column sums of
    squares, rows 2..7 = 0 (sublane padding so the block stays (8, 128)-legal).
    """
    acc = jnp.dot(a_ref[...], b_ref[...], preferred_element_type=jnp.float32)
    o_ref[...] = acc.astype(o_ref.dtype)
    col_sum = jnp.sum(acc, axis=0, keepdims=True)          # (1, tn)
    col_sq = jnp.sum(acc * acc, axis=0, keepdims=True)     # (1, tn)
    rows = jax.lax.broadcasted_iota(jnp.int32, (8, 1), 0)
    stats_ref[...] = jnp.where(rows == 0, col_sum,
                               jnp.where(rows == 1, col_sq, 0.0))


def _mm_kernel(a_ref, b_ref, o_ref, *, act):
    """Plain (tm, tn) matmul tile with an optionally fused activation."""
    acc = jnp.dot(a_ref[...], b_ref[...], preferred_element_type=jnp.float32)
    if act == "tanh":
        acc = jnp.tanh(acc)
    o_ref[...] = acc.astype(o_ref.dtype)


def _affine_act_kernel(y_ref, scale_ref, shift_ref, o_ref, *, act):
    """act(y * scale + shift), per-channel scale/shift, math in f32."""
    v = y_ref[...].astype(jnp.float32) * scale_ref[...] + shift_ref[...]
    if act == "relu":
        v = jnp.maximum(v, 0.0)
    elif act == "tanh":
        v = jnp.tanh(v)
    o_ref[...] = v.astype(o_ref.dtype)


# ----------------------------- Pallas wrappers -----------------------------

def pallas_matmul(a, b, *, act="none", emit_stats=False,
                  out_dtype=jnp.bfloat16, tm_max=512, tn_max=256):
    """(M, K) @ (K, N), bf16 MXU operands, f32 accumulation.

    Grid is (M tiles, N tiles); K is a single full-extent tile (small in every
    layer of this network), so no accumulator scratch is needed.  When
    `emit_stats` is True, also returns per-column sum and sum-of-squares of the
    f32 result (for fused BatchNorm statistics).
    """
    M, K = a.shape
    Kb, N = b.shape
    assert K == Kb
    a = a.astype(jnp.bfloat16)
    b = b.astype(jnp.bfloat16)

    tm, Mp = _pick_tile(M, tm_max, 8)
    tn, Np = _pick_tile(N, tn_max, 128)
    if Mp != M:
        a = jnp.pad(a, ((0, Mp - M), (0, 0)))
    if Np != N:
        b = jnp.pad(b, ((0, 0), (0, Np - N)))
    gm, gn = Mp // tm, Np // tn

    in_specs = [pl.BlockSpec((tm, K), lambda i, j: (i, 0)),
                pl.BlockSpec((K, tn), lambda i, j: (0, j))]
    o_spec = pl.BlockSpec((tm, tn), lambda i, j: (i, j))
    cparams = pltpu.CompilerParams(
        dimension_semantics=("parallel", "parallel"),
        vmem_limit_bytes=_VMEM_LIMIT)

    if emit_stats:
        y, stats = pl.pallas_call(
            _mm_stats_kernel,
            out_shape=(jax.ShapeDtypeStruct((Mp, Np), out_dtype),
                       jax.ShapeDtypeStruct((gm * 8, Np), jnp.float32)),
            grid=(gm, gn),
            in_specs=in_specs,
            out_specs=(o_spec, pl.BlockSpec((8, tn), lambda i, j: (i, j))),
            compiler_params=cparams,
        )(a, b)
        stats = stats.reshape(gm, 8, Np)
        col_sum = jnp.sum(stats[:, 0, :N], axis=0)
        col_sq = jnp.sum(stats[:, 1, :N], axis=0)
        if Mp != M or Np != N:
            y = y[:M, :N]
        return y, col_sum, col_sq

    y = pl.pallas_call(
        functools.partial(_mm_kernel, act=act),
        out_shape=jax.ShapeDtypeStruct((Mp, Np), out_dtype),
        grid=(gm, gn),
        in_specs=in_specs,
        out_specs=o_spec,
        compiler_params=cparams,
    )(a, b)
    if Mp != M or Np != N:
        y = y[:M, :N]
    return y


def pallas_affine_act(y, scale, shift, act, *, out_dtype=jnp.bfloat16,
                      tr_max=512):
    """act(y * scale + shift) row-tiled over M; scale/shift per column."""
    M, C = y.shape
    tr, Mp = _pick_tile(M, tr_max, 8)
    if Mp != M:
        y = jnp.pad(y, ((0, Mp - M), (0, 0)))
    out = pl.pallas_call(
        functools.partial(_affine_act_kernel, act=act),
        out_shape=jax.ShapeDtypeStruct((Mp, C), out_dtype),
        grid=(Mp // tr,),
        in_specs=[pl.BlockSpec((tr, C), lambda i: (i, 0)),
                  pl.BlockSpec((1, C), lambda i: (0, 0)),
                  pl.BlockSpec((1, C), lambda i: (0, 0))],
        out_specs=pl.BlockSpec((tr, C), lambda i: (i, 0)),
        compiler_params=pltpu.CompilerParams(
            dimension_semantics=("parallel",),
            vmem_limit_bytes=_VMEM_LIMIT),
    )(y, scale.reshape(1, C).astype(jnp.float32),
      shift.reshape(1, C).astype(jnp.float32))
    return out[:M] if Mp != M else out


# ------------------------------ JAX glue ----------------------------------

def bn_scale_shift(col_sum, col_sq, count, gamma, beta, eps):
    """Training-mode BatchNorm2d (biased variance) -> per-channel scale/shift."""
    mean = col_sum / count
    var = col_sq / count - mean * mean
    # TODO(synk): E[x^2]-E[x]^2 in f32 can lose precision for very large
    # activations; a two-pass / Welford reduction would be safer.
    var = jnp.maximum(var, 0.0)
    inv = jax.lax.rsqrt(var + eps)
    scale = gamma * inv
    shift = beta - mean * scale
    return scale, shift


def _phase_patches(xp, H, W, dy, dx):
    """2x2-tap patches for output parity phase (dy, dx) of a s=2,k=4,p=1
    transposed conv.  xp is the (N, H+2, W+2, Cin) zero-padded NHWC input.
    Returns (N*H*W, 4*Cin), tap-major / channel-minor columns."""
    taps = []
    for oy in range(2):
        for ox in range(2):
            taps.append(xp[:, dy + oy: dy + oy + H, dx + ox: dx + ox + W, :])
    p = jnp.stack(taps, axis=3)                       # (N, H, W, 4, Cin)
    return p.reshape(p.shape[0] * H * W, -1)


def _phase_weight(w_t, dy, dx):
    """Matching (4*Cin, Cout) weight for phase (dy, dx).
    w_t is the PyTorch ConvTranspose2d weight (Cin, Cout, kH, kW)."""
    Cin, Cout = w_t.shape[0], w_t.shape[1]
    taps = []
    for oy in range(2):
        for ox in range(2):
            taps.append(w_t[:, :, 3 - dy - 2 * oy, 3 - dx - 2 * ox])  # (Cin, Cout)
    return jnp.stack(taps, axis=0).reshape(4 * Cin, Cout)


def _assemble_phases(phases, N, H, W, C):
    """Interleave phase outputs [(0,0),(0,1),(1,0),(1,1)] -> (N, 2H, 2W, C)."""
    ph = jnp.stack(phases, axis=0).reshape(2, 2, N, H, W, C)
    return ph.transpose(2, 3, 0, 4, 1, 5).reshape(N, 2 * H, 2 * W, C)


def convT_first_bn_relu(z, w_t, gamma, beta, eps):
    """ConvTranspose2d(k=4, s=1, p=0, bias=False) on a 1x1 input + BN + ReLU.
    z: (N, Cin, 1, 1); w_t: (Cin, Cout, 4, 4).  Returns NHWC (N, 4, 4, Cout)."""
    N, Cin = z.shape[0], z.shape[1]
    Cout = w_t.shape[1]
    a = z.reshape(N, Cin)
    b = w_t.reshape(Cin, Cout * 16)                  # columns ordered (co, kh, kw)
    y, s, q = pallas_matmul(a, b, emit_stats=True, out_dtype=jnp.bfloat16)
    ch_sum = s.reshape(Cout, 16).sum(axis=1)
    ch_sq = q.reshape(Cout, 16).sum(axis=1)
    scale, shift = bn_scale_shift(ch_sum, ch_sq, float(N * 16), gamma, beta, eps)
    # expand per-channel params to the (co, kh, kw) column ordering
    act = pallas_affine_act(y, jnp.repeat(scale, 16), jnp.repeat(shift, 16),
                            "relu", out_dtype=jnp.bfloat16)      # (N, Cout*16)
    return act.reshape(N, Cout, 4, 4).transpose(0, 2, 3, 1)       # NHWC


def convT_s2_bn_relu(x_nhwc, w_t, gamma, beta, eps):
    """ConvTranspose2d(k=4, s=2, p=1, bias=False) + BN + ReLU via the 4-phase
    sub-pixel decomposition.  x_nhwc: (N, H, W, Cin) -> (N, 2H, 2W, Cout)."""
    N, H, W, Cin = x_nhwc.shape
    Cout = w_t.shape[1]
    xp = jnp.pad(x_nhwc, ((0, 0), (1, 1), (1, 1), (0, 0)))
    phase_y = []
    tot_sum = jnp.zeros((Cout,), jnp.float32)
    tot_sq = jnp.zeros((Cout,), jnp.float32)
    for dy in range(2):
        for dx in range(2):
            a = _phase_patches(xp, H, W, dy, dx)          # (N*H*W, 4*Cin)
            b = _phase_weight(w_t, dy, dx)                # (4*Cin, Cout)
            y, s, q = pallas_matmul(a, b, emit_stats=True,
                                    out_dtype=jnp.bfloat16)
            phase_y.append(y)
            tot_sum = tot_sum + s
            tot_sq = tot_sq + q
    count = float(4 * N * H * W)
    scale, shift = bn_scale_shift(tot_sum, tot_sq, count, gamma, beta, eps)
    acts = [pallas_affine_act(y, scale, shift, "relu", out_dtype=jnp.bfloat16)
            for y in phase_y]
    return _assemble_phases(acts, N, H, W, Cout)


def convT_s2_tanh(x_nhwc, w_t):
    """Final ConvTranspose2d(k=4, s=2, p=1, bias=False) + Tanh (fused in the
    matmul epilogue).  Returns NHWC float32."""
    N, H, W, Cin = x_nhwc.shape
    Cout = w_t.shape[1]
    xp = jnp.pad(x_nhwc, ((0, 0), (1, 1), (1, 1), (0, 0)))
    phases = []
    for dy in range(2):
        for dx in range(2):
            a = _phase_patches(xp, H, W, dy, dx)
            b = _phase_weight(w_t, dy, dx)
            y = pallas_matmul(a, b, act="tanh", out_dtype=jnp.float32)
            phases.append(y)
    return _assemble_phases(phases, N, H, W, Cout)


def generator_forward(z, params):
    """DCGAN Generator forward: z (N, z_size, 1, 1) -> img (N, 3, 64, 64)."""
    x = convT_first_bn_relu(z, params["w1"], params["g1"], params["b1"], 1e-5)
    x = convT_s2_bn_relu(x, params["w2"], params["g2"], params["b2"], 1e-5)
    # the 3rd BatchNorm2d is constructed as BatchNorm2d(ngf*2, 0.8) -> eps=0.8
    x = convT_s2_bn_relu(x, params["w3"], params["g3"], params["b3"], 0.8)
    x = convT_s2_bn_relu(x, params["w4"], params["g4"], params["b4"], 1e-5)
    x = convT_s2_tanh(x, params["w5"])
    return jnp.transpose(x, (0, 3, 1, 2))            # NHWC -> NCHW


# ------------------------------- main --------------------------------------

if __name__ == "__main__":
    # Small-shape instantiation of the module (original: z_size=100, ngf=160).
    Z_SIZE, NGF, OUT, BATCH = 16, 8, 3, 2

    key = jax.random.PRNGKey(0)
    kz, k1, k2, k3, k4, k5 = jax.random.split(key, 6)

    def w(k, cin, cout):
        # ConvTranspose2d weight, PyTorch layout (Cin, Cout, kH, kW)
        return 0.02 * jax.random.normal(k, (cin, cout, 4, 4), jnp.float32)

    params = {
        "w1": w(k1, Z_SIZE, NGF * 8),
        "g1": jnp.ones((NGF * 8,), jnp.float32),
        "b1": jnp.zeros((NGF * 8,), jnp.float32),
        "w2": w(k2, NGF * 8, NGF * 4),
        "g2": jnp.ones((NGF * 4,), jnp.float32),
        "b2": jnp.zeros((NGF * 4,), jnp.float32),
        "w3": w(k3, NGF * 4, NGF * 2),
        "g3": jnp.ones((NGF * 2,), jnp.float32),
        "b3": jnp.zeros((NGF * 2,), jnp.float32),
        "w4": w(k4, NGF * 2, NGF),
        "g4": jnp.ones((NGF,), jnp.float32),
        "b4": jnp.zeros((NGF,), jnp.float32),
        "w5": w(k5, NGF, OUT),
    }

    z = jax.random.normal(kz, (BATCH, Z_SIZE, 1, 1), jnp.float32)

    img = jax.jit(generator_forward)(z, params)
    img = jax.block_until_ready(img)

    assert img.shape == (BATCH, OUT, 64, 64), img.shape
    assert bool(jnp.all(jnp.isfinite(img)))
    assert bool(jnp.all(jnp.abs(img) <= 1.0 + 1e-6))   # tanh range
    print("KERNEL_OK")
</pallas_src>

<mosaic_0001>
module attributes {stable_mosaic.version = 11 : i64} {
  func.func @_mm_stats_kernel(%arg0: i32, %arg1: i32, %arg2: memref<2x16xbf16, #tpu.memory_space<vmem>>, %arg3: memref<16x256xbf16, #tpu.memory_space<vmem>>, %arg4: memref<2x256xbf16, #tpu.memory_space<vmem>>, %arg5: memref<8x256xf32, #tpu.memory_space<vmem>>) attributes {dimension_semantics = [#tpu.dimension_semantics<parallel>, #tpu.dimension_semantics<parallel>], iteration_bounds = array<i64: 1, 4>, scalar_prefetch = 0 : i64, scratch_operands = 0 : i64, tpu.core_type = #tpu.core_type<tc>, window_params = [{transform_indices = @transform_0, window_bounds = array<i64: 2, 16>}, {transform_indices = @transform_1, window_bounds = array<i64: 16, 256>}, {transform_indices = @transform_2, window_bounds = array<i64: 2, 256>}, {transform_indices = @transform_3, window_bounds = array<i64: 8, 256>}]} {
    %c0 = arith.constant 0 : index
    %c0_0 = arith.constant 0 : index
    %0 = vector.load %arg2[%c0, %c0_0] : memref<2x16xbf16, #tpu.memory_space<vmem>>, vector<2x16xbf16>
    %c0_1 = arith.constant 0 : index
    %c0_2 = arith.constant 0 : index
    %1 = vector.load %arg3[%c0_1, %c0_2] : memref<16x256xbf16, #tpu.memory_space<vmem>>, vector<16x256xbf16>
    %cst = arith.constant dense<0.000000e+00> : vector<2x256xf32>
    %2 = tpu.matmul %0, %1, %cst {dimension_numbers = #tpu.dot_dimension_numbers<[1], [0], [0], [1], [0, 0, 1, 1], [], []>} : vector<2x16xbf16>, vector<16x256xbf16>, vector<2x256xf32> -> vector<2x256xf32>
    %3 = arith.truncf %2 : vector<2x256xf32> to vector<2x256xbf16>
    %c0_3 = arith.constant 0 : index
    %c0_4 = arith.constant 0 : index
    %4 = vector.load %arg4[%c0_3, %c0_4] : memref<2x256xbf16, #tpu.memory_space<vmem>>, vector<2x256xbf16>
    tpu.vector_store %arg4[%c0_3, %c0_4], %3 {strides = array<i32>} : memref<2x256xbf16, #tpu.memory_space<vmem>>, vector<2x256xbf16>,
    %cst_5 = arith.constant dense<0.000000e+00> : vector<256xf32>
    %5 = vector.multi_reduction <add>, %2, %cst_5 [0] : vector<2x256xf32> to vector<256xf32>
    %6 = vector.shape_cast %5 : vector<256xf32> to vector<1x256xf32>
    %7 = arith.mulf %2, %2 : vector<2x256xf32>
    %cst_6 = arith.constant dense<0.000000e+00> : vector<256xf32>
    %8 = vector.multi_reduction <add>, %7, %cst_6 [0] : vector<2x256xf32> to vector<256xf32>
    %9 = vector.shape_cast %8 : vector<256xf32> to vector<1x256xf32>
    %10 = tpu.iota {dimensions = array<i32: 0>} : vector<8x1xi32>
    %c0_i32 = arith.constant 0 : i32
    %11 = vector.broadcast %c0_i32 : i32 to vector<8x1xi32>
    %12 = arith.cmpi eq, %10, %11 : vector<8x1xi32>
    %c1_i32 = arith.constant 1 : i32
    %13 = vector.broadcast %c1_i32 : i32 to vector<8x1xi32>
    %14 = arith.cmpi eq, %10, %13 : vector<8x1xi32>
    %cst_7 = arith.constant 0.000000e+00 : f32
    %15 = vector.shape_cast %14 : vector<8x1xi1> to vector<8x1xi1>
    %16 = vector.broadcast %15 : vector<8x1xi1> to vector<8x256xi1>
    %17 = vector.shape_cast %9 : vector<1x256xf32> to vector<1x256xf32>
    %18 = vector.broadcast %17 : vector<1x256xf32> to vector<8x256xf32>
    %19 = vector.broadcast %cst_7 : f32 to vector<8x256xf32>
    %20 = arith.select %16, %18, %19 : vector<8x256xi1>, vector<8x256xf32>
    %21 = vector.shape_cast %12 : vector<8x1xi1> to vector<8x1xi1>
    %22 = vector.broadcast %21 : vector<8x1xi1> to vector<8x256xi1>
    %23 = vector.shape_cast %6 : vector<1x256xf32> to vector<1x256xf32>
    %24 = vector.broadcast %23 : vector<1x256xf32> to vector<8x256xf32>
    %25 = arith.select %22, %24, %20 : vector<8x256xi1>, vector<8x256xf32>
    %c0_8 = arith.constant 0 : index
    %c0_9 = arith.constant 0 : index
    %26 = vector.load %arg5[%c0_8, %c0_9] : memref<8x256xf32, #tpu.memory_space<vmem>>, vector<8x256xf32>
    tpu.vector_store %arg5[%c0_8, %c0_9], %25 {strides = array<i32>} : memref<8x256xf32, #tpu.memory_space<vmem>>, vector<8x256xf32>,
    return
  }
  func.func @transform_0(%arg0: i32, %arg1: i32) -> (i32, i32) {
    %c0_i32 = arith.constant 0 : i32
    %c0_i32_0 = arith.constant 0 : i32
    return %arg0, %c0_i32 : i32, i32
  }
  func.func @transform_1(%arg0: i32, %arg1: i32) -> (i32, i32) {
    %c0_i32 = arith.constant 0 : i32
    %c0_i32_0 = arith.constant 0 : i32
    return %c0_i32, %arg1 : i32, i32
  }
  func.func @transform_2(%arg0: i32, %arg1: i32) -> (i32, i32) {
    %c0_i32 = arith.constant 0 : i32
    return %arg0, %arg1 : i32, i32
  }
  func.func @transform_3(%arg0: i32, %arg1: i32) -> (i32, i32) {
    %c0_i32 = arith.constant 0 : i32
    return %arg0, %arg1 : i32, i32
  }
}

module attributes {stable_mosaic.version = 11 : i64} {
  func.func @_affine_act_kernel(%arg0: i32, %arg1: memref<2x1024xbf16, #tpu.memory_space<vmem>>, %arg2: memref<1x1024xf32, #tpu.memory_space<vmem>>, %arg3: memref<1x1024xf32, #tpu.memory_space<vmem>>, %arg4: memref<2x1024xbf16, #tpu.memory_space<vmem>>) attributes {dimension_semantics = [#tpu.dimension_semantics<parallel>], iteration_bounds = array<i64: 1>, scalar_prefetch = 0 : i64, scratch_operands = 0 : i64, tpu.core_type = #tpu.core_type<tc>, window_params = [{transform_indices = @transform_0, window_bounds = array<i64: 2, 1024>}, {pipeline_mode = #tpu.pipeline_mode<synchronous>, transform_indices = @transform_1, window_bounds = array<i64: 1, 1024>}, {pipeline_mode = #tpu.pipeline_mode<synchronous>, transform_indices = @transform_2, window_bounds = array<i64: 1, 1024>}, {transform_indices = @transform_3, window_bounds = array<i64: 2, 1024>}]} {
    %c0 = arith.constant 0 : index
    %c0_0 = arith.constant 0 : index
    %0 = vector.load %arg1[%c0, %c0_0] : memref<2x1024xbf16, #tpu.memory_space<vmem>>, vector<2x1024xbf16>
    %1 = arith.extf %0 : vector<2x1024xbf16> to vector<2x1024xf32>
    %c0_1 = arith.constant 0 : index
    %c0_2 = arith.constant 0 : index
    %2 = vector.load %arg2[%c0_1, %c0_2] : memref<1x1024xf32, #tpu.memory_space<vmem>>, vector<1x1024xf32>
    %3 = vector.broadcast %2 : vector<1x1024xf32> to vector<2x1024xf32>
    %4 = arith.mulf %1, %3 : vector<2x1024xf32>
    %c0_3 = arith.constant 0 : index
    %c0_4 = arith.constant 0 : index
    %5 = vector.load %arg3[%c0_3, %c0_4] : memref<1x1024xf32, #tpu.memory_space<vmem>>, vector<1x1024xf32>
    %6 = vector.broadcast %5 : vector<1x1024xf32> to vector<2x1024xf32>
    %7 = arith.addf %4, %6 : vector<2x1024xf32>
    %cst = arith.constant 0.000000e+00 : f32
    %8 = vector.broadcast %cst : f32 to vector<2x1024xf32>
    %9 = arith.maximumf %7, %8 : vector<2x1024xf32>
    %10 = arith.truncf %9 : vector<2x1024xf32> to vector<2x1024xbf16>
    %c0_5 = arith.constant 0 : index
    %c0_6 = arith.constant 0 : index
    %11 = vector.load %arg4[%c0_5, %c0_6] : memref<2x1024xbf16, #tpu.memory_space<vmem>>, vector<2x1024xbf16>
    tpu.vector_store %arg4[%c0_5, %c0_6], %10 {strides = array<i32>} : memref<2x1024xbf16, #tpu.memory_space<vmem>>, vector<2x1024xbf16>,
    return
  }
  func.func @transform_0(%arg0: i32) -> (i32, i32) {
    %c0_i32 = arith.constant 0 : i32
    %c0_i32_0 = arith.constant 0 : i32
    return %arg0, %c0_i32 : i32, i32
  }
  func.func @transform_1(%arg0: i32) -> (i32, i32) {
    %c0_i32 = arith.constant 0 : i32
    %c0_i32_0 = arith.constant 0 : i32
    %c0_i32_1 = arith.constant 0 : i32
    return %c0_i32, %c0_i32_0 : i32, i32
  }
  func.func @transform_2(%arg0: i32) -> (i32, i32) {
    %c0_i32 = arith.constant 0 : i32
    %c0_i32_0 = arith.constant 0 : i32
    %c0_i32_1 = arith.constant 0 : i32
    return %c0_i32, %c0_i32_0 : i32, i32
  }
  func.func @transform_3(%arg0: i32) -> (i32, i32) {
    %c0_i32 = arith.constant 0 : i32
    %c0_i32_0 = arith.constant 0 : i32
    return %arg0, %c0_i32 : i32, i32
  }
}

module attributes {stable_mosaic.version = 11 : i64} {
  func.func @_mm_stats_kernel(%arg0: i32, %arg1: i32, %arg2: memref<32x256xbf16, #tpu.memory_space<vmem>>, %arg3: memref<256x32xbf16, #tpu.memory_space<vmem>>, %arg4: memref<32x32xbf16, #tpu.memory_space<vmem>>, %arg5: memref<8x32xf32, #tpu.memory_space<vmem>>) attributes {dimension_semantics = [#tpu.dimension_semantics<parallel>, #tpu.dimension_semantics<parallel>], iteration_bounds = array<i64: 1, 1>, scalar_prefetch = 0 : i64, scratch_operands = 0 : i64, tpu.core_type = #tpu.core_type<tc>, window_params = [{transform_indices = @transform_0, window_bounds = array<i64: 32, 256>}, {transform_indices = @transform_1, window_bounds = array<i64: 256, 32>}, {transform_indices = @transform_2, window_bounds = array<i64: 32, 32>}, {transform_indices = @transform_3, window_bounds = array<i64: 8, 32>}]} {
    %c0 = arith.constant 0 : index
    %c0_0 = arith.constant 0 : index
    %0 = vector.load %arg2[%c0, %c0_0] : memref<32x256xbf16, #tpu.memory_space<vmem>>, vector<32x256xbf16>
    %c0_1 = arith.constant 0 : index
    %c0_2 = arith.constant 0 : index
    %1 = vector.load %arg3[%c0_1, %c0_2] : memref<256x32xbf16, #tpu.memory_space<vmem>>, vector<256x32xbf16>
    %cst = arith.constant dense<0.000000e+00> : vector<32x32xf32>
    %2 = tpu.matmul %0, %1, %cst {dimension_numbers = #tpu.dot_dimension_numbers<[1], [0], [0], [1], [0, 0, 1, 1], [], []>} : vector<32x256xbf16>, vector<256x32xbf16>, vector<32x32xf32> -> vector<32x32xf32>
    %3 = arith.truncf %2 : vector<32x32xf32> to vector<32x32xbf16>
    %c0_3 = arith.constant 0 : index
    %c0_4 = arith.constant 0 : index
    %4 = vector.load %arg4[%c0_3, %c0_4] : memref<32x32xbf16, #tpu.memory_space<vmem>>, vector<32x32xbf16>
    tpu.vector_store %arg4[%c0_3, %c0_4], %3 {strides = array<i32>} : memref<32x32xbf16, #tpu.memory_space<vmem>>, vector<32x32xbf16>,
    %cst_5 = arith.constant dense<0.000000e+00> : vector<32xf32>
    %5 = vector.multi_reduction <add>, %2, %cst_5 [0] : vector<32x32xf32> to vector<32xf32>
    %6 = vector.shape_cast %5 : vector<32xf32> to vector<1x32xf32>
    %7 = arith.mulf %2, %2 : vector<32x32xf32>
    %cst_6 = arith.constant dense<0.000000e+00> : vector<32xf32>
    %8 = vector.multi_reduction <add>, %7, %cst_6 [0] : vector<32x32xf32> to vector<32xf32>
    %9 = vector.shape_cast %8 : vector<32xf32> to vector<1x32xf32>
    %10 = tpu.iota {dimensions = array<i32: 0>} : vector<8x1xi32>
    %c0_i32 = arith.constant 0 : i32
    %11 = vector.broadcast %c0_i32 : i32 to vector<8x1xi32>
    %12 = arith.cmpi eq, %10, %11 : vector<8x1xi32>
    %c1_i32 = arith.constant 1 : i32
    %13 = vector.broadcast %c1_i32 : i32 to vector<8x1xi32>
    %14 = arith.cmpi eq, %10, %13 : vector<8x1xi32>
    %cst_7 = arith.constant 0.000000e+00 : f32
    %15 = vector.shape_cast %14 : vector<8x1xi1> to vector<8x1xi1>
    %16 = vector.broadcast %15 : vector<8x1xi1> to vector<8x32xi1>
    %17 = vector.shape_cast %9 : vector<1x32xf32> to vector<1x32xf32>
    %18 = vector.broadcast %17 : vector<1x32xf32> to vector<8x32xf32>
    %19 = vector.broadcast %cst_7 : f32 to vector<8x32xf32>
    %20 = arith.select %16, %18, %19 : vector<8x32xi1>, vector<8x32xf32>
    %21 = vector.shape_cast %12 : vector<8x1xi1> to vector<8x1xi1>
    %22 = vector.broadcast %21 : vector<8x1xi1> to vector<8x32xi1>
    %23 = vector.shape_cast %6 : vector<1x32xf32> to vector<1x32xf32>
    %24 = vector.broadcast %23 : vector<1x32xf32> to vector<8x32xf32>
    %25 = arith.select %22, %24, %20 : vector<8x32xi1>, vector<8x32xf32>
    %c0_8 = arith.constant 0 : index
    %c0_9 = arith.constant 0 : index
    %26 = vector.load %arg5[%c0_8, %c0_9] : memref<8x32xf32, #tpu.memory_space<vmem>>, vector<8x32xf32>
    tpu.vector_store %arg5[%c0_8, %c0_9], %25 {strides = array<i32>} : memref<8x32xf32, #tpu.memory_space<vmem>>, vector<8x32xf32>,
    return
  }
  func.func @transform_0(%arg0: i32, %arg1: i32) -> (i32, i32) {
    %c0_i32 = arith.constant 0 : i32
    %c0_i32_0 = arith.constant 0 : i32
    return %arg0, %c0_i32 : i32, i32
  }
  func.func @transform_1(%arg0: i32, %arg1: i32) -> (i32, i32) {
    %c0_i32 = arith.constant 0 : i32
    %c0_i32_0 = arith.constant 0 : i32
    return %c0_i32, %arg1 : i32, i32
  }
  func.func @transform_2(%arg0: i32, %arg1: i32) -> (i32, i32) {
    %c0_i32 = arith.constant 0 : i32
    return %arg0, %arg1 : i32, i32
  }
  func.func @transform_3(%arg0: i32, %arg1: i32) -> (i32, i32) {
    %c0_i32 = arith.constant 0 : i32
    return %arg0, %arg1 : i32, i32
  }
}

module attributes {stable_mosaic.version = 11 : i64} {
  func.func @_affine_act_kernel(%arg0: i32, %arg1: memref<32x32xbf16, #tpu.memory_space<vmem>>, %arg2: memref<1x32xf32, #tpu.memory_space<vmem>>, %arg3: memref<1x32xf32, #tpu.memory_space<vmem>>, %arg4: memref<32x32xbf16, #tpu.memory_space<vmem>>) attributes {dimension_semantics = [#tpu.dimension_semantics<parallel>], iteration_bounds = array<i64: 1>, scalar_prefetch = 0 : i64, scratch_operands = 0 : i64, tpu.core_type = #tpu.core_type<tc>, window_params = [{transform_indices = @transform_0, window_bounds = array<i64: 32, 32>}, {pipeline_mode = #tpu.pipeline_mode<synchronous>, transform_indices = @transform_1, window_bounds = array<i64: 1, 32>}, {pipeline_mode = #tpu.pipeline_mode<synchronous>, transform_indices = @transform_2, window_bounds = array<i64: 1, 32>}, {transform_indices = @transform_3, window_bounds = array<i64: 32, 32>}]} {
    %c0 = arith.constant 0 : index
    %c0_0 = arith.constant 0 : index
    %0 = vector.load %arg1[%c0, %c0_0] : memref<32x32xbf16, #tpu.memory_space<vmem>>, vector<32x32xbf16>
    %1 = arith.extf %0 : vector<32x32xbf16> to vector<32x32xf32>
    %c0_1 = arith.constant 0 : index
    %c0_2 = arith.constant 0 : index
    %2 = vector.load %arg2[%c0_1, %c0_2] : memref<1x32xf32, #tpu.memory_space<vmem>>, vector<1x32xf32>
    %3 = vector.broadcast %2 : vector<1x32xf32> to vector<32x32xf32>
    %4 = arith.mulf %1, %3 : vector<32x32xf32>
    %c0_3 = arith.constant 0 : index
    %c0_4 = arith.constant 0 : index
    %5 = vector.load %arg3[%c0_3, %c0_4] : memref<1x32xf32, #tpu.memory_space<vmem>>, vector<1x32xf32>
    %6 = vector.broadcast %5 : vector<1x32xf32> to vector<32x32xf32>
    %7 = arith.addf %4, %6 : vector<32x32xf32>
    %cst = arith.constant 0.000000e+00 : f32
    %8 = vector.broadcast %cst : f32 to vector<32x32xf32>
    %9 = arith.maximumf %7, %8 : vector<32x32xf32>
    %10 = arith.truncf %9 : vector<32x32xf32> to vector<32x32xbf16>
    %c0_5 = arith.constant 0 : index
    %c0_6 = arith.constant 0 : index
    %11 = vector.load %arg4[%c0_5, %c0_6] : memref<32x32xbf16, #tpu.memory_space<vmem>>, vector<32x32xbf16>
    tpu.vector_store %arg4[%c0_5, %c0_6], %10 {strides = array<i32>} : memref<32x32xbf16, #tpu.memory_space<vmem>>, vector<32x32xbf16>,
    return
  }
  func.func @transform_0(%arg0: i32) -> (i32, i32) {
    %c0_i32 = arith.constant 0 : i32
    %c0_i32_0 = arith.constant 0 : i32
    return %arg0, %c0_i32 : i32, i32
  }
  func.func @transform_1(%arg0: i32) -> (i32, i32) {
    %c0_i32 = arith.constant 0 : i32
    %c0_i32_0 = arith.constant 0 : i32
    %c0_i32_1 = arith.constant 0 : i32
    return %c0_i32, %c0_i32_0 : i32, i32
  }
  func.func @transform_2(%arg0: i32) -> (i32, i32) {
    %c0_i32 = arith.constant 0 : i32
    %c0_i32_0 = arith.constant 0 : i32
    %c0_i32_1 = arith.constant 0 : i32
    return %c0_i32, %c0_i32_0 : i32, i32
  }
  func.func @transform_3(%arg0: i32) -> (i32, i32) {
    %c0_i32 = arith.constant 0 : i32
    %c0_i32_0 = arith.constant 0 : i32
    return %arg0, %c0_i32 : i32, i32
  }
}

module attributes {stable_mosaic.version = 11 : i64} {
  func.func @_mm_stats_kernel(%arg0: i32, %arg1: i32, %arg2: memref<128x128xbf16, #tpu.memory_space<vmem>>, %arg3: memref<128x16xbf16, #tpu.memory_space<vmem>>, %arg4: memref<128x16xbf16, #tpu.memory_space<vmem>>, %arg5: memref<8x16xf32, #tpu.memory_space<vmem>>) attributes {dimension_semantics = [#tpu.dimension_semantics<parallel>, #tpu.dimension_semantics<parallel>], iteration_bounds = array<i64: 1, 1>, scalar_prefetch = 0 : i64, scratch_operands = 0 : i64, tpu.core_type = #tpu.core_type<tc>, window_params = [{transform_indices = @transform_0, window_bounds = array<i64: 128, 128>}, {transform_indices = @transform_1, window_bounds = array<i64: 128, 16>}, {transform_indices = @transform_2, window_bounds = array<i64: 128, 16>}, {transform_indices = @transform_3, window_bounds = array<i64: 8, 16>}]} {
    %c0 = arith.constant 0 : index
    %c0_0 = arith.constant 0 : index
    %0 = vector.load %arg2[%c0, %c0_0] : memref<128x128xbf16, #tpu.memory_space<vmem>>, vector<128x128xbf16>
    %c0_1 = arith.constant 0 : index
    %c0_2 = arith.constant 0 : index
    %1 = vector.load %arg3[%c0_1, %c0_2] : memref<128x16xbf16, #tpu.memory_space<vmem>>, vector<128x16xbf16>
    %cst = arith.constant dense<0.000000e+00> : vector<128x16xf32>
    %2 = tpu.matmul %0, %1, %cst {dimension_numbers = #tpu.dot_dimension_numbers<[1], [0], [0], [1], [0, 0, 1, 1], [], []>} : vector<128x128xbf16>, vector<128x16xbf16>, vector<128x16xf32> -> vector<128x16xf32>
    %3 = arith.truncf %2 : vector<128x16xf32> to vector<128x16xbf16>
    %c0_3 = arith.constant 0 : index
    %c0_4 = arith.constant 0 : index
    %4 = vector.load %arg4[%c0_3, %c0_4] : memref<128x16xbf16, #tpu.memory_space<vmem>>, vector<128x16xbf16>
    tpu.vector_store %arg4[%c0_3, %c0_4], %3 {strides = array<i32>} : memref<128x16xbf16, #tpu.memory_space<vmem>>, vector<128x16xbf16>,
    %cst_5 = arith.constant dense<0.000000e+00> : vector<16xf32>
    %5 = vector.multi_reduction <add>, %2, %cst_5 [0] : vector<128x16xf32> to vector<16xf32>
    %6 = vector.shape_cast %5 : vector<16xf32> to vector<1x16xf32>
    %7 = arith.mulf %2, %2 : vector<128x16xf32>
    %cst_6 = arith.constant dense<0.000000e+00> : vector<16xf32>
    %8 = vector.multi_reduction <add>, %7, %cst_6 [0] : vector<128x16xf32> to vector<16xf32>
    %9 = vector.shape_cast %8 : vector<16xf32> to vector<1x16xf32>
    %10 = tpu.iota {dimensions = array<i32: 0>} : vector<8x1xi32>
    %c0_i32 = arith.constant 0 : i32
    %11 = vector.broadcast %c0_i32 : i32 to vector<8x1xi32>
    %12 = arith.cmpi eq, %10, %11 : vector<8x1xi32>
    %c1_i32 = arith.constant 1 : i32
    %13 = vector.broadcast %c1_i32 : i32 to vector<8x1xi32>
    %14 = arith.cmpi eq, %10, %13 : vector<8x1xi32>
    %cst_7 = arith.constant 0.000000e+00 : f32
    %15 = vector.shape_cast %14 : vector<8x1xi1> to vector<8x1xi1>
    %16 = vector.broadcast %15 : vector<8x1xi1> to vector<8x16xi1>
    %17 = vector.shape_cast %9 : vector<1x16xf32> to vector<1x16xf32>
    %18 = vector.broadcast %17 : vector<1x16xf32> to vector<8x16xf32>
    %19 = vector.broadcast %cst_7 : f32 to vector<8x16xf32>
    %20 = arith.select %16, %18, %19 : vector<8x16xi1>, vector<8x16xf32>
    %21 = vector.shape_cast %12 : vector<8x1xi1> to vector<8x1xi1>
    %22 = vector.broadcast %21 : vector<8x1xi1> to vector<8x16xi1>
    %23 = vector.shape_cast %6 : vector<1x16xf32> to vector<1x16xf32>
    %24 = vector.broadcast %23 : vector<1x16xf32> to vector<8x16xf32>
    %25 = arith.select %22, %24, %20 : vector<8x16xi1>, vector<8x16xf32>
    %c0_8 = arith.constant 0 : index
    %c0_9 = arith.constant 0 : index
    %26 = vector.load %arg5[%c0_8, %c0_9] : memref<8x16xf32, #tpu.memory_space<vmem>>, vector<8x16xf32>
    tpu.vector_store %arg5[%c0_8, %c0_9], %25 {strides = array<i32>} : memref<8x16xf32, #tpu.memory_space<vmem>>, vector<8x16xf32>,
    return
  }
  func.func @transform_0(%arg0: i32, %arg1: i32) -> (i32, i32) {
    %c0_i32 = arith.constant 0 : i32
    %c0_i32_0 = arith.constant 0 : i32
    return %arg0, %c0_i32 : i32, i32
  }
  func.func @transform_1(%arg0: i32, %arg1: i32) -> (i32, i32) {
    %c0_i32 = arith.constant 0 : i32
    %c0_i32_0 = arith.constant 0 : i32
    return %c0_i32, %arg1 : i32, i32
  }
  func.func @transform_2(%arg0: i32, %arg1: i32) -> (i32, i32) {
    %c0_i32 = arith.constant 0 : i32
    return %arg0, %arg1 : i32, i32
  }
  func.func @transform_3(%arg0: i32, %arg1: i32) -> (i32, i32) {
    %c0_i32 = arith.constant 0 : i32
    return %arg0, %arg1 : i32, i32
  }
}

module attributes {stable_mosaic.version = 11 : i64} {
  func.func @_affine_act_kernel(%arg0: i32, %arg1: memref<128x16xbf16, #tpu.memory_space<vmem>>, %arg2: memref<1x16xf32, #tpu.memory_space<vmem>>, %arg3: memref<1x16xf32, #tpu.memory_space<vmem>>, %arg4: memref<128x16xbf16, #tpu.memory_space<vmem>>) attributes {dimension_semantics = [#tpu.dimension_semantics<parallel>], iteration_bounds = array<i64: 1>, scalar_prefetch = 0 : i64, scratch_operands = 0 : i64, tpu.core_type = #tpu.core_type<tc>, window_params = [{transform_indices = @transform_0, window_bounds = array<i64: 128, 16>}, {pipeline_mode = #tpu.pipeline_mode<synchronous>, transform_indices = @transform_1, window_bounds = array<i64: 1, 16>}, {pipeline_mode = #tpu.pipeline_mode<synchronous>, transform_indices = @transform_2, window_bounds = array<i64: 1, 16>}, {transform_indices = @transform_3, window_bounds = array<i64: 128, 16>}]} {
    %c0 = arith.constant 0 : index
    %c0_0 = arith.constant 0 : index
    %0 = vector.load %arg1[%c0, %c0_0] : memref<128x16xbf16, #tpu.memory_space<vmem>>, vector<128x16xbf16>
    %1 = arith.extf %0 : vector<128x16xbf16> to vector<128x16xf32>
    %c0_1 = arith.constant 0 : index
    %c0_2 = arith.constant 0 : index
    %2 = vector.load %arg2[%c0_1, %c0_2] : memref<1x16xf32, #tpu.memory_space<vmem>>, vector<1x16xf32>
    %3 = vector.broadcast %2 : vector<1x16xf32> to vector<128x16xf32>
    %4 = arith.mulf %1, %3 : vector<128x16xf32>
    %c0_3 = arith.constant 0 : index
    %c0_4 = arith.constant 0 : index
    %5 = vector.load %arg3[%c0_3, %c0_4] : memref<1x16xf32, #tpu.memory_space<vmem>>, vector<1x16xf32>
    %6 = vector.broadcast %5 : vector<1x16xf32> to vector<128x16xf32>
    %7 = arith.addf %4, %6 : vector<128x16xf32>
    %cst = arith.constant 0.000000e+00 : f32
    %8 = vector.broadcast %cst : f32 to vector<128x16xf32>
    %9 = arith.maximumf %7, %8 : vector<128x16xf32>
    %10 = arith.truncf %9 : vector<128x16xf32> to vector<128x16xbf16>
    %c0_5 = arith.constant 0 : index
    %c0_6 = arith.constant 0 : index
    %11 = vector.load %arg4[%c0_5, %c0_6] : memref<128x16xbf16, #tpu.memory_space<vmem>>, vector<128x16xbf16>
    tpu.vector_store %arg4[%c0_5, %c0_6], %10 {strides = array<i32>} : memref<128x16xbf16, #tpu.memory_space<vmem>>, vector<128x16xbf16>,
    return
  }
  func.func @transform_0(%arg0: i32) -> (i32, i32) {
    %c0_i32 = arith.constant 0 : i32
    %c0_i32_0 = arith.constant 0 : i32
    return %arg0, %c0_i32 : i32, i32
  }
  func.func @transform_1(%arg0: i32) -> (i32, i32) {
    %c0_i32 = arith.constant 0 : i32
    %c0_i32_0 = arith.constant 0 : i32
    %c0_i32_1 = arith.constant 0 : i32
    return %c0_i32, %c0_i32_0 : i32, i32
  }
  func.func @transform_2(%arg0: i32) -> (i32, i32) {
    %c0_i32 = arith.constant 0 : i32
    %c0_i32_0 = arith.constant 0 : i32
    %c0_i32_1 = arith.constant 0 : i32
    return %c0_i32, %c0_i32_0 : i32, i32
  }
  func.func @transform_3(%arg0: i32) -> (i32, i32) {
    %c0_i32 = arith.constant 0 : i32
    %c0_i32_0 = arith.constant 0 : i32
    return %arg0, %c0_i32 : i32, i32
  }
}

module attributes {stable_mosaic.version = 11 : i64} {
  func.func @_mm_stats_kernel(%arg0: i32, %arg1: i32, %arg2: memref<512x64xbf16, #tpu.memory_space<vmem>>, %arg3: memref<64x8xbf16, #tpu.memory_space<vmem>>, %arg4: memref<512x8xbf16, #tpu.memory_space<vmem>>, %arg5: memref<8x8xf32, #tpu.memory_space<vmem>>) attributes {dimension_semantics = [#tpu.dimension_semantics<parallel>, #tpu.dimension_semantics<parallel>], iteration_bounds = array<i64: 1, 1>, scalar_prefetch = 0 : i64, scratch_operands = 0 : i64, tpu.core_type = #tpu.core_type<tc>, window_params = [{transform_indices = @transform_0, window_bounds = array<i64: 512, 64>}, {transform_indices = @transform_1, window_bounds = array<i64: 64, 8>}, {transform_indices = @transform_2, window_bounds = array<i64: 512, 8>}, {transform_indices = @transform_3, window_bounds = array<i64: 8, 8>}]} {
    %c0 = arith.constant 0 : index
    %c0_0 = arith.constant 0 : index
    %0 = vector.load %arg2[%c0, %c0_0] : memref<512x64xbf16, #tpu.memory_space<vmem>>, vector<512x64xbf16>
    %c0_1 = arith.constant 0 : index
    %c0_2 = arith.constant 0 : index
    %1 = vector.load %arg3[%c0_1, %c0_2] : memref<64x8xbf16, #tpu.memory_space<vmem>>, vector<64x8xbf16>
    %cst = arith.constant dense<0.000000e+00> : vector<512x8xf32>
    %2 = tpu.matmul %0, %1, %cst {dimension_numbers = #tpu.dot_dimension_numbers<[1], [0], [0], [1], [0, 0, 1, 1], [], []>} : vector<512x64xbf16>, vector<64x8xbf16>, vector<512x8xf32> -> vector<512x8xf32>
    %3 = arith.truncf %2 : vector<512x8xf32> to vector<512x8xbf16>
    %c0_3 = arith.constant 0 : index
    %c0_4 = arith.constant 0 : index
    %4 = vector.load %arg4[%c0_3, %c0_4] : memref<512x8xbf16, #tpu.memory_space<vmem>>, vector<512x8xbf16>
    tpu.vector_store %arg4[%c0_3, %c0_4], %3 {strides = array<i32>} : memref<512x8xbf16, #tpu.memory_space<vmem>>, vector<512x8xbf16>,
    %cst_5 = arith.constant dense<0.000000e+00> : vector<8xf32>
    %5 = vector.multi_reduction <add>, %2, %cst_5 [0] : vector<512x8xf32> to vector<8xf32>
    %6 = vector.shape_cast %5 : vector<8xf32> to vector<1x8xf32>
    %7 = arith.mulf %2, %2 : vector<512x8xf32>
    %cst_6 = arith.constant dense<0.000000e+00> : vector<8xf32>
    %8 = vector.multi_reduction <add>, %7, %cst_6 [0] : vector<512x8xf32> to vector<8xf32>
    %9 = vector.shape_cast %8 : vector<8xf32> to vector<1x8xf32>
    %10 = tpu.iota {dimensions = array<i32: 0>} : vector<8x1xi32>
    %c0_i32 = arith.constant 0 : i32
    %11 = vector.broadcast %c0_i32 : i32 to vector<8x1xi32>
    %12 = arith.cmpi eq, %10, %11 : vector<8x1xi32>
    %c1_i32 = arith.constant 1 : i32
    %13 = vector.broadcast %c1_i32 : i32 to vector<8x1xi32>
    %14 = arith.cmpi eq, %10, %13 : vector<8x1xi32>
    %cst_7 = arith.constant 0.000000e+00 : f32
    %15 = vector.shape_cast %14 : vector<8x1xi1> to vector<8x1xi1>
    %16 = vector.broadcast %15 : vector<8x1xi1> to vector<8x8xi1>
    %17 = vector.shape_cast %9 : vector<1x8xf32> to vector<1x8xf32>
    %18 = vector.broadcast %17 : vector<1x8xf32> to vector<8x8xf32>
    %19 = vector.broadcast %cst_7 : f32 to vector<8x8xf32>
    %20 = arith.select %16, %18, %19 : vector<8x8xi1>, vector<8x8xf32>
    %21 = vector.shape_cast %12 : vector<8x1xi1> to vector<8x1xi1>
    %22 = vector.broadcast %21 : vector<8x1xi1> to vector<8x8xi1>
    %23 = vector.shape_cast %6 : vector<1x8xf32> to vector<1x8xf32>
    %24 = vector.broadcast %23 : vector<1x8xf32> to vector<8x8xf32>
    %25 = arith.select %22, %24, %20 : vector<8x8xi1>, vector<8x8xf32>
    %c0_8 = arith.constant 0 : index
    %c0_9 = arith.constant 0 : index
    %26 = vector.load %arg5[%c0_8, %c0_9] : memref<8x8xf32, #tpu.memory_space<vmem>>, vector<8x8xf32>
    tpu.vector_store %arg5[%c0_8, %c0_9], %25 {strides = array<i32>} : memref<8x8xf32, #tpu.memory_space<vmem>>, vector<8x8xf32>,
    return
  }
  func.func @transform_0(%arg0: i32, %arg1: i32) -> (i32, i32) {
    %c0_i32 = arith.constant 0 : i32
    %c0_i32_0 = arith.constant 0 : i32
    return %arg0, %c0_i32 : i32, i32
  }
  func.func @transform_1(%arg0: i32, %arg1: i32) -> (i32, i32) {
    %c0_i32 = arith.constant 0 : i32
    %c0_i32_0 = arith.constant 0 : i32
    return %c0_i32, %arg1 : i32, i32
  }
  func.func @transform_2(%arg0: i32, %arg1: i32) -> (i32, i32) {
    %c0_i32 = arith.constant 0 : i32
    return %arg0, %arg1 : i32, i32
  }
  func.func @transform_3(%arg0: i32, %arg1: i32) -> (i32, i32) {
    %c0_i32 = arith.constant 0 : i32
    return %arg0, %arg1 : i32, i32
  }
}

module attributes {stable_mosaic.version = 11 : i64} {
  func.func @_affine_act_kernel(%arg0: i32, %arg1: memref<512x8xbf16, #tpu.memory_space<vmem>>, %arg2: memref<1x8xf32, #tpu.memory_space<vmem>>, %arg3: memref<1x8xf32, #tpu.memory_space<vmem>>, %arg4: memref<512x8xbf16, #tpu.memory_space<vmem>>) attributes {dimension_semantics = [#tpu.dimension_semantics<parallel>], iteration_bounds = array<i64: 1>, scalar_prefetch = 0 : i64, scratch_operands = 0 : i64, tpu.core_type = #tpu.core_type<tc>, window_params = [{transform_indices = @transform_0, window_bounds = array<i64: 512, 8>}, {pipeline_mode = #tpu.pipeline_mode<synchronous>, transform_indices = @transform_1, window_bounds = array<i64: 1, 8>}, {pipeline_mode = #tpu.pipeline_mode<synchronous>, transform_indices = @transform_2, window_bounds = array<i64: 1, 8>}, {transform_indices = @transform_3, window_bounds = array<i64: 512, 8>}]} {
    %c0 = arith.constant 0 : index
    %c0_0 = arith.constant 0 : index
    %0 = vector.load %arg1[%c0, %c0_0] : memref<512x8xbf16, #tpu.memory_space<vmem>>, vector<512x8xbf16>
    %1 = arith.extf %0 : vector<512x8xbf16> to vector<512x8xf32>
    %c0_1 = arith.constant 0 : index
    %c0_2 = arith.constant 0 : index
    %2 = vector.load %arg2[%c0_1, %c0_2] : memref<1x8xf32, #tpu.memory_space<vmem>>, vector<1x8xf32>
    %3 = vector.broadcast %2 : vector<1x8xf32> to vector<512x8xf32>
    %4 = arith.mulf %1, %3 : vector<512x8xf32>
    %c0_3 = arith.constant 0 : index
    %c0_4 = arith.constant 0 : index
    %5 = vector.load %arg3[%c0_3, %c0_4] : memref<1x8xf32, #tpu.memory_space<vmem>>, vector<1x8xf32>
    %6 = vector.broadcast %5 : vector<1x8xf32> to vector<512x8xf32>
    %7 = arith.addf %4, %6 : vector<512x8xf32>
    %cst = arith.constant 0.000000e+00 : f32
    %8 = vector.broadcast %cst : f32 to vector<512x8xf32>
    %9 = arith.maximumf %7, %8 : vector<512x8xf32>
    %10 = arith.truncf %9 : vector<512x8xf32> to vector<512x8xbf16>
    %c0_5 = arith.constant 0 : index
    %c0_6 = arith.constant 0 : index
    %11 = vector.load %arg4[%c0_5, %c0_6] : memref<512x8xbf16, #tpu.memory_space<vmem>>, vector<512x8xbf16>
    tpu.vector_store %arg4[%c0_5, %c0_6], %10 {strides = array<i32>} : memref<512x8xbf16, #tpu.memory_space<vmem>>, vector<512x8xbf16>,
    return
  }
  func.func @transform_0(%arg0: i32) -> (i32, i32) {
    %c0_i32 = arith.constant 0 : i32
    %c0_i32_0 = arith.constant 0 : i32
    return %arg0, %c0_i32 : i32, i32
  }
  func.func @transform_1(%arg0: i32) -> (i32, i32) {
    %c0_i32 = arith.constant 0 : i32
    %c0_i32_0 = arith.constant 0 : i32
    %c0_i32_1 = arith.constant 0 : i32
    return %c0_i32, %c0_i32_0 : i32, i32
  }
  func.func @transform_2(%arg0: i32) -> (i32, i32) {
    %c0_i32 = arith.constant 0 : i32
    %c0_i32_0 = arith.constant 0 : i32
    %c0_i32_1 = arith.constant 0 : i32
    return %c0_i32, %c0_i32_0 : i32, i32
  }
  func.func @transform_3(%arg0: i32) -> (i32, i32) {
    %c0_i32 = arith.constant 0 : i32
    %c0_i32_0 = arith.constant 0 : i32
    return %arg0, %c0_i32 : i32, i32
  }
}

module attributes {stable_mosaic.version = 11 : i64} {
  func.func @_mm_kernel(%arg0: i32, %arg1: i32, %arg2: memref<512x32xbf16, #tpu.memory_space<vmem>>, %arg3: memref<32x3xbf16, #tpu.memory_space<vmem>>, %arg4: memref<512x3xf32, #tpu.memory_space<vmem>>) attributes {dimension_semantics = [#tpu.dimension_semantics<parallel>, #tpu.dimension_semantics<parallel>], iteration_bounds = array<i64: 4, 1>, scalar_prefetch = 0 : i64, scratch_operands = 0 : i64, tpu.core_type = #tpu.core_type<tc>, window_params = [{transform_indices = @transform_0, window_bounds = array<i64: 512, 32>}, {transform_indices = @transform_1, window_bounds = array<i64: 32, 3>}, {transform_indices = @transform_2, window_bounds = array<i64: 512, 3>}]} {
    %c0 = arith.constant 0 : index
    %c0_0 = arith.constant 0 : index
    %0 = vector.load %arg2[%c0, %c0_0] : memref<512x32xbf16, #tpu.memory_space<vmem>>, vector<512x32xbf16>
    %c0_1 = arith.constant 0 : index
    %c0_2 = arith.constant 0 : index
    %1 = vector.load %arg3[%c0_1, %c0_2] : memref<32x3xbf16, #tpu.memory_space<vmem>>, vector<32x3xbf16>
    %cst = arith.constant dense<0.000000e+00> : vector<512x3xf32>
    %2 = tpu.matmul %0, %1, %cst {dimension_numbers = #tpu.dot_dimension_numbers<[1], [0], [0], [1], [0, 0, 1, 1], [], []>} : vector<512x32xbf16>, vector<32x3xbf16>, vector<512x3xf32> -> vector<512x3xf32>
    %3 = math.tanh %2 : vector<512x3xf32>
    %c0_3 = arith.constant 0 : index
    %c0_4 = arith.constant 0 : index
    %4 = vector.load %arg4[%c0_3, %c0_4] : memref<512x3xf32, #tpu.memory_space<vmem>>, vector<512x3xf32>
    tpu.vector_store %arg4[%c0_3, %c0_4], %3 {strides = array<i32>} : memref<512x3xf32, #tpu.memory_space<vmem>>, vector<512x3xf32>,
    return
  }
  func.func @transform_0(%arg0: i32, %arg1: i32) -> (i32, i32) {
    %c0_i32 = arith.constant 0 : i32
    %c0_i32_0 = arith.constant 0 : i32
    return %arg0, %c0_i32 : i32, i32
  }
  func.func @transform_1(%arg0: i32, %arg1: i32) -> (i32, i32) {
    %c0_i32 = arith.constant 0 : i32
    %c0_i32_0 = arith.constant 0 : i32
    return %c0_i32, %arg1 : i32, i32
  }
  func.func @transform_2(%arg0: i32, %arg1: i32) -> (i32, i32) {
    %c0_i32 = arith.constant 0 : i32
    return %arg0, %arg1 : i32, i32
  }
}

</mosaic_0001>

<llo_original>
// kernel: generator_forward.31
$region0: #{generator_forward.31}
  #allocation0 [shape = 'u32[]', space=smem, size = 0x4, offset = 0x4, fixed_abs, tag = 'smem constant byte address 0x4 - core index']
  #allocation1 [shape = 'u32[144,128]{1,0:T(1,128)}', space=vmem, size = 0x12000, scoped, tag = 'internal scratch']
  %s0 = inlined_call_operand.vmem [shape: bf16[2,1024], index: 0, kind: input, shape index: {}]
  %s1 = inlined_call_operand.vmem [shape: f32[1,1024], index: 1, kind: input, shape index: {}]
  %s2 = inlined_call_operand.vmem [shape: f32[1,1024], index: 2, kind: input, shape index: {}]
  %s3 = inlined_call_operand.vmem [shape: bf16[2,1024], index: 3, kind: output, shape index: {}]
  %s4 = sld [smem:[#allocation0]]
  $region22: #{generator_forward.31} parent=0
    _
  %s6 = ssub.s32 1, %s4
  %s7 = scalar_select 0, %s6, %s4
  // Predicated region
  $region2: #{generator_forward.31} parent=0 // pred_check
    _
  $region3: #{generator_forward.31} parent=0 // pred_check_branch
    %9 = sbr.rel (0) target = $region5
  $region4: #{generator_forward.31} parent=0 // pred_region
    _
  $region5: #{generator_forward.31} parent=0 // pred_fallthru
    _
  // Predicated region
  $region6: #{generator_forward.31} parent=0 // pred_check
    _
  $region7: #{generator_forward.31} parent=0 // pred_check_branch
    %11 = sbr.rel (0) target = $region9
  $region8: #{generator_forward.31} parent=0 // pred_region
    _
  $region9: #{generator_forward.31} parent=0 // pred_fallthru
    _
  // Predicated region
  $region10: #{generator_forward.31} parent=0 // pred_check
    _
  $region11: #{generator_forward.31} parent=0 // pred_check_branch
    %13 = sbr.rel (0) target = $region13
  $region12: #{generator_forward.31} parent=0 // pred_region
    _
  $region13: #{generator_forward.31} parent=0 // pred_fallthru
    _
  %v14 = vld [vmem:[%s0] sm:$0xff]
  %v15 = vunpack.c.l.bf16 %v14
  %v16 = vunpack.c.h.bf16 %v14
  %v17 = vld [vmem:[%s1] sm:$0xff]
  %v19 = vlaneseq
  %v20 = vshrl.u32 %v19, 7
  %v21 = vsub.s32 0, %v20
  %v22 = vrot.slane %v17, %v21
  %v23 = vlaneseq
  %v24 = vshrl.u32 %v23, 7
  %v25 = vsub.s32 1, %v24
  %v26 = vrot.slane %v17, %v25
  %v27 = vlaneseq
  %v28 = vshrl.u32 %v27, 7
  %v29 = vsub.s32 2, %v28
  %v30 = vrot.slane %v17, %v29
  %v31 = vlaneseq
  %v32 = vshrl.u32 %v31, 7
  %v33 = vsub.s32 3, %v32
  %v34 = vrot.slane %v17, %v33
  %v35 = vlaneseq
  %v36 = vshrl.u32 %v35, 7
  %v37 = vsub.s32 4, %v36
  %v38 = vrot.slane %v17, %v37
  %v39 = vlaneseq
  %v40 = vshrl.u32 %v39, 7
  %v41 = vsub.s32 5, %v40
  %v42 = vrot.slane %v17, %v41
  %v43 = vlaneseq
  %v44 = vshrl.u32 %v43, 7
  %v45 = vsub.s32 6, %v44
  %v46 = vrot.slane %v17, %v45
  %v47 = vlaneseq
  %v48 = vshrl.u32 %v47, 7
  %v49 = vsub.s32 7, %v48
  %v50 = vrot.slane %v17, %v49
  %v51 = vcombine.low %v22, %v26
  %v52 = vcombine.low %v30, %v34
  %v54 = vunpack.c.l.s4 1983009808
  %v55 = vunpack.c.0.s8 %v54
  %v56 = vlaneseq
  %v57 = vshrl.u32 %v56, 7
  %v58 = vsub.s32 %v55, %v57
  %v59 = vrot.slane %v51, %v58
  %v61 = vunpack.c.l.s4 1983009808
  %v62 = vunpack.c.0.s8 %v61
  %v63 = vlaneseq
  %v64 = vshrl.u32 %v63, 7
  %v65 = vsub.s32 %v62, %v64
  %v66 = vrot.slane %v52, %v65
  %v67 = vcombine.low %v59, %v66
  %v68 = vcombine.low %v38, %v42
  %v69 = vcombine.low %v46, %v50
  %v71 = vunpack.c.l.s4 1983009808
  %v72 = vunpack.c.0.s8 %v71
  %v73 = vlaneseq
  %v74 = vshrl.u32 %v73, 7
  %v75 = vsub.s32 %v72, %v74
  %v76 = vrot.slane %v68, %v75
  %v78 = vunpack.c.l.s4 1983009808
  %v79 = vunpack.c.0.s8 %v78
  %v80 = vlaneseq
  %v81 = vshrl.u32 %v80, 7
  %v82 = vsub.s32 %v79, %v81
  %v83 = vrot.slane %v69, %v82
  %v84 = vcombine.low %v76, %v83
  %v87 = vmul.f32 %v15, %v67
  %v88 = vmul.f32 %v16, %v84
  %v89 = vld [vmem:[%s2] sm:$0xff]
  %v91 = vlaneseq
  %v92 = vshrl.u32 %v91, 7
  %v93 = vsub.s32 0, %v92
  %v94 = vrot.slane %v89, %v93
  %v95 = vlaneseq
  %v96 = vshrl.u32 %v95, 7
  %v97 = vsub.s32 1, %v96
  %v98 = vrot.slane %v89, %v97
  %v99 = vlaneseq
  %v100 = vshrl.u32 %v99, 7
  %v101 = vsub.s32 2, %v100
  %v102 = vrot.slane %v89, %v101
  %v103 = vlaneseq
  %v104 = vshrl.u32 %v103, 7
  %v105 = vsub.s32 3, %v104
  %v106 = vrot.slane %v89, %v105
  %v107 = vlaneseq
  %v108 = vshrl.u32 %v107, 7
  %v109 = vsub.s32 4, %v108
  %v110 = vrot.slane %v89, %v109
  %v111 = vlaneseq
  %v112 = vshrl.u32 %v111, 7
  %v113 = vsub.s32 5, %v112
  %v114 = vrot.slane %v89, %v113
  %v115 = vlaneseq
  %v116 = vshrl.u32 %v115, 7
  %v117 = vsub.s32 6, %v116
  %v118 = vrot.slane %v89, %v117
  %v119 = vlaneseq
  %v120 = vshrl.u32 %v119, 7
  %v121 = vsub.s32 7, %v120
  %v122 = vrot.slane %v89, %v121
  %v123 = vcombine.low %v94, %v98
  %v124 = vcombine.low %v102, %v106
  %v126 = vunpack.c.l.s4 1983009808
  %v127 = vunpack.c.0.s8 %v126
  %v128 = vlaneseq
  %v129 = vshrl.u32 %v128, 7
  %v130 = vsub.s32 %v127, %v129
  %v131 = vrot.slane %v123, %v130
  %v133 = vunpack.c.l.s4 1983009808
  %v134 = vunpack.c.0.s8 %v133
  %v135 = vlaneseq
  %v136 = vshrl.u32 %v135, 7
  %v137 = vsub.s32 %v134, %v136
  %v138 = vrot.slane %v124, %v137
  %v139 = vcombine.low %v131, %v138
  %v140 = vcombine.low %v110, %v114
  %v141 = vcombine.low %v118, %v122
  %v143 = vunpack.c.l.s4 1983009808
  %v144 = vunpack.c.0.s8 %v143
  %v145 = vlaneseq
  %v146 = vshrl.u32 %v145, 7
  %v147 = vsub.s32 %v144, %v146
  %v148 = vrot.slane %v140, %v147
  %v150 = vunpack.c.l.s4 1983009808
  %v151 = vunpack.c.0.s8 %v150
  %v152 = vlaneseq
  %v153 = vshrl.u32 %v152, 7
  %v154 = vsub.s32 %v151, %v153
  %v155 = vrot.slane %v141, %v154
  %v156 = vcombine.low %v148, %v155
  %v159 = vadd.f32 %v87, %v139
  %v160 = vadd.f32 %v88, %v156
  %v161 = vmax.f32 %v159, 0.0
  %v162 = vmax.f32 %v160, 0.0
  %v165 = vcombine.high %v161, %v161
  %v167 = vunpack.c.l.s4 1983009808
  %v168 = vunpack.c.0.s8 %v167
  %v169 = vlaneseq
  %v170 = vshrl.u32 %v169, 7
  %v171 = vsub.s32 %v168, %v170
  %v172 = vrot.slane %v161, %v171
  %v174 = vunpack.c.l.s4 1983009808
  %v175 = vunpack.c.0.s8 %v174
  %v176 = vlaneseq
  %v177 = vshrl.u32 %v176, 7
  %v178 = vsub.s32 %v175, %v177
  %v179 = vrot.slane %v165, %v178
  %v180 = vcombine.high %v172, %v172
  %v181 = vcombine.high %v179, %v179
  %v182 = vcombine.high %v162, %v162
  %v184 = vunpack.c.l.s4 1983009808
  %v185 = vunpack.c.0.s8 %v184
  %v186 = vlaneseq
  %v187 = vshrl.u32 %v186, 7
  %v188 = vsub.s32 %v185, %v187
  %v189 = vrot.slane %v162, %v188
  %v191 = vunpack.c.l.s4 1983009808
  %v192 = vunpack.c.0.s8 %v191
  %v193 = vlaneseq
  %v194 = vshrl.u32 %v193, 7
  %v195 = vsub.s32 %v192, %v194
  %v196 = vrot.slane %v182, %v195
  %v197 = vcombine.high %v189, %v189
  %v198 = vcombine.high %v196, %v196
  %v207 = vpack.c.bf16 %v172, %v172
  %v208 = vpack.c.bf16 %v180, %v180
  %v209 = vpack.c.bf16 %v179, %v179
  %v210 = vpack.c.bf16 %v181, %v181
  %v211 = vpack.c.bf16 %v189, %v189
  %v212 = vpack.c.bf16 %v197, %v197
  %v213 = vpack.c.bf16 %v196, %v196
  %v214 = vpack.c.bf16 %v198, %v198
  %v223 = vcombine.low %v207, %v208
  %v224 = vcombine.low %v209, %v210
  %v225 = vcombine.low %v211, %v212
  %v226 = vcombine.low %v213, %v214
  %v228 = vunpack.c.l.s4 1966171168
  %v229 = vunpack.c.0.s8 %v228
  %v230 = vlaneseq
  %v231 = vshrl.u32 %v230, 7
  %v232 = vsub.s32 %v229, %v231
  %v233 = vrot.slane %v223, %v232
  %v235 = vunpack.c.l.s4 1966171168
  %v236 = vunpack.c.0.s8 %v235
  %v237 = vlaneseq
  %v238 = vshrl.u32 %v237, 7
  %v239 = vsub.s32 %v236, %v238
  %v240 = vrot.slane %v224, %v239
  %v242 = vunpack.c.l.s4 1966171168
  %v243 = vunpack.c.0.s8 %v242
  %v244 = vlaneseq
  %v245 = vshrl.u32 %v244, 7
  %v246 = vsub.s32 %v243, %v245
  %v247 = vrot.slane %v225, %v246
  %v249 = vunpack.c.l.s4 1966171168
  %v250 = vunpack.c.0.s8 %v249
  %v251 = vlaneseq
  %v252 = vshrl.u32 %v251, 7
  %v253 = vsub.s32 %v250, %v252
  %v254 = vrot.slane %v226, %v253
  %v255 = vcombine.low %v233, %v240
  %v256 = vcombine.low %v247, %v254
  %v258 = vunpack.c.l.s4 1966171168
  %v259 = vunpack.c.0.s8 %v258
  %v260 = vlaneseq
  %v261 = vshrl.u32 %v260, 7
  %v262 = vsub.s32 %v259, %v261
  %v263 = vrot.slane %v255, %v262
  %v265 = vunpack.c.l.s4 1966171168
  %v266 = vunpack.c.0.s8 %v265
  %v267 = vlaneseq
  %v268 = vshrl.u32 %v267, 7
  %v269 = vsub.s32 %v266, %v268
  %v270 = vrot.slane %v256, %v269
  %v271 = vcombine.low %v263, %v270
  %273 = vst [vmem:[%s3] sm:$0xff] %v271
  // Predicated region
  $region14: #{generator_forward.31} parent=0 // pred_check
    _
  $region15: #{generator_forward.31} parent=0 // pred_check_branch
    %275 = sbr.rel (0) target = $region17
  $region16: #{generator_forward.31} parent=0 // pred_region
    _
  $region17: #{generator_forward.31} parent=0 // pred_fallthru
    _
  // Predicated region
  $region18: #{generator_forward.31} parent=0 // pred_check
    _
  $region19: #{generator_forward.31} parent=0 // pred_check_branch
    %277 = sbr.rel (0) target = $region21
  $region20: #{generator_forward.31} parent=0 // pred_region
    _
  $region21: #{generator_forward.31} parent=0 // pred_fallthru
    _

// kernel: generator_forward.30
$region0: #{generator_forward.30}
  #allocation0 [shape = 'u32[]', space=smem, size = 0x4, offset = 0x4, fixed_abs, tag = 'smem constant byte address 0x4 - core index']
  #allocation1 [shape = 'u32[144,128]{1,0:T(1,128)}', space=vmem, size = 0x12000, scoped, tag = 'internal scratch']
  %s0 = inlined_call_operand.vmem [shape: bf16[2,16], index: 0, kind: input, shape index: {}]
  %s1 = inlined_call_operand.vmem [shape: bf16[16,1024], index: 1, kind: input, shape index: {}]
  %s2 = inlined_call_operand.vmem [shape: bf16[2,1024], index: 2, kind: output, shape index: {0}]
  %s3 = inlined_call_operand.vmem [shape: f32[8,1024], index: 3, kind: output, shape index: {1}]
  %4 = xla_tuple %s2, %s3
  %s5 = sld [smem:[#allocation0]]
  $region87: #{generator_forward.30} parent=0
    _
  %s7 = ssub.s32 1, %s5
  %s8 = scalar_select 0, %s7, %s5
  $region1: #{generator_forward.30} parent=0
    #allocation2 [shape = 'u8[16384]{0}', space=vmem, size = 0x4000, scoped, tag = 'input window, operand 1']
    loop: start=0, step=1, limit=6
    $region2: #{generator_forward.30} parent=1 // loop_pre_header
      _
    $region3: #{generator_forward.30} parent=1 // loop_header
      %s10 = sphi 0, %s14
      %p11 = scmp.ge.s32.totalorder %s10, 6
      %s17 = sphi 0, %s29
      %s18 = sphi 0, %s25
      %s19 = sphi 0, %s17
      %s20 = sphi 0, %s18
      %s21 = sphi 0, %s19
      %s22 = sphi 0, %s20
      %s32 = sphi 0, %s34
      %s35 = sphi 0, %s32
      %s36 = sphi 0, %s35
      %s52 = sphi 0, %s36
      %s58 = sphi 0, %s60
      %s61 = sphi 0, %s58
      %s62 = sphi 0, %s61
      %s78 = sphi 0, %s62
      %s86 = sphi 0, %s88
      %s89 = sphi 0, %s86
      %s90 = sphi 0, %s89
      %s106 = sphi 0, %s90
      %s114 = sphi 0, %s116
      %s117 = sphi 0, %s114
      %s118 = sphi 0, %s117
      %s134 = sphi 0, %s118
    $region4: #{generator_forward.30} parent=1 // loop_header_branch
      %13 = sbr.rel (%p11) target = $region8
    $region5: #{generator_forward.30} parent=1 // loop_body
      %s15 = ssub.s32 %s10, 1
      %s16 = ssub.s32 %s10, 2
      %s23 = sadd.s32 1, %s18
      %p24 = scmp.ge.s32.totalorder %s23, 4
      %s25 = scalar_select %p24, 0, %s23
      %s26 = sadd.s32 1, %s17
      %s27 = scalar_select %p24, %s26, %s17
      %p28 = scmp.ge.s32.totalorder %s27, 1
      %s29 = scalar_select %p28, 0, %s27
      %s30 = ssub.s32 %s17, %s29
      %p31 = scmp.eq.s32.totalorder %s30, 0
      %s33 = sadd.s32 %s32, 1
      %s34 = scalar_select %p31, %s32, %s33
      %p37 = pneg %p31
      %p38 = scmp.eq.s32.totalorder %s10, 3
      %p39 = por %p37, %p38
      %p40 = scmp.ne.s32.totalorder %s32, %s35
      %p41 = scmp.eq.s32.totalorder %s10, 0
      %p42 = por %p40, %p41
      %p43 = scmp.ne.s32.totalorder %s32, %s35
      %p44 = scmp.eq.s32.totalorder %s15, 3
      %p45 = por %p43, %p44
      %p46 = scmp.ne.s32.totalorder %s35, %s36
      %p47 = scmp.eq.s32.totalorder %s15, 0
      %p48 = por %p46, %p47
      %p49 = scmp.ne.s32.totalorder %s35, %s36
      %p50 = scmp.eq.s32.totalorder %s16, 3
      %p51 = por %p49, %p50
      %p53 = scmp.ne.s32.totalorder %s36, %s52
      %p54 = scmp.eq.s32.totalorder %s16, 0
      %p55 = por %p53, %p54
      %s56 = ssub.s32 %s18, %s25
      %p57 = scmp.eq.s32.totalorder %s56, 0
      %s59 = sadd.s32 %s58, 1
      %s60 = scalar_select %p57, %s58, %s59
      %p63 = pneg %p57
      %p64 = scmp.eq.s32.totalorder %s10, 3
      %p65 = por %p63, %p64
      %p66 = scmp.ne.s32.totalorder %s58, %s61
      %p67 = scmp.eq.s32.totalorder %s10, 0
      %p68 = por %p66, %p67
      %p69 = scmp.ne.s32.totalorder %s58, %s61
      %p70 = scmp.eq.s32.totalorder %s15, 3
      %p71 = por %p69, %p70
      %p72 = scmp.ne.s32.totalorder %s61, %s62
      %p73 = scmp.eq.s32.totalorder %s15, 0
      %p74 = por %p72, %p73
      %p75 = scmp.ne.s32.totalorder %s61, %s62
      %p76 = scmp.eq.s32.totalorder %s16, 3
      %p77 = por %p75, %p76
      %p79 = scmp.ne.s32.totalorder %s62, %s78
      %p80 = scmp.eq.s32.totalorder %s16, 0
      %p81 = por %p79, %p80
      %s82 = ssub.s32 %s17, %s29
      %s83 = ssub.s32 %s18, %s25
      %s84 = sor.u32 %s82, %s83
      %p85 = scmp.eq.s32.totalorder %s84, 0
      %s87 = sadd.s32 %s86, 1
      %s88 = scalar_select %p85, %s86, %s87
      %p91 = pneg %p85
      %p92 = scmp.eq.s32.totalorder %s10, 3
      %p93 = por %p91, %p92
      %p94 = scmp.ne.s32.totalorder %s86, %s89
      %p95 = scmp.eq.s32.totalorder %s10, 0
      %p96 = por %p94, %p95
      %p97 = scmp.ne.s32.totalorder %s86, %s89
      %p98 = scmp.eq.s32.totalorder %s15, 3
      %p99 = por %p97, %p98
      %p100 = scmp.ne.s32.totalorder %s89, %s90
      %p101 = scmp.eq.s32.totalorder %s15, 0
      %p102 = por %p100, %p101
      %p103 = scmp.ne.s32.totalorder %s89, %s90
      %p104 = scmp.eq.s32.totalorder %s16, 3
      %p105 = por %p103, %p104
      %p107 = scmp.ne.s32.totalorder %s90, %s106
      %p108 = scmp.eq.s32.totalorder %s16, 0
      %p109 = por %p107, %p108
      %s110 = ssub.s32 %s17, %s29
      %s111 = ssub.s32 %s18, %s25
      %s112 = sor.u32 %s110, %s111
      %p113 = scmp.eq.s32.totalorder %s112, 0
      %s115 = sadd.s32 %s114, 1
      %s116 = scalar_select %p113, %s114, %s115
      %p119 = pneg %p113
      %p120 = scmp.eq.s32.totalorder %s10, 3
      %p121 = por %p119, %p120
      %p122 = scmp.ne.s32.totalorder %s114, %s117
      %p123 = scmp.eq.s32.totalorder %s10, 0
      %p124 = por %p122, %p123
      %p125 = scmp.ne.s32.totalorder %s114, %s117
      %p126 = scmp.eq.s32.totalorder %s15, 3
      %p127 = por %p125, %p126
      %p128 = scmp.ne.s32.totalorder %s117, %s118
      %p129 = scmp.eq.s32.totalorder %s15, 0
      %p130 = por %p128, %p129
      %p131 = scmp.ne.s32.totalorder %s117, %s118
      %p132 = scmp.eq.s32.totalorder %s16, 3
      %p133 = por %p131, %p132
      %p135 = scmp.ne.s32.totalorder %s118, %s134
      %p136 = scmp.eq.s32.totalorder %s16, 0
      %p137 = por %p135, %p136
      %p138 = scmp.le.s32.totalorder 1, %s10
      %p139 = scmp.lt.s32.totalorder %s10, 5
      %p140 = pnand %p138, %p139
      %p141 = pneg %p140
      // Predicated region
      $region9: #{generator_forward.30} parent=5 // pred_check
        _
      $region10: #{generator_forward.30} parent=5 // pred_check_branch
        %143 = sbr.rel (%p140) target = $region12
      $region11: #{generator_forward.30} parent=5 // pred_region
        %s144 = ssub.s32 %s10, 1
        // Predicated region
        $region13: #{generator_forward.30} parent=11 // pred_check
          %p145 = pneg %p48
        $region14: #{generator_forward.30} parent=11 // pred_check_branch
          %147 = sbr.rel (%p145) target = $region16
        $region15: #{generator_forward.30} parent=11 // pred_region
          %p148 = scmp.lt.s32.totalorder %s19, 0
          %s149 = scalar_select %p148, %s19, 0
          %s150 = scalar_lea.vmem %s0, %s149
        $region16: #{generator_forward.30} parent=11 // pred_fallthru
          _
      $region12: #{generator_forward.30} parent=5 // pred_fallthru
        _
      %p151 = scmp.lt.s32.totalorder %s10, 4
      // Predicated region
      $region17: #{generator_forward.30} parent=5 // pred_check
        %p152 = pneg %p151
      $region18: #{generator_forward.30} parent=5 // pred_check_branch
        %154 = sbr.rel (%p152) target = $region20
      $region19: #{generator_forward.30} parent=5 // pred_region
        // Predicated region
        $region21: #{generator_forward.30} parent=19 // pred_check
          %p155 = pneg %p68
        $region22: #{generator_forward.30} parent=19 // pred_check_branch
          %157 = sbr.rel (%p155) target = $region24
        $region23: #{generator_forward.30} parent=19 // pred_region
          %s158 = sand.u32 %s58, 1
          %s159 = sand.u32 %s58, 1
          %s160 = smul.addr %s159, 16
          %s161 = scalar_lea.vmem [#allocation2], %s160
          %s162 = smul.u32 2, %s18
          %s163 = smul.addr %s162, 4
          %s164 = scalar_lea.vmem %s1, %s163
          // Predicated region
          $region25: #{generator_forward.30} parent=23 // pred_check
            _
          $region26: #{generator_forward.30} parent=23 // pred_check_branch
            %166 = sbr.rel (0) target = $region28
          $region27: #{generator_forward.30} parent=23 // pred_region
            // Predicated region
            $region29: #{generator_forward.30} parent=27 // pred_check
              _
            $region30: #{generator_forward.30} parent=27 // pred_check_branch
              %168 = sbr.rel (0) target = $region32
            $region31: #{generator_forward.30} parent=27 // pred_region
              // Predicated region
              $region44: #{generator_forward.30} parent=31 // pred_check
                _
              $region45: #{generator_forward.30} parent=31 // pred_check_branch
                %185 = sbr.rel (0) target = $region47
              $region46: #{generator_forward.30} parent=31 // pred_region
                loop: start=0, step=1, limit=1
                $region48: #{generator_forward.30} parent=46 // loop_pre_header
                  _
                $region49: #{generator_forward.30} parent=46 // loop_header
                  %s187 = sphi 0, %s191
                  %p188 = scmp.ge.s32.totalorder %s187, 1
                  %s192 = sphi %s164, %s164
                  %s193 = sphi %s161, %s161
                $region50: #{generator_forward.30} parent=46 // loop_header_branch
                  %190 = sbr.rel (%p188) target = $region54
                $region51: #{generator_forward.30} parent=46 // loop_body
                  %v194 = vld [vmem:[%s192] sm:$0xff]
                  %195 = vst [vmem:[%s193] sm:$0xff] %v194
                  %v196 = vld [vmem:[%s192 + $0x20] sm:$0xff]
                  %197 = vst [vmem:[%s193 + $0x8] sm:$0xff] %v196
                $region52: #{generator_forward.30} parent=46 // loop_footer
                  %s191 = sadd.s32 1, %s187
                $region53: #{generator_forward.30} parent=46 // loop_footer_branch
                  %186 = sbr.rel target = $region49
                $region54: #{generator_forward.30} parent=46 // loop_exit
                  _
              $region47: #{generator_forward.30} parent=31 // pred_fallthru
                _
              // Predicated region
              $region55: #{generator_forward.30} parent=31 // pred_check
                _
              $region56: #{generator_forward.30} parent=31 // pred_check_branch
                %199 = sbr.rel target = $region58
              $region57: #{generator_forward.30} parent=31 // pred_region
                _
              $region58: #{generator_forward.30} parent=31 // pred_fallthru
                _
            $region32: #{generator_forward.30} parent=27 // pred_fallthru
              _
            // Predicated region
            $region33: #{generator_forward.30} parent=27 // pred_check
              _
            $region34: #{generator_forward.30} parent=27 // pred_check_branch
              %170 = sbr.rel target = $region36
            $region35: #{generator_forward.30} parent=27 // pred_region
              loop: start=0, step=1, limit=1
              $region37: #{generator_forward.30} parent=35 // loop_pre_header
                _
              $region38: #{generator_forward.30} parent=35 // loop_header
                %s173 = sphi 0, %s177
                %p174 = scmp.ge.s32.totalorder %s173, 1
                %s178 = sphi %s164, %s164
                %s179 = sphi %s161, %s161
              $region39: #{generator_forward.30} parent=35 // loop_header_branch
                %176 = sbr.rel (%p174) target = $region43
              $region40: #{generator_forward.30} parent=35 // loop_body
                %v180 = vld [vmem:[%s178] sm:$0xff]
                %181 = vst [vmem:[%s179] sm:$0xff] %v180
                %v182 = vld [vmem:[%s178 + $0x20] sm:$0xff]
                %183 = vst [vmem:[%s179 + $0x8] sm:$0xff] %v182
              $region41: #{generator_forward.30} parent=35 // loop_footer
                %s177 = sadd.s32 1, %s173
              $region42: #{generator_forward.30} parent=35 // loop_footer_branch
                %172 = sbr.rel target = $region38
              $region43: #{generator_forward.30} parent=35 // loop_exit
                _
            $region36: #{generator_forward.30} parent=27 // pred_fallthru
              _
          $region28: #{generator_forward.30} parent=23 // pred_fallthru
            _
          %200 = vnop
        $region24: #{generator_forward.30} parent=19 // pred_fallthru
          _
      $region20: #{generator_forward.30} parent=5 // pred_fallthru
        _
      %p201 = scmp.le.s32.totalorder 1, %s10
      %p202 = scmp.lt.s32.totalorder %s10, 5
      %p203 = pnand %p201, %p202
      %p204 = pneg %p203
      // Predicated region
      $region59: #{generator_forward.30} parent=5 // pred_check
        _
      $region60: #{generator_forward.30} parent=5 // pred_check_branch
        %206 = sbr.rel (%p203) target = $region62
      $region61: #{generator_forward.30} parent=5 // pred_region
        %s207 = ssub.s32 %s10, 1
        %s208 = sand.u32 %s61, 1
        %s209 = sand.u32 %s61, 1
        %s210 = smul.addr %s209, 16
        %s211 = scalar_lea.vmem [#allocation2], %s210
        // Predicated region
        $region63: #{generator_forward.30} parent=61 // pred_check
          %p212 = pneg %p74
        $region64: #{generator_forward.30} parent=61 // pred_check_branch
          %214 = sbr.rel (%p212) target = $region66
        $region65: #{generator_forward.30} parent=61 // pred_region
          _
        $region66: #{generator_forward.30} parent=61 // pred_fallthru
          _
        %p215 = scmp.lt.s32.totalorder %s19, 0
        %s216 = scalar_select %p215, %s19, 0
        %s217 = scalar_lea.vmem %s0, %s216
        %p218 = pneg %p48
        %p219 = pneg %p45
        %s220 = sand.u32 %s61, 1
        %s221 = sand.u32 %s61, 1
        %s222 = smul.addr %s221, 16
        %s223 = scalar_lea.vmem [#allocation2], %s222
        %p224 = pneg %p74
        %p225 = pneg %p71
        %p226 = pneg %p102
        %p227 = pneg %p99
        %s228 = smul.u32 2, %s20
        %p229 = scmp.lt.s32.totalorder %s19, 0
        %s230 = scalar_select %p229, %s19, 0
        %p231 = scmp.lt.s32.totalorder %s228, 7
        %s232 = scalar_select %p231, %s228, 7
        %s233 = smul.addr %s230, 8
        %s234 = sadd.s32 %s232, %s233
        %s235 = scalar_lea.vmem %s2, %s234
        %p236 = pneg %p130
        %p237 = pneg %p127
        %s238 = smul.u32 2, %s20
        %p239 = scmp.lt.s32.totalorder %s19, 0
        %s240 = scalar_select %p239, %s19, 0
        %p241 = scmp.lt.s32.totalorder %s238, 7
        %s242 = scalar_select %p241, %s238, 7
        %s243 = smul.addr %s240, 8
        %s244 = sadd.s32 %s242, %s243
        %s245 = smul.addr %s244, 8
        %s246 = scalar_lea.vmem %s3, %s245
        %p247 = scmp.lt.s32.totalorder %s19, 0
        %s248 = scalar_select %p247, %s19, 0
        %s249 = scalar_lea.vmem %s0, %s248
        %s250 = smul.u32 2, %s20
        %s251 = smul.u32 2, %s20
        %p252 = scmp.lt.s32.totalorder %s19, 0
        %s253 = scalar_select %p252, %s19, 0
        %p254 = scmp.lt.s32.totalorder %s251, 7
        %s255 = scalar_select %p254, %s251, 7
        %s256 = smul.addr %s253, 8
        %s257 = sadd.s32 %s255, %s256
        %s258 = scalar_lea.vmem %s2, %s257
        %s259 = smul.u32 2, %s20
        %s260 = smul.u32 2, %s20
        %p261 = scmp.lt.s32.totalorder %s19, 0
        %s262 = scalar_select %p261, %s19, 0
        %p263 = scmp.lt.s32.totalorder %s260, 7
        %s264 = scalar_select %p263, %s260, 7
        %s265 = smul.addr %s262, 8
        %s266 = sadd.s32 %s264, %s265
        %s267 = smul.addr %s266, 8
        %s268 = scalar_lea.vmem %s3, %s267
        %s269 = smul.u32 2, %s20
        %v271 = vld [vmem:[%s249] sm:$0x1]
        %v272 = vld [vmem:[%s211] sm:$0xff]
        %v273 = vld [vmem:[%s211 + $0x8] sm:$0xff]
        %v276 = vunpack.c.l.b16 %v272
        %v277 = vunpack.c.h.b16 %v272
        %v278 = vunpack.c.l.b16 %v273
        %v279 = vunpack.c.h.b16 %v273
        %v280 = vpack.c.b16 %v278, %v276
        %v281 = vpack.c.b16 %v279, %v277
        %vm284 = vcmask 130048
        %v286 = vsel %vm284, %v271, 0
        %288 = vmatprep.subr.bf16.mxu0 %v281
        %289 = vmatpush1.bf16.msra.mxu0 %v280
        %290 = vmatprep.subr.bf16.mxu0 0
        %291 = vmatpush1.bf16.msra.mxu0 0
        %292 = vmatprep.subr.bf16.mxu0 0
        %293 = vmatpush1.bf16.msra.mxu0 0
        %294 = vmatprep.subr.bf16.mxu0 0
        %295 = vmatpush1.bf16.msra.mxu0 0
        %296 = vmatprep.subr.bf16.mxu0 0
        %297 = vmatpush1.bf16.msra.mxu0 0
        %298 = vmatprep.subr.bf16.mxu0 0
        %299 = vmatpush1.bf16.msra.mxu0 0
        %300 = vmatprep.subr.bf16.mxu0 0
        %301 = vmatpush1.bf16.msra.mxu0 0
        %302 = vmatprep.subr.bf16.mxu0 0
        %303 = vmatpush1.bf16.msra.mxu0 0
        %304 = vmatprep.subr.bf16.mxu0 0
        %305 = vmatpush1.bf16.msra.mxu0 0
        %306 = vmatprep.subr.bf16.mxu0 0
        %307 = vmatpush1.bf16.msra.mxu0 0
        %308 = vmatprep.subr.bf16.mxu0 0
        %309 = vmatpush1.bf16.msra.mxu0 0
        %310 = vmatprep.subr.bf16.mxu0 0
        %311 = vmatpush1.bf16.msra.mxu0 0
        %312 = vmatprep.subr.bf16.mxu0 0
        %313 = vmatpush1.bf16.msra.mxu0 0
        %314 = vmatprep.subr.bf16.mxu0 0
        %315 = vmatpush1.bf16.msra.mxu0 0
        %316 = vmatprep.subr.bf16.mxu0 0
        %317 = vmatpush1.bf16.msra.mxu0 0
        %318 = vmatprep.subr.bf16.mxu0 0
        %319 = vmatpush1.bf16.msra.mxu0 0
        %320 = vmatprep.mubr.bf16.mxu0 0
        %321 = vmatmul.mubr.bf16.gmra.mrb[0].mxu0 %v286
        %v322 = vpop.f32.mrb[0].mxu0
        %v323 = vadd.f32 0.0, %v322
        %v324 = vpop.f32.mrb[0].mxu0
        %v325 = vadd.f32 0.0, %v324
        %v326 = vpop.f32.mrb[0].mxu0
        %v327 = vpop.f32.mrb[0].mxu0
        %328 = vdwg.mxu0
        %v329 = vpack.c.bf16 %v323, %v323
        %v330 = vpack.c.bf16 %v325, %v325
        %v333 = vcombine.low %v329, %v330
        %v335 = vunpack.c.l.s4 1966171168
        %v336 = vunpack.c.0.s8 %v335
        %v337 = vlaneseq
        %v338 = vshrl.u32 %v337, 7
        %v339 = vsub.s32 %v336, %v338
        %v340 = vrot.slane %v333, %v339
        %v342 = vunpack.c.l.s4 1966171168
        %v343 = vunpack.c.0.s8 %v342
        %v344 = vlaneseq
        %v345 = vshrl.u32 %v344, 7
        %v346 = vsub.s32 %v343, %v345
        %v347 = vrot.slane %v340, %v346
        %349 = vst [vmem:[%s258] sm:$0x3] %v347
        %vm350 = vcmask 1041408
        %v351 = vsel %vm350, %v323, 0.0
        %v352 = vrot.slane %v351, 4
        %v353 = vadd.f32 %v351, %v352
        %v354 = vrot.slane %v353, 2
        %v355 = vadd.f32 %v353, %v354
        %v356 = vrot.slane %v355, 1
        %v357 = vadd.f32 %v355, %v356
        %v358 = vsel %vm350, %v325, 0.0
        %v359 = vrot.slane %v358, 4
        %v360 = vadd.f32 %v358, %v359
        %v361 = vrot.slane %v360, 2
        %v362 = vadd.f32 %v360, %v361
        %v363 = vrot.slane %v362, 1
        %v364 = vadd.f32 %v362, %v363
        %v365 = vmul.f32 %v323, %v323
        %v366 = vmul.f32 %v325, %v325
        %v367 = vsel %vm350, %v365, 0.0
        %v368 = vrot.slane %v367, 4
        %v369 = vadd.f32 %v367, %v368
        %v370 = vrot.slane %v369, 2
        %v371 = vadd.f32 %v369, %v370
        %v372 = vrot.slane %v371, 1
        %v373 = vadd.f32 %v371, %v372
        %v374 = vsel %vm350, %v366, 0.0
        %v375 = vrot.slane %v374, 4
        %v376 = vadd.f32 %v374, %v375
        %v377 = vrot.slane %v376, 2
        %v378 = vadd.f32 %v376, %v377
        %v379 = vrot.slane %v378, 1
        %v380 = vadd.f32 %v378, %v379
        %v381 = vlaneseq
        %v382 = vshrl.u32 %v381, 7
        %vm383 = vcmp.eq.s32.totalorder %v382, 0
        %vm384 = vcmp.eq.s32.totalorder %v382, 1
        %v385 = vsel %vm384, 1, 0
        %vm386 = vcmp.eq.s32.totalorder %v385, 1
        %v387 = vsel %vm386, %v373, 0.0
        %v388 = vsel %vm386, %v380, 0.0
        %v389 = vsel %vm383, 1, 0
        %vm390 = vcmp.eq.s32.totalorder %v389, 1
        %v391 = vsel %vm390, %v357, %v387
        %v392 = vsel %vm390, %v364, %v388
        %393 = vst [vmem:[%s268] sm:$0xff] %v391
        %394 = vst [vmem:[%s268 + $0x8] sm:$0xff] %v392
        %s395 = smul.u32 2, %s20
        %p396 = scmp.lt.s32.totalorder %s19, 0
        %s397 = scalar_select %p396, %s19, 0
        %p398 = scmp.lt.s32.totalorder %s395, 7
        %s399 = scalar_select %p398, %s395, 7
        %s400 = smul.addr %s397, 8
        %s401 = sadd.s32 %s399, %s400
        %s402 = scalar_lea.vmem %s2, %s401
        %s403 = smul.u32 2, %s20
        %p404 = scmp.lt.s32.totalorder %s19, 0
        %s405 = scalar_select %p404, %s19, 0
        %p406 = scmp.lt.s32.totalorder %s403, 7
        %s407 = scalar_select %p406, %s403, 7
        %s408 = smul.addr %s405, 8
        %s409 = sadd.s32 %s407, %s408
        %s410 = smul.addr %s409, 8
        %s411 = scalar_lea.vmem %s3, %s410
        // Predicated region
        $region67: #{generator_forward.30} parent=61 // pred_check
          %p412 = pneg %p99
        $region68: #{generator_forward.30} parent=61 // pred_check_branch
          %414 = sbr.rel (%p412) target = $region70
        $region69: #{generator_forward.30} parent=61 // pred_region
          %s415 = smul.u32 2, %s20
        $region70: #{generator_forward.30} parent=61 // pred_fallthru
          _
        // Predicated region
        $region71: #{generator_forward.30} parent=61 // pred_check
          %p416 = pneg %p127
        $region72: #{generator_forward.30} parent=61 // pred_check_branch
          %418 = sbr.rel (%p416) target = $region74
        $region73: #{generator_forward.30} parent=61 // pred_region
          %s419 = smul.u32 2, %s20
        $region74: #{generator_forward.30} parent=61 // pred_fallthru
          _
      $region62: #{generator_forward.30} parent=5 // pred_fallthru
        _
      %p420 = scmp.le.s32.totalorder 2, %s10
      // Predicated region
      $region75: #{generator_forward.30} parent=5 // pred_check
        %p421 = pneg %p420
      $region76: #{generator_forward.30} parent=5 // pred_check_branch
        %423 = sbr.rel (%p421) target = $region78
      $region77: #{generator_forward.30} parent=5 // pred_region
        %s424 = ssub.s32 %s10, 2
        // Predicated region
        $region79: #{generator_forward.30} parent=77 // pred_check
          %p425 = pneg %p105
        $region80: #{generator_forward.30} parent=77 // pred_check_branch
          %427 = sbr.rel (%p425) target = $region82
        $region81: #{generator_forward.30} parent=77 // pred_region
          %s428 = smul.u32 2, %s22
          %p429 = scmp.lt.s32.totalorder %s21, 0
          %s430 = scalar_select %p429, %s21, 0
          %p431 = scmp.lt.s32.totalorder %s428, 7
          %s432 = scalar_select %p431, %s428, 7
          %s433 = smul.addr %s430, 8
          %s434 = sadd.s32 %s432, %s433
          %s435 = scalar_lea.vmem %s2, %s434
        $region82: #{generator_forward.30} parent=77 // pred_fallthru
          _
        // Predicated region
        $region83: #{generator_forward.30} parent=77 // pred_check
          %p436 = pneg %p133
        $region84: #{generator_forward.30} parent=77 // pred_check_branch
          %438 = sbr.rel (%p436) target = $region86
        $region85: #{generator_forward.30} parent=77 // pred_region
          %s439 = smul.u32 2, %s22
          %p440 = scmp.lt.s32.totalorder %s21, 0
          %s441 = scalar_select %p440, %s21, 0
          %p442 = scmp.lt.s32.totalorder %s439, 7
          %s443 = scalar_select %p442, %s439, 7
          %s444 = smul.addr %s441, 8
          %s445 = sadd.s32 %s443, %s444
          %s446 = smul.addr %s445, 8
          %s447 = scalar_lea.vmem %s3, %s446
        $region86: #{generator_forward.30} parent=77 // pred_fallthru
          _
      $region78: #{generator_forward.30} parent=5 // pred_fallthru
        _
    $region6: #{generator_forward.30} parent=1 // loop_footer
      %s14 = sadd.s32 1, %s10
    $region7: #{generator_forward.30} parent=1 // loop_footer_branch
      %9 = sbr.rel target = $region3
    $region8: #{generator_forward.30} parent=1 // loop_exit
      _

// kernel: generator_forward.32
$region0: #{generator_forward.32}
  #allocation0 [shape = 'u32[]', space=smem, size = 0x4, offset = 0x4, fixed_abs, tag = 'smem constant byte address 0x4 - core index']
  #allocation1 [shape = 'u32[144,128]{1,0:T(1,128)}', space=vmem, size = 0x12000, scoped, tag = 'internal scratch']
  %s0 = inlined_call_operand.vmem [shape: bf16[32,256], index: 0, kind: input, shape index: {}]
  %s1 = inlined_call_operand.vmem [shape: bf16[256,32], index: 1, kind: input, shape index: {}]
  %s2 = inlined_call_operand.vmem [shape: bf16[32,32], index: 2, kind: output, shape index: {0}]
  %s3 = inlined_call_operand.vmem [shape: f32[8,32], index: 3, kind: output, shape index: {1}]
  %4 = xla_tuple %s2, %s3
  %s5 = sld [smem:[#allocation0]]
  $region26: #{generator_forward.32} parent=0
    _
  %s7 = ssub.s32 1, %s5
  %s8 = scalar_select 0, %s7, %s5
  // Predicated region
  $region2: #{generator_forward.32} parent=0 // pred_check
    _
  $region3: #{generator_forward.32} parent=0 // pred_check_branch
    %10 = sbr.rel (0) target = $region5
  $region4: #{generator_forward.32} parent=0 // pred_region
    _
  $region5: #{generator_forward.32} parent=0 // pred_fallthru
    _
  // Predicated region
  $region6: #{generator_forward.32} parent=0 // pred_check
    _
  $region7: #{generator_forward.32} parent=0 // pred_check_branch
    %12 = sbr.rel (0) target = $region9
  $region8: #{generator_forward.32} parent=0 // pred_region
    _
  $region9: #{generator_forward.32} parent=0 // pred_fallthru
    _
  %v14 = vld [vmem:[%s0] sm:$0xff]
  %v15 = vld [vmem:[%s0 + $0x8] sm:$0xff]
  %v16 = vld [vmem:[%s0 + $0x10] sm:$0xff]
  %v17 = vld [vmem:[%s0 + $0x18] sm:$0xff]
  %v18 = vld [vmem:[%s1] sm:$0xf]
  %v19 = vld [vmem:[%s1 + $0x4] sm:$0xf]
  %v20 = vld [vmem:[%s1 + $0x8] sm:$0xf]
  %v21 = vld [vmem:[%s1 + $0xc] sm:$0xf]
  %v22 = vld [vmem:[%s1 + $0x10] sm:$0xf]
  %v23 = vld [vmem:[%s1 + $0x14] sm:$0xf]
  %v24 = vld [vmem:[%s1 + $0x18] sm:$0xf]
  %v25 = vld [vmem:[%s1 + $0x1c] sm:$0xf]
  %v26 = vld [vmem:[%s1 + $0x20] sm:$0xf]
  %v27 = vld [vmem:[%s1 + $0x24] sm:$0xf]
  %v28 = vld [vmem:[%s1 + $0x28] sm:$0xf]
  %v29 = vld [vmem:[%s1 + $0x2c] sm:$0xf]
  %v30 = vld [vmem:[%s1 + $0x30] sm:$0xf]
  %v31 = vld [vmem:[%s1 + $0x34] sm:$0xf]
  %v32 = vld [vmem:[%s1 + $0x38] sm:$0xf]
  %v33 = vld [vmem:[%s1 + $0x3c] sm:$0xf]
  %v34 = vld [vmem:[%s1 + $0x40] sm:$0xf]
  %v35 = vld [vmem:[%s1 + $0x44] sm:$0xf]
  %v36 = vld [vmem:[%s1 + $0x48] sm:$0xf]
  %v37 = vld [vmem:[%s1 + $0x4c] sm:$0xf]
  %v38 = vld [vmem:[%s1 + $0x50] sm:$0xf]
  %v39 = vld [vmem:[%s1 + $0x54] sm:$0xf]
  %v40 = vld [vmem:[%s1 + $0x58] sm:$0xf]
  %v41 = vld [vmem:[%s1 + $0x5c] sm:$0xf]
  %v42 = vld [vmem:[%s1 + $0x60] sm:$0xf]
  %v43 = vld [vmem:[%s1 + $0x64] sm:$0xf]
  %v44 = vld [vmem:[%s1 + $0x68] sm:$0xf]
  %v45 = vld [vmem:[%s1 + $0x6c] sm:$0xf]
  %v46 = vld [vmem:[%s1 + $0x70] sm:$0xf]
  %v47 = vld [vmem:[%s1 + $0x74] sm:$0xf]
  %v48 = vld [vmem:[%s1 + $0x78] sm:$0xf]
  %v49 = vld [vmem:[%s1 + $0x7c] sm:$0xf]
  %v54 = vunpack.c.l.b16 %v14
  %v55 = vunpack.c.h.b16 %v14
  %v56 = vunpack.c.l.b16 %v15
  %v57 = vunpack.c.h.b16 %v15
  %v58 = vunpack.c.l.b16 %v16
  %v59 = vunpack.c.h.b16 %v16
  %v60 = vunpack.c.l.b16 %v17
  %v61 = vunpack.c.h.b16 %v17
  %v62 = vpack.c.b16 %v56, %v54
  %v63 = vpack.c.b16 %v57, %v55
  %v64 = vpack.c.b16 %v60, %v58
  %v65 = vpack.c.b16 %v61, %v59
  %v102 = vunpack.c.l.b16 %v18
  %v103 = vunpack.c.l.b16 %v19
  %v104 = vunpack.c.l.b16 %v20
  %v105 = vunpack.c.l.b16 %v21
  %v106 = vunpack.c.l.b16 %v22
  %v107 = vunpack.c.l.b16 %v23
  %v108 = vunpack.c.l.b16 %v24
  %v109 = vunpack.c.l.b16 %v25
  %v110 = vunpack.c.l.b16 %v26
  %v111 = vunpack.c.l.b16 %v27
  %v112 = vunpack.c.l.b16 %v28
  %v113 = vunpack.c.l.b16 %v29
  %v114 = vunpack.c.l.b16 %v30
  %v115 = vunpack.c.l.b16 %v31
  %v116 = vunpack.c.l.b16 %v32
  %v117 = vunpack.c.l.b16 %v33
  %v118 = vunpack.c.l.b16 %v34
  %v119 = vunpack.c.l.b16 %v35
  %v120 = vunpack.c.l.b16 %v36
  %v121 = vunpack.c.l.b16 %v37
  %v122 = vunpack.c.l.b16 %v38
  %v123 = vunpack.c.l.b16 %v39
  %v124 = vunpack.c.l.b16 %v40
  %v125 = vunpack.c.l.b16 %v41
  %v126 = vunpack.c.l.b16 %v42
  %v127 = vunpack.c.l.b16 %v43
  %v128 = vunpack.c.l.b16 %v44
  %v129 = vunpack.c.l.b16 %v45
  %v130 = vunpack.c.l.b16 %v46
  %v131 = vunpack.c.l.b16 %v47
  %v132 = vunpack.c.l.b16 %v48
  %v133 = vunpack.c.l.b16 %v49
  %v134 = vpack.c.b16 %v103, %v102
  %v135 = vpack.c.b16 %v105, %v104
  %v136 = vpack.c.b16 %v107, %v106
  %v137 = vpack.c.b16 %v109, %v108
  %v138 = vpack.c.b16 %v111, %v110
  %v139 = vpack.c.b16 %v113, %v112
  %v140 = vpack.c.b16 %v115, %v114
  %v141 = vpack.c.b16 %v117, %v116
  %v142 = vpack.c.b16 %v119, %v118
  %v143 = vpack.c.b16 %v121, %v120
  %v144 = vpack.c.b16 %v123, %v122
  %v145 = vpack.c.b16 %v125, %v124
  %v146 = vpack.c.b16 %v127, %v126
  %v147 = vpack.c.b16 %v129, %v128
  %v148 = vpack.c.b16 %v131, %v130
  %v149 = vpack.c.b16 %v133, %v132
  %166 = vmatprep.subr.bf16.mxu0 0
  %167 = vmatpush1.bf16.msra.mxu0 %v134
  %168 = vmatprep.subr.bf16.mxu0 0
  %169 = vmatpush1.bf16.msra.mxu0 %v135
  %170 = vmatprep.subr.bf16.mxu0 0
  %171 = vmatpush1.bf16.msra.mxu0 %v136
  %172 = vmatprep.subr.bf16.mxu0 0
  %173 = vmatpush1.bf16.msra.mxu0 %v137
  %174 = vmatprep.subr.bf16.mxu0 0
  %175 = vmatpush1.bf16.msra.mxu0 %v138
  %176 = vmatprep.subr.bf16.mxu0 0
  %177 = vmatpush1.bf16.msra.mxu0 %v139
  %178 = vmatprep.subr.bf16.mxu0 0
  %179 = vmatpush1.bf16.msra.mxu0 %v140
  %180 = vmatprep.subr.bf16.mxu0 0
  %181 = vmatpush1.bf16.msra.mxu0 %v141
  %182 = vmatprep.subr.bf16.mxu0 0
  %183 = vmatpush1.bf16.msra.mxu0 %v142
  %184 = vmatprep.subr.bf16.mxu0 0
  %185 = vmatpush1.bf16.msra.mxu0 %v143
  %186 = vmatprep.subr.bf16.mxu0 0
  %187 = vmatpush1.bf16.msra.mxu0 %v144
  %188 = vmatprep.subr.bf16.mxu0 0
  %189 = vmatpush1.bf16.msra.mxu0 %v145
  %190 = vmatprep.subr.bf16.mxu0 0
  %191 = vmatpush1.bf16.msra.mxu0 %v146
  %192 = vmatprep.subr.bf16.mxu0 0
  %193 = vmatpush1.bf16.msra.mxu0 %v147
  %194 = vmatprep.subr.bf16.mxu0 0
  %195 = vmatpush1.bf16.msra.mxu0 %v148
  %196 = vmatprep.subr.bf16.mxu0 0
  %197 = vmatpush1.bf16.msra.mxu0 %v149
  %198 = vmatprep.mubr.bf16.mxu0 %v63
  %199 = vmatmul.mubr.bf16.gmra.mrb[0].mxu0 %v62
  %v200 = vpop.f32.mrb[0].mxu0
  %v201 = vadd.f32 0.0, %v200
  %v202 = vpop.f32.mrb[0].mxu0
  %v203 = vpop.f32.mrb[0].mxu0
  %v204 = vadd.f32 0.0, %v203
  %v205 = vpop.f32.mrb[0].mxu0
  %206 = vmatprep.mubr.bf16.mxu0 %v65
  %207 = vmatmul.mubr.bf16.gmra.mrb[0].mxu0 %v64
  %v208 = vpop.f32.mrb[0].mxu0
  %v209 = vadd.f32 0.0, %v208
  %v210 = vpop.f32.mrb[0].mxu0
  %v211 = vpop.f32.mrb[0].mxu0
  %v212 = vadd.f32 0.0, %v211
  %v213 = vpop.f32.mrb[0].mxu0
  %214 = vdwg.mxu0
  %v215 = vpack.c.bf16 %v204, %v201
  %v216 = vpack.c.bf16 %v212, %v209
  %v219 = vunpack.c.l.b16 %v215
  %v220 = vunpack.c.h.b16 %v215
  %v221 = vunpack.c.l.b16 %v216
  %v222 = vunpack.c.h.b16 %v216
  %v223 = vpack.c.b16 %v219, %v219
  %v224 = vpack.c.b16 %v220, %v220
  %v225 = vpack.c.b16 %v221, %v221
  %v226 = vpack.c.b16 %v222, %v222
  %vm231 = vcmask 257024
  %232 = vst.msk [vmem:[%s2] sm:$0xf] %vm231, %v223
  %233 = vst.msk [vmem:[%s2 + $0x4] sm:$0xf] %vm231, %v224
  %234 = vst.msk [vmem:[%s2 + $0x8] sm:$0xf] %vm231, %v225
  %235 = vst.msk [vmem:[%s2 + $0xc] sm:$0xf] %vm231, %v226
  %vm236 = vcmask 261120
  %v237 = vsel %vm236, %v201, 0.0
  %v238 = vsel %vm236, %v204, 0.0
  %v239 = vadd.f32 %v237, %v238
  %v240 = vsel %vm236, %v209, 0.0
  %v241 = vadd.f32 %v239, %v240
  %v242 = vsel %vm236, %v212, 0.0
  %v243 = vadd.f32 %v241, %v242
  %v244 = vrot.slane %v243, 4
  %v245 = vadd.f32 %v243, %v244
  %v246 = vrot.slane %v245, 2
  %v247 = vadd.f32 %v245, %v246
  %v248 = vrot.slane %v247, 1
  %v249 = vadd.f32 %v247, %v248
  %v250 = vmul.f32 %v201, %v201
  %v251 = vmul.f32 %v204, %v204
  %v252 = vmul.f32 %v209, %v209
  %v253 = vmul.f32 %v212, %v212
  %v254 = vsel %vm236, %v250, 0.0
  %v255 = vsel %vm236, %v251, 0.0
  %v256 = vadd.f32 %v254, %v255
  %v257 = vsel %vm236, %v252, 0.0
  %v258 = vadd.f32 %v256, %v257
  %v259 = vsel %vm236, %v253, 0.0
  %v260 = vadd.f32 %v258, %v259
  %v261 = vrot.slane %v260, 4
  %v262 = vadd.f32 %v260, %v261
  %v263 = vrot.slane %v262, 2
  %v264 = vadd.f32 %v262, %v263
  %v265 = vrot.slane %v264, 1
  %v266 = vadd.f32 %v264, %v265
  %v267 = vlaneseq
  %v268 = vshrl.u32 %v267, 7
  %vm269 = vcmp.eq.s32.totalorder %v268, 0
  %vm270 = vcmp.eq.s32.totalorder %v268, 1
  %v271 = vsel %vm270, 1, 0
  %vm272 = vcmp.eq.s32.totalorder %v271, 1
  %v273 = vsel %vm272, %v266, 0.0
  %v274 = vsel %vm269, 1, 0
  %vm275 = vcmp.eq.s32.totalorder %v274, 1
  %v276 = vsel %vm275, %v249, %v273
  %277 = vst.msk [vmem:[%s3] sm:$0xff] %vm236, %v276
  // Predicated region
  $region10: #{generator_forward.32} parent=0 // pred_check
    _
  $region11: #{generator_forward.32} parent=0 // pred_check_branch
    %279 = sbr.rel (0) target = $region13
  $region12: #{generator_forward.32} parent=0 // pred_region
    _
  $region13: #{generator_forward.32} parent=0 // pred_fallthru
    _
  // Predicated region
  $region14: #{generator_forward.32} parent=0 // pred_check
    _
  $region15: #{generator_forward.32} parent=0 // pred_check_branch
    %281 = sbr.rel (0) target = $region17
  $region16: #{generator_forward.32} parent=0 // pred_region
    _
  $region17: #{generator_forward.32} parent=0 // pred_fallthru
    _
  // Predicated region
  $region18: #{generator_forward.32} parent=0 // pred_check
    _
  $region19: #{generator_forward.32} parent=0 // pred_check_branch
    %283 = sbr.rel (0) target = $region21
  $region20: #{generator_forward.32} parent=0 // pred_region
    _
  $region21: #{generator_forward.32} parent=0 // pred_fallthru
    _
  // Predicated region
  $region22: #{generator_forward.32} parent=0 // pred_check
    _
  $region23: #{generator_forward.32} parent=0 // pred_check_branch
    %285 = sbr.rel (0) target = $region25
  $region24: #{generator_forward.32} parent=0 // pred_region
    _
  $region25: #{generator_forward.32} parent=0 // pred_fallthru
    _

// kernel: generator_forward.36
$region0: #{generator_forward.36}
  #allocation0 [shape = 'u32[]', space=smem, size = 0x4, offset = 0x4, fixed_abs, tag = 'smem constant byte address 0x4 - core index']
  #allocation1 [shape = 'u32[144,128]{1,0:T(1,128)}', space=vmem, size = 0x12000, scoped, tag = 'internal scratch']
  %s0 = inlined_call_operand.vmem [shape: bf16[32,32], index: 0, kind: input, shape index: {}]
  %s1 = inlined_call_operand.vmem [shape: f32[1,32], index: 1, kind: input, shape index: {}]
  %s2 = inlined_call_operand.vmem [shape: f32[1,32], index: 2, kind: input, shape index: {}]
  %s3 = inlined_call_operand.vmem [shape: bf16[32,32], index: 3, kind: output, shape index: {}]
  %s4 = sld [smem:[#allocation0]]
  $region22: #{generator_forward.36} parent=0
    _
  %s6 = ssub.s32 1, %s4
  %s7 = scalar_select 0, %s6, %s4
  // Predicated region
  $region2: #{generator_forward.36} parent=0 // pred_check
    _
  $region3: #{generator_forward.36} parent=0 // pred_check_branch
    %9 = sbr.rel (0) target = $region5
  $region4: #{generator_forward.36} parent=0 // pred_region
    _
  $region5: #{generator_forward.36} parent=0 // pred_fallthru
    _
  // Predicated region
  $region6: #{generator_forward.36} parent=0 // pred_check
    _
  $region7: #{generator_forward.36} parent=0 // pred_check_branch
    %11 = sbr.rel (0) target = $region9
  $region8: #{generator_forward.36} parent=0 // pred_region
    _
  $region9: #{generator_forward.36} parent=0 // pred_fallthru
    _
  // Predicated region
  $region10: #{generator_forward.36} parent=0 // pred_check
    _
  $region11: #{generator_forward.36} parent=0 // pred_check_branch
    %13 = sbr.rel (0) target = $region13
  $region12: #{generator_forward.36} parent=0 // pred_region
    _
  $region13: #{generator_forward.36} parent=0 // pred_fallthru
    _
  %v14 = vld [vmem:[%s0] sm:$0xf]
  %v15 = vld [vmem:[%s0 + $0x4] sm:$0xf]
  %v16 = vld [vmem:[%s0 + $0x8] sm:$0xf]
  %v17 = vld [vmem:[%s0 + $0xc] sm:$0xf]
  %v18 = vunpack.c.l.bf16 %v14
  %v19 = vunpack.c.l.bf16 %v15
  %v20 = vunpack.c.l.bf16 %v16
  %v21 = vunpack.c.l.bf16 %v17
  %v22 = vld [vmem:[%s1] sm:$0x1]
  %v24 = vlaneseq
  %v25 = vshrl.u32 %v24, 7
  %v26 = vsub.s32 0, %v25
  %v27 = vrot.slane %v22, %v26
  %v29 = vmul.f32 %v18, %v27
  %v30 = vmul.f32 %v19, %v27
  %v31 = vmul.f32 %v20, %v27
  %v32 = vmul.f32 %v21, %v27
  %v33 = vld [vmem:[%s2] sm:$0x1]
  %v35 = vlaneseq
  %v36 = vshrl.u32 %v35, 7
  %v37 = vsub.s32 0, %v36
  %v38 = vrot.slane %v33, %v37
  %v40 = vadd.f32 %v29, %v38
  %v41 = vadd.f32 %v30, %v38
  %v42 = vadd.f32 %v31, %v38
  %v43 = vadd.f32 %v32, %v38
  %v44 = vmax.f32 %v40, 0.0
  %v45 = vmax.f32 %v41, 0.0
  %v46 = vmax.f32 %v42, 0.0
  %v47 = vmax.f32 %v43, 0.0
  %v48 = vpack.c.bf16 %v45, %v44
  %v49 = vpack.c.bf16 %v47, %v46
  %v52 = vunpack.c.l.b16 %v48
  %v53 = vunpack.c.h.b16 %v48
  %v54 = vunpack.c.l.b16 %v49
  %v55 = vunpack.c.h.b16 %v49
  %v56 = vpack.c.b16 %v52, %v52
  %v57 = vpack.c.b16 %v53, %v53
  %v58 = vpack.c.b16 %v54, %v54
  %v59 = vpack.c.b16 %v55, %v55
  %vm64 = vcmask 257024
  %65 = vst.msk [vmem:[%s3] sm:$0xf] %vm64, %v56
  %66 = vst.msk [vmem:[%s3 + $0x4] sm:$0xf] %vm64, %v57
  %67 = vst.msk [vmem:[%s3 + $0x8] sm:$0xf] %vm64, %v58
  %68 = vst.msk [vmem:[%s3 + $0xc] sm:$0xf] %vm64, %v59
  // Predicated region
  $region14: #{generator_forward.36} parent=0 // pred_check
    _
  $region15: #{generator_forward.36} parent=0 // pred_check_branch
    %70 = sbr.rel (0) target = $region17
  $region16: #{generator_forward.36} parent=0 // pred_region
    _
  $region17: #{generator_forward.36} parent=0 // pred_fallthru
    _
  // Predicated region
  $region18: #{generator_forward.36} parent=0 // pred_check
    _
  $region19: #{generator_forward.36} parent=0 // pred_check_branch
    %72 = sbr.rel (0) target = $region21
  $region20: #{generator_forward.36} parent=0 // pred_region
    _
  $region21: #{generator_forward.36} parent=0 // pred_fallthru
    _

// kernel: generator_forward.44
$region0: #{generator_forward.44}
  #allocation0 [shape = 'u32[]', space=smem, size = 0x4, offset = 0x4, fixed_abs, tag = 'smem constant byte address 0x4 - core index']
  #allocation1 [shape = 'u32[144,128]{1,0:T(1,128)}', space=vmem, size = 0x12000, scoped, tag = 'internal scratch']
  %s0 = inlined_call_operand.vmem [shape: bf16[128,16], index: 0, kind: input, shape index: {}]
  %s1 = inlined_call_operand.vmem [shape: f32[1,16], index: 1, kind: input, shape index: {}]
  %s2 = inlined_call_operand.vmem [shape: f32[1,16], index: 2, kind: input, shape index: {}]
  %s3 = inlined_call_operand.vmem [shape: bf16[128,16], index: 3, kind: output, shape index: {}]
  %s4 = sld [smem:[#allocation0]]
  $region22: #{generator_forward.44} parent=0
    _
  %s6 = ssub.s32 1, %s4
  %s7 = scalar_select 0, %s6, %s4
  // Predicated region
  $region2: #{generator_forward.44} parent=0 // pred_check
    _
  $region3: #{generator_forward.44} parent=0 // pred_check_branch
    %9 = sbr.rel (0) target = $region5
  $region4: #{generator_forward.44} parent=0 // pred_region
    _
  $region5: #{generator_forward.44} parent=0 // pred_fallthru
    _
  // Predicated region
  $region6: #{generator_forward.44} parent=0 // pred_check
    _
  $region7: #{generator_forward.44} parent=0 // pred_check_branch
    %11 = sbr.rel (0) target = $region9
  $region8: #{generator_forward.44} parent=0 // pred_region
    _
  $region9: #{generator_forward.44} parent=0 // pred_fallthru
    _
  // Predicated region
  $region10: #{generator_forward.44} parent=0 // pred_check
    _
  $region11: #{generator_forward.44} parent=0 // pred_check_branch
    %13 = sbr.rel (0) target = $region13
  $region12: #{generator_forward.44} parent=0 // pred_region
    _
  $region13: #{generator_forward.44} parent=0 // pred_fallthru
    _
  %v14 = vld [vmem:[%s0] sm:$0xf]
  %v15 = vld [vmem:[%s0 + $0x4] sm:$0xf]
  %v16 = vld [vmem:[%s0 + $0x8] sm:$0xf]
  %v17 = vld [vmem:[%s0 + $0xc] sm:$0xf]
  %v18 = vld [vmem:[%s0 + $0x10] sm:$0xf]
  %v19 = vld [vmem:[%s0 + $0x14] sm:$0xf]
  %v20 = vld [vmem:[%s0 + $0x18] sm:$0xf]
  %v21 = vld [vmem:[%s0 + $0x1c] sm:$0xf]
  %v22 = vld [vmem:[%s0 + $0x20] sm:$0xf]
  %v23 = vld [vmem:[%s0 + $0x24] sm:$0xf]
  %v24 = vld [vmem:[%s0 + $0x28] sm:$0xf]
  %v25 = vld [vmem:[%s0 + $0x2c] sm:$0xf]
  %v26 = vld [vmem:[%s0 + $0x30] sm:$0xf]
  %v27 = vld [vmem:[%s0 + $0x34] sm:$0xf]
  %v28 = vld [vmem:[%s0 + $0x38] sm:$0xf]
  %v29 = vld [vmem:[%s0 + $0x3c] sm:$0xf]
  %v30 = vunpack.c.l.bf16 %v14
  %v31 = vunpack.c.l.bf16 %v15
  %v32 = vunpack.c.l.bf16 %v16
  %v33 = vunpack.c.l.bf16 %v17
  %v34 = vunpack.c.l.bf16 %v18
  %v35 = vunpack.c.l.bf16 %v19
  %v36 = vunpack.c.l.bf16 %v20
  %v37 = vunpack.c.l.bf16 %v21
  %v38 = vunpack.c.l.bf16 %v22
  %v39 = vunpack.c.l.bf16 %v23
  %v40 = vunpack.c.l.bf16 %v24
  %v41 = vunpack.c.l.bf16 %v25
  %v42 = vunpack.c.l.bf16 %v26
  %v43 = vunpack.c.l.bf16 %v27
  %v44 = vunpack.c.l.bf16 %v28
  %v45 = vunpack.c.l.bf16 %v29
  %v46 = vld [vmem:[%s1] sm:$0x1]
  %v48 = vlaneseq
  %v49 = vshrl.u32 %v48, 7
  %v50 = vsub.s32 0, %v49
  %v51 = vrot.slane %v46, %v50
  %v53 = vmul.f32 %v30, %v51
  %v54 = vmul.f32 %v31, %v51
  %v55 = vmul.f32 %v32, %v51
  %v56 = vmul.f32 %v33, %v51
  %v57 = vmul.f32 %v34, %v51
  %v58 = vmul.f32 %v35, %v51
  %v59 = vmul.f32 %v36, %v51
  %v60 = vmul.f32 %v37, %v51
  %v61 = vmul.f32 %v38, %v51
  %v62 = vmul.f32 %v39, %v51
  %v63 = vmul.f32 %v40, %v51
  %v64 = vmul.f32 %v41, %v51
  %v65 = vmul.f32 %v42, %v51
  %v66 = vmul.f32 %v43, %v51
  %v67 = vmul.f32 %v44, %v51
  %v68 = vmul.f32 %v45, %v51
  %v69 = vld [vmem:[%s2] sm:$0x1]
  %v71 = vlaneseq
  %v72 = vshrl.u32 %v71, 7
  %v73 = vsub.s32 0, %v72
  %v74 = vrot.slane %v69, %v73
  %v76 = vadd.f32 %v53, %v74
  %v77 = vadd.f32 %v54, %v74
  %v78 = vadd.f32 %v55, %v74
  %v79 = vadd.f32 %v56, %v74
  %v80 = vadd.f32 %v57, %v74
  %v81 = vadd.f32 %v58, %v74
  %v82 = vadd.f32 %v59, %v74
  %v83 = vadd.f32 %v60, %v74
  %v84 = vadd.f32 %v61, %v74
  %v85 = vadd.f32 %v62, %v74
  %v86 = vadd.f32 %v63, %v74
  %v87 = vadd.f32 %v64, %v74
  %v88 = vadd.f32 %v65, %v74
  %v89 = vadd.f32 %v66, %v74
  %v90 = vadd.f32 %v67, %v74
  %v91 = vadd.f32 %v68, %v74
  %v92 = vmax.f32 %v76, 0.0
  %v93 = vmax.f32 %v77, 0.0
  %v94 = vmax.f32 %v78, 0.0
  %v95 = vmax.f32 %v79, 0.0
  %v96 = vmax.f32 %v80, 0.0
  %v97 = vmax.f32 %v81, 0.0
  %v98 = vmax.f32 %v82, 0.0
  %v99 = vmax.f32 %v83, 0.0
  %v100 = vmax.f32 %v84, 0.0
  %v101 = vmax.f32 %v85, 0.0
  %v102 = vmax.f32 %v86, 0.0
  %v103 = vmax.f32 %v87, 0.0
  %v104 = vmax.f32 %v88, 0.0
  %v105 = vmax.f32 %v89, 0.0
  %v106 = vmax.f32 %v90, 0.0
  %v107 = vmax.f32 %v91, 0.0
  %v108 = vpack.c.bf16 %v93, %v92
  %v109 = vpack.c.bf16 %v95, %v94
  %v110 = vpack.c.bf16 %v97, %v96
  %v111 = vpack.c.bf16 %v99, %v98
  %v112 = vpack.c.bf16 %v101, %v100
  %v113 = vpack.c.bf16 %v103, %v102
  %v114 = vpack.c.bf16 %v105, %v104
  %v115 = vpack.c.bf16 %v107, %v106
  %v124 = vunpack.c.l.b16 %v108
  %v125 = vunpack.c.h.b16 %v108
  %v126 = vunpack.c.l.b16 %v109
  %v127 = vunpack.c.h.b16 %v109
  %v128 = vunpack.c.l.b16 %v110
  %v129 = vunpack.c.h.b16 %v110
  %v130 = vunpack.c.l.b16 %v111
  %v131 = vunpack.c.h.b16 %v111
  %v132 = vunpack.c.l.b16 %v112
  %v133 = vunpack.c.h.b16 %v112
  %v134 = vunpack.c.l.b16 %v113
  %v135 = vunpack.c.h.b16 %v113
  %v136 = vunpack.c.l.b16 %v114
  %v137 = vunpack.c.h.b16 %v114
  %v138 = vunpack.c.l.b16 %v115
  %v139 = vunpack.c.h.b16 %v115
  %v140 = vpack.c.b16 %v124, %v124
  %v141 = vpack.c.b16 %v125, %v125
  %v142 = vpack.c.b16 %v126, %v126
  %v143 = vpack.c.b16 %v127, %v127
  %v144 = vpack.c.b16 %v128, %v128
  %v145 = vpack.c.b16 %v129, %v129
  %v146 = vpack.c.b16 %v130, %v130
  %v147 = vpack.c.b16 %v131, %v131
  %v148 = vpack.c.b16 %v132, %v132
  %v149 = vpack.c.b16 %v133, %v133
  %v150 = vpack.c.b16 %v134, %v134
  %v151 = vpack.c.b16 %v135, %v135
  %v152 = vpack.c.b16 %v136, %v136
  %v153 = vpack.c.b16 %v137, %v137
  %v154 = vpack.c.b16 %v138, %v138
  %v155 = vpack.c.b16 %v139, %v139
  %vm172 = vcmask 125952
  %173 = vst.msk [vmem:[%s3] sm:$0xf] %vm172, %v140
  %174 = vst.msk [vmem:[%s3 + $0x4] sm:$0xf] %vm172, %v141
  %175 = vst.msk [vmem:[%s3 + $0x8] sm:$0xf] %vm172, %v142
  %176 = vst.msk [vmem:[%s3 + $0xc] sm:$0xf] %vm172, %v143
  %177 = vst.msk [vmem:[%s3 + $0x10] sm:$0xf] %vm172, %v144
  %178 = vst.msk [vmem:[%s3 + $0x14] sm:$0xf] %vm172, %v145
  %179 = vst.msk [vmem:[%s3 + $0x18] sm:$0xf] %vm172, %v146
  %180 = vst.msk [vmem:[%s3 + $0x1c] sm:$0xf] %vm172, %v147
  %181 = vst.msk [vmem:[%s3 + $0x20] sm:$0xf] %vm172, %v148
  %182 = vst.msk [vmem:[%s3 + $0x24] sm:$0xf] %vm172, %v149
  %183 = vst.msk [vmem:[%s3 + $0x28] sm:$0xf] %vm172, %v150
  %184 = vst.msk [vmem:[%s3 + $0x2c] sm:$0xf] %vm172, %v151
  %185 = vst.msk [vmem:[%s3 + $0x30] sm:$0xf] %vm172, %v152
  %186 = vst.msk [vmem:[%s3 + $0x34] sm:$0xf] %vm172, %v153
  %187 = vst.msk [vmem:[%s3 + $0x38] sm:$0xf] %vm172, %v154
  %188 = vst.msk [vmem:[%s3 + $0x3c] sm:$0xf] %vm172, %v155
  // Predicated region
  $region14: #{generator_forward.44} parent=0 // pred_check
    _
  $region15: #{generator_forward.44} parent=0 // pred_check_branch
    %190 = sbr.rel (0) target = $region17
  $region16: #{generator_forward.44} parent=0 // pred_region
    _
  $region17: #{generator_forward.44} parent=0 // pred_fallthru
    _
  // Predicated region
  $region18: #{generator_forward.44} parent=0 // pred_check
    _
  $region19: #{generator_forward.44} parent=0 // pred_check_branch
    %192 = sbr.rel (0) target = $region21
  $region20: #{generator_forward.44} parent=0 // pred_region
    _
  $region21: #{generator_forward.44} parent=0 // pred_fallthru
    _

// kernel: generator_forward.40
$region0: #{generator_forward.40}
  #allocation0 [shape = 'u32[]', space=smem, size = 0x4, offset = 0x4, fixed_abs, tag = 'smem constant byte address 0x4 - core index']
  #allocation1 [shape = 'u32[144,128]{1,0:T(1,128)}', space=vmem, size = 0x12000, scoped, tag = 'internal scratch']
  %s0 = inlined_call_operand.vmem [shape: bf16[128,128], index: 0, kind: input, shape index: {}]
  %s1 = inlined_call_operand.vmem [shape: bf16[128,16], index: 1, kind: input, shape index: {}]
  %s2 = inlined_call_operand.vmem [shape: bf16[128,16], index: 2, kind: output, shape index: {0}]
  %s3 = inlined_call_operand.vmem [shape: f32[8,16], index: 3, kind: output, shape index: {1}]
  %4 = xla_tuple %s2, %s3
  %s5 = sld [smem:[#allocation0]]
  $region26: #{generator_forward.40} parent=0
    _
  %s7 = ssub.s32 1, %s5
  %s8 = scalar_select 0, %s7, %s5
  // Predicated region
  $region2: #{generator_forward.40} parent=0 // pred_check
    _
  $region3: #{generator_forward.40} parent=0 // pred_check_branch
    %10 = sbr.rel (0) target = $region5
  $region4: #{generator_forward.40} parent=0 // pred_region
    _
  $region5: #{generator_forward.40} parent=0 // pred_fallthru
    _
  // Predicated region
  $region6: #{generator_forward.40} parent=0 // pred_check
    _
  $region7: #{generator_forward.40} parent=0 // pred_check_branch
    %12 = sbr.rel (0) target = $region9
  $region8: #{generator_forward.40} parent=0 // pred_region
    _
  $region9: #{generator_forward.40} parent=0 // pred_fallthru
    _
  %v14 = vld [vmem:[%s0] sm:$0xf]
  %v15 = vld [vmem:[%s0 + $0x4] sm:$0xf]
  %v16 = vld [vmem:[%s0 + $0x8] sm:$0xf]
  %v17 = vld [vmem:[%s0 + $0xc] sm:$0xf]
  %v18 = vld [vmem:[%s0 + $0x10] sm:$0xf]
  %v19 = vld [vmem:[%s0 + $0x14] sm:$0xf]
  %v20 = vld [vmem:[%s0 + $0x18] sm:$0xf]
  %v21 = vld [vmem:[%s0 + $0x1c] sm:$0xf]
  %v22 = vld [vmem:[%s0 + $0x20] sm:$0xf]
  %v23 = vld [vmem:[%s0 + $0x24] sm:$0xf]
  %v24 = vld [vmem:[%s0 + $0x28] sm:$0xf]
  %v25 = vld [vmem:[%s0 + $0x2c] sm:$0xf]
  %v26 = vld [vmem:[%s0 + $0x30] sm:$0xf]
  %v27 = vld [vmem:[%s0 + $0x34] sm:$0xf]
  %v28 = vld [vmem:[%s0 + $0x38] sm:$0xf]
  %v29 = vld [vmem:[%s0 + $0x3c] sm:$0xf]
  %v30 = vld [vmem:[%s1] sm:$0xf]
  %v31 = vld [vmem:[%s1 + $0x4] sm:$0xf]
  %v32 = vld [vmem:[%s1 + $0x8] sm:$0xf]
  %v33 = vld [vmem:[%s1 + $0xc] sm:$0xf]
  %v34 = vld [vmem:[%s1 + $0x10] sm:$0xf]
  %v35 = vld [vmem:[%s1 + $0x14] sm:$0xf]
  %v36 = vld [vmem:[%s1 + $0x18] sm:$0xf]
  %v37 = vld [vmem:[%s1 + $0x1c] sm:$0xf]
  %v38 = vld [vmem:[%s1 + $0x20] sm:$0xf]
  %v39 = vld [vmem:[%s1 + $0x24] sm:$0xf]
  %v40 = vld [vmem:[%s1 + $0x28] sm:$0xf]
  %v41 = vld [vmem:[%s1 + $0x2c] sm:$0xf]
  %v42 = vld [vmem:[%s1 + $0x30] sm:$0xf]
  %v43 = vld [vmem:[%s1 + $0x34] sm:$0xf]
  %v44 = vld [vmem:[%s1 + $0x38] sm:$0xf]
  %v45 = vld [vmem:[%s1 + $0x3c] sm:$0xf]
  %v62 = vunpack.c.l.b16 %v14
  %v63 = vunpack.c.l.b16 %v15
  %v64 = vunpack.c.l.b16 %v16
  %v65 = vunpack.c.l.b16 %v17
  %v66 = vunpack.c.l.b16 %v18
  %v67 = vunpack.c.l.b16 %v19
  %v68 = vunpack.c.l.b16 %v20
  %v69 = vunpack.c.l.b16 %v21
  %v70 = vunpack.c.l.b16 %v22
  %v71 = vunpack.c.l.b16 %v23
  %v72 = vunpack.c.l.b16 %v24
  %v73 = vunpack.c.l.b16 %v25
  %v74 = vunpack.c.l.b16 %v26
  %v75 = vunpack.c.l.b16 %v27
  %v76 = vunpack.c.l.b16 %v28
  %v77 = vunpack.c.l.b16 %v29
  %v78 = vpack.c.b16 %v63, %v62
  %v79 = vpack.c.b16 %v65, %v64
  %v80 = vpack.c.b16 %v67, %v66
  %v81 = vpack.c.b16 %v69, %v68
  %v82 = vpack.c.b16 %v71, %v70
  %v83 = vpack.c.b16 %v73, %v72
  %v84 = vpack.c.b16 %v75, %v74
  %v85 = vpack.c.b16 %v77, %v76
  %v110 = vunpack.c.l.b16 %v30
  %v111 = vunpack.c.l.b16 %v31
  %v112 = vunpack.c.l.b16 %v32
  %v113 = vunpack.c.l.b16 %v33
  %v114 = vunpack.c.l.b16 %v34
  %v115 = vunpack.c.l.b16 %v35
  %v116 = vunpack.c.l.b16 %v36
  %v117 = vunpack.c.l.b16 %v37
  %v118 = vunpack.c.l.b16 %v38
  %v119 = vunpack.c.l.b16 %v39
  %v120 = vunpack.c.l.b16 %v40
  %v121 = vunpack.c.l.b16 %v41
  %v122 = vunpack.c.l.b16 %v42
  %v123 = vunpack.c.l.b16 %v43
  %v124 = vunpack.c.l.b16 %v44
  %v125 = vunpack.c.l.b16 %v45
  %v126 = vpack.c.b16 %v111, %v110
  %v127 = vpack.c.b16 %v113, %v112
  %v128 = vpack.c.b16 %v115, %v114
  %v129 = vpack.c.b16 %v117, %v116
  %v130 = vpack.c.b16 %v119, %v118
  %v131 = vpack.c.b16 %v121, %v120
  %v132 = vpack.c.b16 %v123, %v122
  %v133 = vpack.c.b16 %v125, %v124
  %142 = vmatprep.subr.bf16.mxu0 0
  %143 = vmatpush1.bf16.msra.mxu0 %v126
  %144 = vmatprep.subr.bf16.mxu0 0
  %145 = vmatpush1.bf16.msra.mxu0 %v127
  %146 = vmatprep.subr.bf16.mxu0 0
  %147 = vmatpush1.bf16.msra.mxu0 %v128
  %148 = vmatprep.subr.bf16.mxu0 0
  %149 = vmatpush1.bf16.msra.mxu0 %v129
  %150 = vmatprep.subr.bf16.mxu0 0
  %151 = vmatpush1.bf16.msra.mxu0 %v130
  %152 = vmatprep.subr.bf16.mxu0 0
  %153 = vmatpush1.bf16.msra.mxu0 %v131
  %154 = vmatprep.subr.bf16.mxu0 0
  %155 = vmatpush1.bf16.msra.mxu0 %v132
  %156 = vmatprep.subr.bf16.mxu0 0
  %157 = vmatpush1.bf16.msra.mxu0 %v133
  %158 = vmatprep.subr.bf16.mxu0 0
  %159 = vmatpush1.bf16.msra.mxu0 0
  %160 = vmatprep.subr.bf16.mxu0 0
  %161 = vmatpush1.bf16.msra.mxu0 0
  %162 = vmatprep.subr.bf16.mxu0 0
  %163 = vmatpush1.bf16.msra.mxu0 0
  %164 = vmatprep.subr.bf16.mxu0 0
  %165 = vmatpush1.bf16.msra.mxu0 0
  %166 = vmatprep.subr.bf16.mxu0 0
  %167 = vmatpush1.bf16.msra.mxu0 0
  %168 = vmatprep.subr.bf16.mxu0 0
  %169 = vmatpush1.bf16.msra.mxu0 0
  %170 = vmatprep.subr.bf16.mxu0 0
  %171 = vmatpush1.bf16.msra.mxu0 0
  %172 = vmatprep.subr.bf16.mxu0 0
  %173 = vmatpush1.bf16.msra.mxu0 0
  %174 = vmatprep.mubr.bf16.mxu0 0
  %175 = vmatmul.mubr.bf16.gmra.mrb[0].mxu0 %v78
  %v176 = vpop.f32.mrb[0].mxu0
  %v177 = vadd.f32 0.0, %v176
  %v178 = vpop.f32.mrb[0].mxu0
  %v179 = vpop.f32.mrb[0].mxu0
  %v180 = vadd.f32 0.0, %v179
  %v181 = vpop.f32.mrb[0].mxu0
  %182 = vmatprep.mubr.bf16.mxu0 0
  %183 = vmatmul.mubr.bf16.gmra.mrb[0].mxu0 %v79
  %v184 = vpop.f32.mrb[0].mxu0
  %v185 = vadd.f32 0.0, %v184
  %v186 = vpop.f32.mrb[0].mxu0
  %v187 = vpop.f32.mrb[0].mxu0
  %v188 = vadd.f32 0.0, %v187
  %v189 = vpop.f32.mrb[0].mxu0
  %190 = vmatprep.mubr.bf16.mxu0 0
  %191 = vmatmul.mubr.bf16.gmra.mrb[0].mxu0 %v80
  %v192 = vpop.f32.mrb[0].mxu0
  %v193 = vadd.f32 0.0, %v192
  %v194 = vpop.f32.mrb[0].mxu0
  %v195 = vpop.f32.mrb[0].mxu0
  %v196 = vadd.f32 0.0, %v195
  %v197 = vpop.f32.mrb[0].mxu0
  %198 = vmatprep.mubr.bf16.mxu0 0
  %199 = vmatmul.mubr.bf16.gmra.mrb[0].mxu0 %v81
  %v200 = vpop.f32.mrb[0].mxu0
  %v201 = vadd.f32 0.0, %v200
  %v202 = vpop.f32.mrb[0].mxu0
  %v203 = vpop.f32.mrb[0].mxu0
  %v204 = vadd.f32 0.0, %v203
  %v205 = vpop.f32.mrb[0].mxu0
  %206 = vmatprep.mubr.bf16.mxu0 0
  %207 = vmatmul.mubr.bf16.gmra.mrb[0].mxu0 %v82
  %v208 = vpop.f32.mrb[0].mxu0
  %v209 = vadd.f32 0.0, %v208
  %v210 = vpop.f32.mrb[0].mxu0
  %v211 = vpop.f32.mrb[0].mxu0
  %v212 = vadd.f32 0.0, %v211
  %v213 = vpop.f32.mrb[0].mxu0
  %214 = vmatprep.mubr.bf16.mxu0 0
  %215 = vmatmul.mubr.bf16.gmra.mrb[0].mxu0 %v83
  %v216 = vpop.f32.mrb[0].mxu0
  %v217 = vadd.f32 0.0, %v216
  %v218 = vpop.f32.mrb[0].mxu0
  %v219 = vpop.f32.mrb[0].mxu0
  %v220 = vadd.f32 0.0, %v219
  %v221 = vpop.f32.mrb[0].mxu0
  %222 = vmatprep.mubr.bf16.mxu0 0
  %223 = vmatmul.mubr.bf16.gmra.mrb[0].mxu0 %v84
  %v224 = vpop.f32.mrb[0].mxu0
  %v225 = vadd.f32 0.0, %v224
  %v226 = vpop.f32.mrb[0].mxu0
  %v227 = vpop.f32.mrb[0].mxu0
  %v228 = vadd.f32 0.0, %v227
  %v229 = vpop.f32.mrb[0].mxu0
  %230 = vmatprep.mubr.bf16.mxu0 0
  %231 = vmatmul.mubr.bf16.gmra.mrb[0].mxu0 %v85
  %v232 = vpop.f32.mrb[0].mxu0
  %v233 = vadd.f32 0.0, %v232
  %v234 = vpop.f32.mrb[0].mxu0
  %v235 = vpop.f32.mrb[0].mxu0
  %v236 = vadd.f32 0.0, %v235
  %v237 = vpop.f32.mrb[0].mxu0
  %238 = vdwg.mxu0
  %v239 = vpack.c.bf16 %v180, %v177
  %v240 = vpack.c.bf16 %v188, %v185
  %v241 = vpack.c.bf16 %v196, %v193
  %v242 = vpack.c.bf16 %v204, %v201
  %v243 = vpack.c.bf16 %v212, %v209
  %v244 = vpack.c.bf16 %v220, %v217
  %v245 = vpack.c.bf16 %v228, %v225
  %v246 = vpack.c.bf16 %v236, %v233
  %v255 = vunpack.c.l.b16 %v239
  %v256 = vunpack.c.h.b16 %v239
  %v257 = vunpack.c.l.b16 %v240
  %v258 = vunpack.c.h.b16 %v240
  %v259 = vunpack.c.l.b16 %v241
  %v260 = vunpack.c.h.b16 %v241
  %v261 = vunpack.c.l.b16 %v242
  %v262 = vunpack.c.h.b16 %v242
  %v263 = vunpack.c.l.b16 %v243
  %v264 = vunpack.c.h.b16 %v243
  %v265 = vunpack.c.l.b16 %v244
  %v266 = vunpack.c.h.b16 %v244
  %v267 = vunpack.c.l.b16 %v245
  %v268 = vunpack.c.h.b16 %v245
  %v269 = vunpack.c.l.b16 %v246
  %v270 = vunpack.c.h.b16 %v246
  %v271 = vpack.c.b16 %v255, %v255
  %v272 = vpack.c.b16 %v256, %v256
  %v273 = vpack.c.b16 %v257, %v257
  %v274 = vpack.c.b16 %v258, %v258
  %v275 = vpack.c.b16 %v259, %v259
  %v276 = vpack.c.b16 %v260, %v260
  %v277 = vpack.c.b16 %v261, %v261
  %v278 = vpack.c.b16 %v262, %v262
  %v279 = vpack.c.b16 %v263, %v263
  %v280 = vpack.c.b16 %v264, %v264
  %v281 = vpack.c.b16 %v265, %v265
  %v282 = vpack.c.b16 %v266, %v266
  %v283 = vpack.c.b16 %v267, %v267
  %v284 = vpack.c.b16 %v268, %v268
  %v285 = vpack.c.b16 %v269, %v269
  %v286 = vpack.c.b16 %v270, %v270
  %vm303 = vcmask 125952
  %304 = vst.msk [vmem:[%s2] sm:$0xf] %vm303, %v271
  %305 = vst.msk [vmem:[%s2 + $0x4] sm:$0xf] %vm303, %v272
  %306 = vst.msk [vmem:[%s2 + $0x8] sm:$0xf] %vm303, %v273
  %307 = vst.msk [vmem:[%s2 + $0xc] sm:$0xf] %vm303, %v274
  %308 = vst.msk [vmem:[%s2 + $0x10] sm:$0xf] %vm303, %v275
  %309 = vst.msk [vmem:[%s2 + $0x14] sm:$0xf] %vm303, %v276
  %310 = vst.msk [vmem:[%s2 + $0x18] sm:$0xf] %vm303, %v277
  %311 = vst.msk [vmem:[%s2 + $0x1c] sm:$0xf] %vm303, %v278
  %312 = vst.msk [vmem:[%s2 + $0x20] sm:$0xf] %vm303, %v279
  %313 = vst.msk [vmem:[%s2 + $0x24] sm:$0xf] %vm303, %v280
  %314 = vst.msk [vmem:[%s2 + $0x28] sm:$0xf] %vm303, %v281
  %315 = vst.msk [vmem:[%s2 + $0x2c] sm:$0xf] %vm303, %v282
  %316 = vst.msk [vmem:[%s2 + $0x30] sm:$0xf] %vm303, %v283
  %317 = vst.msk [vmem:[%s2 + $0x34] sm:$0xf] %vm303, %v284
  %318 = vst.msk [vmem:[%s2 + $0x38] sm:$0xf] %vm303, %v285
  %319 = vst.msk [vmem:[%s2 + $0x3c] sm:$0xf] %vm303, %v286
  %vm320 = vcmask 130048
  %v321 = vsel %vm320, %v177, 0.0
  %v322 = vsel %vm320, %v180, 0.0
  %v323 = vadd.f32 %v321, %v322
  %v324 = vsel %vm320, %v185, 0.0
  %v325 = vadd.f32 %v323, %v324
  %v326 = vsel %vm320, %v188, 0.0
  %v327 = vadd.f32 %v325, %v326
  %v328 = vsel %vm320, %v193, 0.0
  %v329 = vadd.f32 %v327, %v328
  %v330 = vsel %vm320, %v196, 0.0
  %v331 = vadd.f32 %v329, %v330
  %v332 = vsel %vm320, %v201, 0.0
  %v333 = vadd.f32 %v331, %v332
  %v334 = vsel %vm320, %v204, 0.0
  %v335 = vadd.f32 %v333, %v334
  %v336 = vsel %vm320, %v209, 0.0
  %v337 = vadd.f32 %v335, %v336
  %v338 = vsel %vm320, %v212, 0.0
  %v339 = vadd.f32 %v337, %v338
  %v340 = vsel %vm320, %v217, 0.0
  %v341 = vadd.f32 %v339, %v340
  %v342 = vsel %vm320, %v220, 0.0
  %v343 = vadd.f32 %v341, %v342
  %v344 = vsel %vm320, %v225, 0.0
  %v345 = vadd.f32 %v343, %v344
  %v346 = vsel %vm320, %v228, 0.0
  %v347 = vadd.f32 %v345, %v346
  %v348 = vsel %vm320, %v233, 0.0
  %v349 = vadd.f32 %v347, %v348
  %v350 = vsel %vm320, %v236, 0.0
  %v351 = vadd.f32 %v349, %v350
  %v352 = vrot.slane %v351, 4
  %v353 = vadd.f32 %v351, %v352
  %v354 = vrot.slane %v353, 2
  %v355 = vadd.f32 %v353, %v354
  %v356 = vrot.slane %v355, 1
  %v357 = vadd.f32 %v355, %v356
  %v358 = vmul.f32 %v177, %v177
  %v359 = vmul.f32 %v180, %v180
  %v360 = vmul.f32 %v185, %v185
  %v361 = vmul.f32 %v188, %v188
  %v362 = vmul.f32 %v193, %v193
  %v363 = vmul.f32 %v196, %v196
  %v364 = vmul.f32 %v201, %v201
  %v365 = vmul.f32 %v204, %v204
  %v366 = vmul.f32 %v209, %v209
  %v367 = vmul.f32 %v212, %v212
  %v368 = vmul.f32 %v217, %v217
  %v369 = vmul.f32 %v220, %v220
  %v370 = vmul.f32 %v225, %v225
  %v371 = vmul.f32 %v228, %v228
  %v372 = vmul.f32 %v233, %v233
  %v373 = vmul.f32 %v236, %v236
  %v374 = vsel %vm320, %v358, 0.0
  %v375 = vsel %vm320, %v359, 0.0
  %v376 = vadd.f32 %v374, %v375
  %v377 = vsel %vm320, %v360, 0.0
  %v378 = vadd.f32 %v376, %v377
  %v379 = vsel %vm320, %v361, 0.0
  %v380 = vadd.f32 %v378, %v379
  %v381 = vsel %vm320, %v362, 0.0
  %v382 = vadd.f32 %v380, %v381
  %v383 = vsel %vm320, %v363, 0.0
  %v384 = vadd.f32 %v382, %v383
  %v385 = vsel %vm320, %v364, 0.0
  %v386 = vadd.f32 %v384, %v385
  %v387 = vsel %vm320, %v365, 0.0
  %v388 = vadd.f32 %v386, %v387
  %v389 = vsel %vm320, %v366, 0.0
  %v390 = vadd.f32 %v388, %v389
  %v391 = vsel %vm320, %v367, 0.0
  %v392 = vadd.f32 %v390, %v391
  %v393 = vsel %vm320, %v368, 0.0
  %v394 = vadd.f32 %v392, %v393
  %v395 = vsel %vm320, %v369, 0.0
  %v396 = vadd.f32 %v394, %v395
  %v397 = vsel %vm320, %v370, 0.0
  %v398 = vadd.f32 %v396, %v397
  %v399 = vsel %vm320, %v371, 0.0
  %v400 = vadd.f32 %v398, %v399
  %v401 = vsel %vm320, %v372, 0.0
  %v402 = vadd.f32 %v400, %v401
  %v403 = vsel %vm320, %v373, 0.0
  %v404 = vadd.f32 %v402, %v403
  %v405 = vrot.slane %v404, 4
  %v406 = vadd.f32 %v404, %v405
  %v407 = vrot.slane %v406, 2
  %v408 = vadd.f32 %v406, %v407
  %v409 = vrot.slane %v408, 1
  %v410 = vadd.f32 %v408, %v409
  %v411 = vlaneseq
  %v412 = vshrl.u32 %v411, 7
  %vm413 = vcmp.eq.s32.totalorder %v412, 0
  %vm414 = vcmp.eq.s32.totalorder %v412, 1
  %v415 = vsel %vm414, 1, 0
  %vm416 = vcmp.eq.s32.totalorder %v415, 1
  %v417 = vsel %vm416, %v410, 0.0
  %v418 = vsel %vm413, 1, 0
  %vm419 = vcmp.eq.s32.totalorder %v418, 1
  %v420 = vsel %vm419, %v357, %v417
  %421 = vst.msk [vmem:[%s3] sm:$0xff] %vm320, %v420
  // Predicated region
  $region10: #{generator_forward.40} parent=0 // pred_check
    _
  $region11: #{generator_forward.40} parent=0 // pred_check_branch
    %423 = sbr.rel (0) target = $region13
  $region12: #{generator_forward.40} parent=0 // pred_region
    _
  $region13: #{generator_forward.40} parent=0 // pred_fallthru
    _
  // Predicated region
  $region14: #{generator_forward.40} parent=0 // pred_check
    _
  $region15: #{generator_forward.40} parent=0 // pred_check_branch
    %425 = sbr.rel (0) target = $region17
  $region16: #{generator_forward.40} parent=0 // pred_region
    _
  $region17: #{generator_forward.40} parent=0 // pred_fallthru
    _
  // Predicated region
  $region18: #{generator_forward.40} parent=0 // pred_check
    _
  $region19: #{generator_forward.40} parent=0 // pred_check_branch
    %427 = sbr.rel (0) target = $region21
  $region20: #{generator_forward.40} parent=0 // pred_region
    _
  $region21: #{generator_forward.40} parent=0 // pred_fallthru
    _
  // Predicated region
  $region22: #{generator_forward.40} parent=0 // pred_check
    _
  $region23: #{generator_forward.40} parent=0 // pred_check_branch
    %429 = sbr.rel (0) target = $region25
  $region24: #{generator_forward.40} parent=0 // pred_region
    _
  $region25: #{generator_forward.40} parent=0 // pred_fallthru
    _

// kernel: generator_forward.48
$region0: #{generator_forward.48}
  #allocation0 [shape = 'u32[]', space=smem, size = 0x4, offset = 0x4, fixed_abs, tag = 'smem constant byte address 0x4 - core index']
  #allocation1 [shape = 'u32[144,128]{1,0:T(1,128)}', space=vmem, size = 0x12000, scoped, tag = 'internal scratch']
  %s0 = inlined_call_operand.vmem [shape: bf16[512,64], index: 0, kind: input, shape index: {}]
  %s1 = inlined_call_operand.vmem [shape: bf16[64,8], index: 1, kind: input, shape index: {}]
  %s2 = inlined_call_operand.vmem [shape: bf16[512,8], index: 2, kind: output, shape index: {0}]
  %s3 = inlined_call_operand.vmem [shape: f32[8,8], index: 3, kind: output, shape index: {1}]
  %4 = xla_tuple %s2, %s3
  %s5 = sld [smem:[#allocation0]]
  $region26: #{generator_forward.48} parent=0
    _
  %s7 = ssub.s32 1, %s5
  %s8 = scalar_select 0, %s7, %s5
  // Predicated region
  $region2: #{generator_forward.48} parent=0 // pred_check
    _
  $region3: #{generator_forward.48} parent=0 // pred_check_branch
    %10 = sbr.rel (0) target = $region5
  $region4: #{generator_forward.48} parent=0 // pred_region
    _
  $region5: #{generator_forward.48} parent=0 // pred_fallthru
    _
  // Predicated region
  $region6: #{generator_forward.48} parent=0 // pred_check
    _
  $region7: #{generator_forward.48} parent=0 // pred_check_branch
    %12 = sbr.rel (0) target = $region9
  $region8: #{generator_forward.48} parent=0 // pred_region
    _
  $region9: #{generator_forward.48} parent=0 // pred_fallthru
    _
  %v14 = vld [vmem:[%s0] sm:$0xf]
  %v15 = vld [vmem:[%s0 + $0x4] sm:$0xf]
  %v16 = vld [vmem:[%s0 + $0x8] sm:$0xf]
  %v17 = vld [vmem:[%s0 + $0xc] sm:$0xf]
  %v18 = vld [vmem:[%s0 + $0x10] sm:$0xf]
  %v19 = vld [vmem:[%s0 + $0x14] sm:$0xf]
  %v20 = vld [vmem:[%s0 + $0x18] sm:$0xf]
  %v21 = vld [vmem:[%s0 + $0x1c] sm:$0xf]
  %v22 = vld [vmem:[%s0 + $0x20] sm:$0xf]
  %v23 = vld [vmem:[%s0 + $0x24] sm:$0xf]
  %v24 = vld [vmem:[%s0 + $0x28] sm:$0xf]
  %v25 = vld [vmem:[%s0 + $0x2c] sm:$0xf]
  %v26 = vld [vmem:[%s0 + $0x30] sm:$0xf]
  %v27 = vld [vmem:[%s0 + $0x34] sm:$0xf]
  %v28 = vld [vmem:[%s0 + $0x38] sm:$0xf]
  %v29 = vld [vmem:[%s0 + $0x3c] sm:$0xf]
  %v30 = vld [vmem:[%s0 + $0x40] sm:$0xf]
  %v31 = vld [vmem:[%s0 + $0x44] sm:$0xf]
  %v32 = vld [vmem:[%s0 + $0x48] sm:$0xf]
  %v33 = vld [vmem:[%s0 + $0x4c] sm:$0xf]
  %v34 = vld [vmem:[%s0 + $0x50] sm:$0xf]
  %v35 = vld [vmem:[%s0 + $0x54] sm:$0xf]
  %v36 = vld [vmem:[%s0 + $0x58] sm:$0xf]
  %v37 = vld [vmem:[%s0 + $0x5c] sm:$0xf]
  %v38 = vld [vmem:[%s0 + $0x60] sm:$0xf]
  %v39 = vld [vmem:[%s0 + $0x64] sm:$0xf]
  %v40 = vld [vmem:[%s0 + $0x68] sm:$0xf]
  %v41 = vld [vmem:[%s0 + $0x6c] sm:$0xf]
  %v42 = vld [vmem:[%s0 + $0x70] sm:$0xf]
  %v43 = vld [vmem:[%s0 + $0x74] sm:$0xf]
  %v44 = vld [vmem:[%s0 + $0x78] sm:$0xf]
  %v45 = vld [vmem:[%s0 + $0x7c] sm:$0xf]
  %v46 = vld [vmem:[%s0 + $0x80] sm:$0xf]
  %v47 = vld [vmem:[%s0 + $0x84] sm:$0xf]
  %v48 = vld [vmem:[%s0 + $0x88] sm:$0xf]
  %v49 = vld [vmem:[%s0 + $0x8c] sm:$0xf]
  %v50 = vld [vmem:[%s0 + $0x90] sm:$0xf]
  %v51 = vld [vmem:[%s0 + $0x94] sm:$0xf]
  %v52 = vld [vmem:[%s0 + $0x98] sm:$0xf]
  %v53 = vld [vmem:[%s0 + $0x9c] sm:$0xf]
  %v54 = vld [vmem:[%s0 + $0xa0] sm:$0xf]
  %v55 = vld [vmem:[%s0 + $0xa4] sm:$0xf]
  %v56 = vld [vmem:[%s0 + $0xa8] sm:$0xf]
  %v57 = vld [vmem:[%s0 + $0xac] sm:$0xf]
  %v58 = vld [vmem:[%s0 + $0xb0] sm:$0xf]
  %v59 = vld [vmem:[%s0 + $0xb4] sm:$0xf]
  %v60 = vld [vmem:[%s0 + $0xb8] sm:$0xf]
  %v61 = vld [vmem:[%s0 + $0xbc] sm:$0xf]
  %v62 = vld [vmem:[%s0 + $0xc0] sm:$0xf]
  %v63 = vld [vmem:[%s0 + $0xc4] sm:$0xf]
  %v64 = vld [vmem:[%s0 + $0xc8] sm:$0xf]
  %v65 = vld [vmem:[%s0 + $0xcc] sm:$0xf]
  %v66 = vld [vmem:[%s0 + $0xd0] sm:$0xf]
  %v67 = vld [vmem:[%s0 + $0xd4] sm:$0xf]
  %v68 = vld [vmem:[%s0 + $0xd8] sm:$0xf]
  %v69 = vld [vmem:[%s0 + $0xdc] sm:$0xf]
  %v70 = vld [vmem:[%s0 + $0xe0] sm:$0xf]
  %v71 = vld [vmem:[%s0 + $0xe4] sm:$0xf]
  %v72 = vld [vmem:[%s0 + $0xe8] sm:$0xf]
  %v73 = vld [vmem:[%s0 + $0xec] sm:$0xf]
  %v74 = vld [vmem:[%s0 + $0xf0] sm:$0xf]
  %v75 = vld [vmem:[%s0 + $0xf4] sm:$0xf]
  %v76 = vld [vmem:[%s0 + $0xf8] sm:$0xf]
  %v77 = vld [vmem:[%s0 + $0xfc] sm:$0xf]
  %v78 = vld [vmem:[%s1] sm:$0xf]
  %v79 = vld [vmem:[%s1 + $0x4] sm:$0xf]
  %v80 = vld [vmem:[%s1 + $0x8] sm:$0xf]
  %v81 = vld [vmem:[%s1 + $0xc] sm:$0xf]
  %v82 = vld [vmem:[%s1 + $0x10] sm:$0xf]
  %v83 = vld [vmem:[%s1 + $0x14] sm:$0xf]
  %v84 = vld [vmem:[%s1 + $0x18] sm:$0xf]
  %v85 = vld [vmem:[%s1 + $0x1c] sm:$0xf]
  %v150 = vunpack.c.l.b16 %v14
  %v151 = vunpack.c.l.b16 %v15
  %v152 = vunpack.c.l.b16 %v16
  %v153 = vunpack.c.l.b16 %v17
  %v154 = vunpack.c.l.b16 %v18
  %v155 = vunpack.c.l.b16 %v19
  %v156 = vunpack.c.l.b16 %v20
  %v157 = vunpack.c.l.b16 %v21
  %v158 = vunpack.c.l.b16 %v22
  %v159 = vunpack.c.l.b16 %v23
  %v160 = vunpack.c.l.b16 %v24
  %v161 = vunpack.c.l.b16 %v25
  %v162 = vunpack.c.l.b16 %v26
  %v163 = vunpack.c.l.b16 %v27
  %v164 = vunpack.c.l.b16 %v28
  %v165 = vunpack.c.l.b16 %v29
  %v166 = vunpack.c.l.b16 %v30
  %v167 = vunpack.c.l.b16 %v31
  %v168 = vunpack.c.l.b16 %v32
  %v169 = vunpack.c.l.b16 %v33
  %v170 = vunpack.c.l.b16 %v34
  %v171 = vunpack.c.l.b16 %v35
  %v172 = vunpack.c.l.b16 %v36
  %v173 = vunpack.c.l.b16 %v37
  %v174 = vunpack.c.l.b16 %v38
  %v175 = vunpack.c.l.b16 %v39
  %v176 = vunpack.c.l.b16 %v40
  %v177 = vunpack.c.l.b16 %v41
  %v178 = vunpack.c.l.b16 %v42
  %v179 = vunpack.c.l.b16 %v43
  %v180 = vunpack.c.l.b16 %v44
  %v181 = vunpack.c.l.b16 %v45
  %v182 = vunpack.c.l.b16 %v46
  %v183 = vunpack.c.l.b16 %v47
  %v184 = vunpack.c.l.b16 %v48
  %v185 = vunpack.c.l.b16 %v49
  %v186 = vunpack.c.l.b16 %v50
  %v187 = vunpack.c.l.b16 %v51
  %v188 = vunpack.c.l.b16 %v52
  %v189 = vunpack.c.l.b16 %v53
  %v190 = vunpack.c.l.b16 %v54
  %v191 = vunpack.c.l.b16 %v55
  %v192 = vunpack.c.l.b16 %v56
  %v193 = vunpack.c.l.b16 %v57
  %v194 = vunpack.c.l.b16 %v58
  %v195 = vunpack.c.l.b16 %v59
  %v196 = vunpack.c.l.b16 %v60
  %v197 = vunpack.c.l.b16 %v61
  %v198 = vunpack.c.l.b16 %v62
  %v199 = vunpack.c.l.b16 %v63
  %v200 = vunpack.c.l.b16 %v64
  %v201 = vunpack.c.l.b16 %v65
  %v202 = vunpack.c.l.b16 %v66
  %v203 = vunpack.c.l.b16 %v67
  %v204 = vunpack.c.l.b16 %v68
  %v205 = vunpack.c.l.b16 %v69
  %v206 = vunpack.c.l.b16 %v70
  %v207 = vunpack.c.l.b16 %v71
  %v208 = vunpack.c.l.b16 %v72
  %v209 = vunpack.c.l.b16 %v73
  %v210 = vunpack.c.l.b16 %v74
  %v211 = vunpack.c.l.b16 %v75
  %v212 = vunpack.c.l.b16 %v76
  %v213 = vunpack.c.l.b16 %v77
  %v214 = vpack.c.b16 %v151, %v150
  %v215 = vpack.c.b16 %v153, %v152
  %v216 = vpack.c.b16 %v155, %v154
  %v217 = vpack.c.b16 %v157, %v156
  %v218 = vpack.c.b16 %v159, %v158
  %v219 = vpack.c.b16 %v161, %v160
  %v220 = vpack.c.b16 %v163, %v162
  %v221 = vpack.c.b16 %v165, %v164
  %v222 = vpack.c.b16 %v167, %v166
  %v223 = vpack.c.b16 %v169, %v168
  %v224 = vpack.c.b16 %v171, %v170
  %v225 = vpack.c.b16 %v173, %v172
  %v226 = vpack.c.b16 %v175, %v174
  %v227 = vpack.c.b16 %v177, %v176
  %v228 = vpack.c.b16 %v179, %v178
  %v229 = vpack.c.b16 %v181, %v180
  %v230 = vpack.c.b16 %v183, %v182
  %v231 = vpack.c.b16 %v185, %v184
  %v232 = vpack.c.b16 %v187, %v186
  %v233 = vpack.c.b16 %v189, %v188
  %v234 = vpack.c.b16 %v191, %v190
  %v235 = vpack.c.b16 %v193, %v192
  %v236 = vpack.c.b16 %v195, %v194
  %v237 = vpack.c.b16 %v197, %v196
  %v238 = vpack.c.b16 %v199, %v198
  %v239 = vpack.c.b16 %v201, %v200
  %v240 = vpack.c.b16 %v203, %v202
  %v241 = vpack.c.b16 %v205, %v204
  %v242 = vpack.c.b16 %v207, %v206
  %v243 = vpack.c.b16 %v209, %v208
  %v244 = vpack.c.b16 %v211, %v210
  %v245 = vpack.c.b16 %v213, %v212
  %v254 = vunpack.c.l.b16 %v78
  %v255 = vunpack.c.l.b16 %v79
  %v256 = vunpack.c.l.b16 %v80
  %v257 = vunpack.c.l.b16 %v81
  %v258 = vunpack.c.l.b16 %v82
  %v259 = vunpack.c.l.b16 %v83
  %v260 = vunpack.c.l.b16 %v84
  %v261 = vunpack.c.l.b16 %v85
  %v262 = vpack.c.b16 %v255, %v254
  %v263 = vpack.c.b16 %v257, %v256
  %v264 = vpack.c.b16 %v259, %v258
  %v265 = vpack.c.b16 %v261, %v260
  %vm270 = vcmask 523264
  %v272 = vsel %vm270, %v214, 0
  %v275 = vsel %vm270, %v215, 0
  %v278 = vsel %vm270, %v216, 0
  %v281 = vsel %vm270, %v217, 0
  %v284 = vsel %vm270, %v218, 0
  %v287 = vsel %vm270, %v219, 0
  %v290 = vsel %vm270, %v220, 0
  %v293 = vsel %vm270, %v221, 0
  %v296 = vsel %vm270, %v222, 0
  %v299 = vsel %vm270, %v223, 0
  %v302 = vsel %vm270, %v224, 0
  %v305 = vsel %vm270, %v225, 0
  %v308 = vsel %vm270, %v226, 0
  %v311 = vsel %vm270, %v227, 0
  %v314 = vsel %vm270, %v228, 0
  %v317 = vsel %vm270, %v229, 0
  %v320 = vsel %vm270, %v230, 0
  %v323 = vsel %vm270, %v231, 0
  %v326 = vsel %vm270, %v232, 0
  %v329 = vsel %vm270, %v233, 0
  %v332 = vsel %vm270, %v234, 0
  %v335 = vsel %vm270, %v235, 0
  %v338 = vsel %vm270, %v236, 0
  %v341 = vsel %vm270, %v237, 0
  %v344 = vsel %vm270, %v238, 0
  %v347 = vsel %vm270, %v239, 0
  %v350 = vsel %vm270, %v240, 0
  %v353 = vsel %vm270, %v241, 0
  %v356 = vsel %vm270, %v242, 0
  %v359 = vsel %vm270, %v243, 0
  %v362 = vsel %vm270, %v244, 0
  %v365 = vsel %vm270, %v245, 0
  %367 = vmatprep.subr.bf16.mxu0 0
  %368 = vmatpush1.bf16.msra.mxu0 %v262
  %369 = vmatprep.subr.bf16.mxu0 0
  %370 = vmatpush1.bf16.msra.mxu0 %v263
  %371 = vmatprep.subr.bf16.mxu0 0
  %372 = vmatpush1.bf16.msra.mxu0 %v264
  %373 = vmatprep.subr.bf16.mxu0 0
  %374 = vmatpush1.bf16.msra.mxu0 %v265
  %375 = vmatprep.subr.bf16.mxu0 0
  %376 = vmatpush1.bf16.msra.mxu0 0
  %377 = vmatprep.subr.bf16.mxu0 0
  %378 = vmatpush1.bf16.msra.mxu0 0
  %379 = vmatprep.subr.bf16.mxu0 0
  %380 = vmatpush1.bf16.msra.mxu0 0
  %381 = vmatprep.subr.bf16.mxu0 0
  %382 = vmatpush1.bf16.msra.mxu0 0
  %383 = vmatprep.subr.bf16.mxu0 0
  %384 = vmatpush1.bf16.msra.mxu0 0
  %385 = vmatprep.subr.bf16.mxu0 0
  %386 = vmatpush1.bf16.msra.mxu0 0
  %387 = vmatprep.subr.bf16.mxu0 0
  %388 = vmatpush1.bf16.msra.mxu0 0
  %389 = vmatprep.subr.bf16.mxu0 0
  %390 = vmatpush1.bf16.msra.mxu0 0
  %391 = vmatprep.subr.bf16.mxu0 0
  %392 = vmatpush1.bf16.msra.mxu0 0
  %393 = vmatprep.subr.bf16.mxu0 0
  %394 = vmatpush1.bf16.msra.mxu0 0
  %395 = vmatprep.subr.bf16.mxu0 0
  %396 = vmatpush1.bf16.msra.mxu0 0
  %397 = vmatprep.subr.bf16.mxu0 0
  %398 = vmatpush1.bf16.msra.mxu0 0
  %399 = vmatprep.mubr.bf16.mxu0 0
  %400 = vmatmul.mubr.bf16.gmra.mrb[0].mxu0 %v272
  %v401 = vpop.f32.mrb[0].mxu0
  %v402 = vadd.f32 0.0, %v401
  %v403 = vpop.f32.mrb[0].mxu0
  %v404 = vpop.f32.mrb[0].mxu0
  %v405 = vadd.f32 0.0, %v404
  %v406 = vpop.f32.mrb[0].mxu0
  %407 = vmatprep.mubr.bf16.mxu0 0
  %408 = vmatmul.mubr.bf16.gmra.mrb[0].mxu0 %v275
  %v409 = vpop.f32.mrb[0].mxu0
  %v410 = vadd.f32 0.0, %v409
  %v411 = vpop.f32.mrb[0].mxu0
  %v412 = vpop.f32.mrb[0].mxu0
  %v413 = vadd.f32 0.0, %v412
  %v414 = vpop.f32.mrb[0].mxu0
  %415 = vmatprep.mubr.bf16.mxu0 0
  %416 = vmatmul.mubr.bf16.gmra.mrb[0].mxu0 %v278
  %v417 = vpop.f32.mrb[0].mxu0
  %v418 = vadd.f32 0.0, %v417
  %v419 = vpop.f32.mrb[0].mxu0
  %v420 = vpop.f32.mrb[0].mxu0
  %v421 = vadd.f32 0.0, %v420
  %v422 = vpop.f32.mrb[0].mxu0
  %423 = vmatprep.mubr.bf16.mxu0 0
  %424 = vmatmul.mubr.bf16.gmra.mrb[0].mxu0 %v281
  %v425 = vpop.f32.mrb[0].mxu0
  %v426 = vadd.f32 0.0, %v425
  %v427 = vpop.f32.mrb[0].mxu0
  %v428 = vpop.f32.mrb[0].mxu0
  %v429 = vadd.f32 0.0, %v428
  %v430 = vpop.f32.mrb[0].mxu0
  %431 = vmatprep.mubr.bf16.mxu0 0
  %432 = vmatmul.mubr.bf16.gmra.mrb[0].mxu0 %v284
  %v433 = vpop.f32.mrb[0].mxu0
  %v434 = vadd.f32 0.0, %v433
  %v435 = vpop.f32.mrb[0].mxu0
  %v436 = vpop.f32.mrb[0].mxu0
  %v437 = vadd.f32 0.0, %v436
  %v438 = vpop.f32.mrb[0].mxu0
  %439 = vmatprep.mubr.bf16.mxu0 0
  %440 = vmatmul.mubr.bf16.gmra.mrb[0].mxu0 %v287
  %v441 = vpop.f32.mrb[0].mxu0
  %v442 = vadd.f32 0.0, %v441
  %v443 = vpop.f32.mrb[0].mxu0
  %v444 = vpop.f32.mrb[0].mxu0
  %v445 = vadd.f32 0.0, %v444
  %v446 = vpop.f32.mrb[0].mxu0
  %447 = vmatprep.mubr.bf16.mxu0 0
  %448 = vmatmul.mubr.bf16.gmra.mrb[0].mxu0 %v290
  %v449 = vpop.f32.mrb[0].mxu0
  %v450 = vadd.f32 0.0, %v449
  %v451 = vpop.f32.mrb[0].mxu0
  %v452 = vpop.f32.mrb[0].mxu0
  %v453 = vadd.f32 0.0, %v452
  %v454 = vpop.f32.mrb[0].mxu0
  %455 = vmatprep.mubr.bf16.mxu0 0
  %456 = vmatmul.mubr.bf16.gmra.mrb[0].mxu0 %v293
  %v457 = vpop.f32.mrb[0].mxu0
  %v458 = vadd.f32 0.0, %v457
  %v459 = vpop.f32.mrb[0].mxu0
  %v460 = vpop.f32.mrb[0].mxu0
  %v461 = vadd.f32 0.0, %v460
  %v462 = vpop.f32.mrb[0].mxu0
  %463 = vmatprep.mubr.bf16.mxu0 0
  %464 = vmatmul.mubr.bf16.gmra.mrb[0].mxu0 %v296
  %v465 = vpop.f32.mrb[0].mxu0
  %v466 = vadd.f32 0.0, %v465
  %v467 = vpop.f32.mrb[0].mxu0
  %v468 = vpop.f32.mrb[0].mxu0
  %v469 = vadd.f32 0.0, %v468
  %v470 = vpop.f32.mrb[0].mxu0
  %471 = vmatprep.mubr.bf16.mxu0 0
  %472 = vmatmul.mubr.bf16.gmra.mrb[0].mxu0 %v299
  %v473 = vpop.f32.mrb[0].mxu0
  %v474 = vadd.f32 0.0, %v473
  %v475 = vpop.f32.mrb[0].mxu0
  %v476 = vpop.f32.mrb[0].mxu0
  %v477 = vadd.f32 0.0, %v476
  %v478 = vpop.f32.mrb[0].mxu0
  %479 = vmatprep.mubr.bf16.mxu0 0
  %480 = vmatmul.mubr.bf16.gmra.mrb[0].mxu0 %v302
  %v481 = vpop.f32.mrb[0].mxu0
  %v482 = vadd.f32 0.0, %v481
  %v483 = vpop.f32.mrb[0].mxu0
  %v484 = vpop.f32.mrb[0].mxu0
  %v485 = vadd.f32 0.0, %v484
  %v486 = vpop.f32.mrb[0].mxu0
  %487 = vmatprep.mubr.bf16.mxu0 0
  %488 = vmatmul.mubr.bf16.gmra.mrb[0].mxu0 %v305
  %v489 = vpop.f32.mrb[0].mxu0
  %v490 = vadd.f32 0.0, %v489
  %v491 = vpop.f32.mrb[0].mxu0
  %v492 = vpop.f32.mrb[0].mxu0
  %v493 = vadd.f32 0.0, %v492
  %v494 = vpop.f32.mrb[0].mxu0
  %495 = vmatprep.mubr.bf16.mxu0 0
  %496 = vmatmul.mubr.bf16.gmra.mrb[0].mxu0 %v308
  %v497 = vpop.f32.mrb[0].mxu0
  %v498 = vadd.f32 0.0, %v497
  %v499 = vpop.f32.mrb[0].mxu0
  %v500 = vpop.f32.mrb[0].mxu0
  %v501 = vadd.f32 0.0, %v500
  %v502 = vpop.f32.mrb[0].mxu0
  %503 = vmatprep.mubr.bf16.mxu0 0
  %504 = vmatmul.mubr.bf16.gmra.mrb[0].mxu0 %v311
  %v505 = vpop.f32.mrb[0].mxu0
  %v506 = vadd.f32 0.0, %v505
  %v507 = vpop.f32.mrb[0].mxu0
  %v508 = vpop.f32.mrb[0].mxu0
  %v509 = vadd.f32 0.0, %v508
  %v510 = vpop.f32.mrb[0].mxu0
  %511 = vmatprep.mubr.bf16.mxu0 0
  %512 = vmatmul.mubr.bf16.gmra.mrb[0].mxu0 %v314
  %v513 = vpop.f32.mrb[0].mxu0
  %v514 = vadd.f32 0.0, %v513
  %v515 = vpop.f32.mrb[0].mxu0
  %v516 = vpop.f32.mrb[0].mxu0
  %v517 = vadd.f32 0.0, %v516
  %v518 = vpop.f32.mrb[0].mxu0
  %519 = vmatprep.mubr.bf16.mxu0 0
  %520 = vmatmul.mubr.bf16.gmra.mrb[0].mxu0 %v317
  %v521 = vpop.f32.mrb[0].mxu0
  %v522 = vadd.f32 0.0, %v521
  %v523 = vpop.f32.mrb[0].mxu0
  %v524 = vpop.f32.mrb[0].mxu0
  %v525 = vadd.f32 0.0, %v524
  %v526 = vpop.f32.mrb[0].mxu0
  %527 = vmatprep.mubr.bf16.mxu0 0
  %528 = vmatmul.mubr.bf16.gmra.mrb[0].mxu0 %v320
  %v529 = vpop.f32.mrb[0].mxu0
  %v530 = vadd.f32 0.0, %v529
  %v531 = vpop.f32.mrb[0].mxu0
  %v532 = vpop.f32.mrb[0].mxu0
  %v533 = vadd.f32 0.0, %v532
  %v534 = vpop.f32.mrb[0].mxu0
  %535 = vmatprep.mubr.bf16.mxu0 0
  %536 = vmatmul.mubr.bf16.gmra.mrb[0].mxu0 %v323
  %v537 = vpop.f32.mrb[0].mxu0
  %v538 = vadd.f32 0.0, %v537
  %v539 = vpop.f32.mrb[0].mxu0
  %v540 = vpop.f32.mrb[0].mxu0
  %v541 = vadd.f32 0.0, %v540
  %v542 = vpop.f32.mrb[0].mxu0
  %543 = vmatprep.mubr.bf16.mxu0 0
  %544 = vmatmul.mubr.bf16.gmra.mrb[0].mxu0 %v326
  %v545 = vpop.f32.mrb[0].mxu0
  %v546 = vadd.f32 0.0, %v545
  %v547 = vpop.f32.mrb[0].mxu0
  %v548 = vpop.f32.mrb[0].mxu0
  %v549 = vadd.f32 0.0, %v548
  %v550 = vpop.f32.mrb[0].mxu0
  %551 = vmatprep.mubr.bf16.mxu0 0
  %552 = vmatmul.mubr.bf16.gmra.mrb[0].mxu0 %v329
  %v553 = vpop.f32.mrb[0].mxu0
  %v554 = vadd.f32 0.0, %v553
  %v555 = vpop.f32.mrb[0].mxu0
  %v556 = vpop.f32.mrb[0].mxu0
  %v557 = vadd.f32 0.0, %v556
  %v558 = vpop.f32.mrb[0].mxu0
  %559 = vmatprep.mubr.bf16.mxu0 0
  %560 = vmatmul.mubr.bf16.gmra.mrb[0].mxu0 %v332
  %v561 = vpop.f32.mrb[0].mxu0
  %v562 = vadd.f32 0.0, %v561
  %v563 = vpop.f32.mrb[0].mxu0
  %v564 = vpop.f32.mrb[0].mxu0
  %v565 = vadd.f32 0.0, %v564
  %v566 = vpop.f32.mrb[0].mxu0
  %567 = vmatprep.mubr.bf16.mxu0 0
  %568 = vmatmul.mubr.bf16.gmra.mrb[0].mxu0 %v335
  %v569 = vpop.f32.mrb[0].mxu0
  %v570 = vadd.f32 0.0, %v569
  %v571 = vpop.f32.mrb[0].mxu0
  %v572 = vpop.f32.mrb[0].mxu0
  %v573 = vadd.f32 0.0, %v572
  %v574 = vpop.f32.mrb[0].mxu0
  %575 = vmatprep.mubr.bf16.mxu0 0
  %576 = vmatmul.mubr.bf16.gmra.mrb[0].mxu0 %v338
  %v577 = vpop.f32.mrb[0].mxu0
  %v578 = vadd.f32 0.0, %v577
  %v579 = vpop.f32.mrb[0].mxu0
  %v580 = vpop.f32.mrb[0].mxu0
  %v581 = vadd.f32 0.0, %v580
  %v582 = vpop.f32.mrb[0].mxu0
  %583 = vmatprep.mubr.bf16.mxu0 0
  %584 = vmatmul.mubr.bf16.gmra.mrb[0].mxu0 %v341
  %v585 = vpop.f32.mrb[0].mxu0
  %v586 = vadd.f32 0.0, %v585
  %v587 = vpop.f32.mrb[0].mxu0
  %v588 = vpop.f32.mrb[0].mxu0
  %v589 = vadd.f32 0.0, %v588
  %v590 = vpop.f32.mrb[0].mxu0
  %591 = vmatprep.mubr.bf16.mxu0 0
  %592 = vmatmul.mubr.bf16.gmra.mrb[0].mxu0 %v344
  %v593 = vpop.f32.mrb[0].mxu0
  %v594 = vadd.f32 0.0, %v593
  %v595 = vpop.f32.mrb[0].mxu0
  %v596 = vpop.f32.mrb[0].mxu0
  %v597 = vadd.f32 0.0, %v596
  %v598 = vpop.f32.mrb[0].mxu0
  %599 = vmatprep.mubr.bf16.mxu0 0
  %600 = vmatmul.mubr.bf16.gmra.mrb[0].mxu0 %v347
  %v601 = vpop.f32.mrb[0].mxu0
  %v602 = vadd.f32 0.0, %v601
  %v603 = vpop.f32.mrb[0].mxu0
  %v604 = vpop.f32.mrb[0].mxu0
  %v605 = vadd.f32 0.0, %v604
  %v606 = vpop.f32.mrb[0].mxu0
  %607 = vmatprep.mubr.bf16.mxu0 0
  %608 = vmatmul.mubr.bf16.gmra.mrb[0].mxu0 %v350
  %v609 = vpop.f32.mrb[0].mxu0
  %v610 = vadd.f32 0.0, %v609
  %v611 = vpop.f32.mrb[0].mxu0
  %v612 = vpop.f32.mrb[0].mxu0
  %v613 = vadd.f32 0.0, %v612
  %v614 = vpop.f32.mrb[0].mxu0
  %615 = vmatprep.mubr.bf16.mxu0 0
  %616 = vmatmul.mubr.bf16.gmra.mrb[0].mxu0 %v353
  %v617 = vpop.f32.mrb[0].mxu0
  %v618 = vadd.f32 0.0, %v617
  %v619 = vpop.f32.mrb[0].mxu0
  %v620 = vpop.f32.mrb[0].mxu0
  %v621 = vadd.f32 0.0, %v620
  %v622 = vpop.f32.mrb[0].mxu0
  %623 = vmatprep.mubr.bf16.mxu0 0
  %624 = vmatmul.mubr.bf16.gmra.mrb[0].mxu0 %v356
  %v625 = vpop.f32.mrb[0].mxu0
  %v626 = vadd.f32 0.0, %v625
  %v627 = vpop.f32.mrb[0].mxu0
  %v628 = vpop.f32.mrb[0].mxu0
  %v629 = vadd.f32 0.0, %v628
  %v630 = vpop.f32.mrb[0].mxu0
  %631 = vmatprep.mubr.bf16.mxu0 0
  %632 = vmatmul.mubr.bf16.gmra.mrb[0].mxu0 %v359
  %v633 = vpop.f32.mrb[0].mxu0
  %v634 = vadd.f32 0.0, %v633
  %v635 = vpop.f32.mrb[0].mxu0
  %v636 = vpop.f32.mrb[0].mxu0
  %v637 = vadd.f32 0.0, %v636
  %v638 = vpop.f32.mrb[0].mxu0
  %639 = vmatprep.mubr.bf16.mxu0 0
  %640 = vmatmul.mubr.bf16.gmra.mrb[0].mxu0 %v362
  %v641 = vpop.f32.mrb[0].mxu0
  %v642 = vadd.f32 0.0, %v641
  %v643 = vpop.f32.mrb[0].mxu0
  %v644 = vpop.f32.mrb[0].mxu0
  %v645 = vadd.f32 0.0, %v644
  %v646 = vpop.f32.mrb[0].mxu0
  %647 = vmatprep.mubr.bf16.mxu0 0
  %648 = vmatmul.mubr.bf16.gmra.mrb[0].mxu0 %v365
  %v649 = vpop.f32.mrb[0].mxu0
  %v650 = vadd.f32 0.0, %v649
  %v651 = vpop.f32.mrb[0].mxu0
  %v652 = vpop.f32.mrb[0].mxu0
  %v653 = vadd.f32 0.0, %v652
  %v654 = vpop.f32.mrb[0].mxu0
  %655 = vdwg.mxu0
  %v656 = vpack.c.bf16 %v405, %v402
  %v657 = vpack.c.bf16 %v413, %v410
  %v658 = vpack.c.bf16 %v421, %v418
  %v659 = vpack.c.bf16 %v429, %v426
  %v660 = vpack.c.bf16 %v437, %v434
  %v661 = vpack.c.bf16 %v445, %v442
  %v662 = vpack.c.bf16 %v453, %v450
  %v663 = vpack.c.bf16 %v461, %v458
  %v664 = vpack.c.bf16 %v469, %v466
  %v665 = vpack.c.bf16 %v477, %v474
  %v666 = vpack.c.bf16 %v485, %v482
  %v667 = vpack.c.bf16 %v493, %v490
  %v668 = vpack.c.bf16 %v501, %v498
  %v669 = vpack.c.bf16 %v509, %v506
  %v670 = vpack.c.bf16 %v517, %v514
  %v671 = vpack.c.bf16 %v525, %v522
  %v672 = vpack.c.bf16 %v533, %v530
  %v673 = vpack.c.bf16 %v541, %v538
  %v674 = vpack.c.bf16 %v549, %v546
  %v675 = vpack.c.bf16 %v557, %v554
  %v676 = vpack.c.bf16 %v565, %v562
  %v677 = vpack.c.bf16 %v573, %v570
  %v678 = vpack.c.bf16 %v581, %v578
  %v679 = vpack.c.bf16 %v589, %v586
  %v680 = vpack.c.bf16 %v597, %v594
  %v681 = vpack.c.bf16 %v605, %v602
  %v682 = vpack.c.bf16 %v613, %v610
  %v683 = vpack.c.bf16 %v621, %v618
  %v684 = vpack.c.bf16 %v629, %v626
  %v685 = vpack.c.bf16 %v637, %v634
  %v686 = vpack.c.bf16 %v645, %v642
  %v687 = vpack.c.bf16 %v653, %v650
  %v720 = vunpack.c.l.b16 %v656
  %v721 = vunpack.c.h.b16 %v656
  %v722 = vunpack.c.l.b16 %v657
  %v723 = vunpack.c.h.b16 %v657
  %v724 = vunpack.c.l.b16 %v658
  %v725 = vunpack.c.h.b16 %v658
  %v726 = vunpack.c.l.b16 %v659
  %v727 = vunpack.c.h.b16 %v659
  %v728 = vunpack.c.l.b16 %v660
  %v729 = vunpack.c.h.b16 %v660
  %v730 = vunpack.c.l.b16 %v661
  %v731 = vunpack.c.h.b16 %v661
  %v732 = vunpack.c.l.b16 %v662
  %v733 = vunpack.c.h.b16 %v662
  %v734 = vunpack.c.l.b16 %v663
  %v735 = vunpack.c.h.b16 %v663
  %v736 = vunpack.c.l.b16 %v664
  %v737 = vunpack.c.h.b16 %v664
  %v738 = vunpack.c.l.b16 %v665
  %v739 = vunpack.c.h.b16 %v665
  %v740 = vunpack.c.l.b16 %v666
  %v741 = vunpack.c.h.b16 %v666
  %v742 = vunpack.c.l.b16 %v667
  %v743 = vunpack.c.h.b16 %v667
  %v744 = vunpack.c.l.b16 %v668
  %v745 = vunpack.c.h.b16 %v668
  %v746 = vunpack.c.l.b16 %v669
  %v747 = vunpack.c.h.b16 %v669
  %v748 = vunpack.c.l.b16 %v670
  %v749 = vunpack.c.h.b16 %v670
  %v750 = vunpack.c.l.b16 %v671
  %v751 = vunpack.c.h.b16 %v671
  %v752 = vunpack.c.l.b16 %v672
  %v753 = vunpack.c.h.b16 %v672
  %v754 = vunpack.c.l.b16 %v673
  %v755 = vunpack.c.h.b16 %v673
  %v756 = vunpack.c.l.b16 %v674
  %v757 = vunpack.c.h.b16 %v674
  %v758 = vunpack.c.l.b16 %v675
  %v759 = vunpack.c.h.b16 %v675
  %v760 = vunpack.c.l.b16 %v676
  %v761 = vunpack.c.h.b16 %v676
  %v762 = vunpack.c.l.b16 %v677
  %v763 = vunpack.c.h.b16 %v677
  %v764 = vunpack.c.l.b16 %v678
  %v765 = vunpack.c.h.b16 %v678
  %v766 = vunpack.c.l.b16 %v679
  %v767 = vunpack.c.h.b16 %v679
  %v768 = vunpack.c.l.b16 %v680
  %v769 = vunpack.c.h.b16 %v680
  %v770 = vunpack.c.l.b16 %v681
  %v771 = vunpack.c.h.b16 %v681
  %v772 = vunpack.c.l.b16 %v682
  %v773 = vunpack.c.h.b16 %v682
  %v774 = vunpack.c.l.b16 %v683
  %v775 = vunpack.c.h.b16 %v683
  %v776 = vunpack.c.l.b16 %v684
  %v777 = vunpack.c.h.b16 %v684
  %v778 = vunpack.c.l.b16 %v685
  %v779 = vunpack.c.h.b16 %v685
  %v780 = vunpack.c.l.b16 %v686
  %v781 = vunpack.c.h.b16 %v686
  %v782 = vunpack.c.l.b16 %v687
  %v783 = vunpack.c.h.b16 %v687
  %v784 = vpack.c.b16 %v720, %v720
  %v785 = vpack.c.b16 %v721, %v721
  %v786 = vpack.c.b16 %v722, %v722
  %v787 = vpack.c.b16 %v723, %v723
  %v788 = vpack.c.b16 %v724, %v724
  %v789 = vpack.c.b16 %v725, %v725
  %v790 = vpack.c.b16 %v726, %v726
  %v791 = vpack.c.b16 %v727, %v727
  %v792 = vpack.c.b16 %v728, %v728
  %v793 = vpack.c.b16 %v729, %v729
  %v794 = vpack.c.b16 %v730, %v730
  %v795 = vpack.c.b16 %v731, %v731
  %v796 = vpack.c.b16 %v732, %v732
  %v797 = vpack.c.b16 %v733, %v733
  %v798 = vpack.c.b16 %v734, %v734
  %v799 = vpack.c.b16 %v735, %v735
  %v800 = vpack.c.b16 %v736, %v736
  %v801 = vpack.c.b16 %v737, %v737
  %v802 = vpack.c.b16 %v738, %v738
  %v803 = vpack.c.b16 %v739, %v739
  %v804 = vpack.c.b16 %v740, %v740
  %v805 = vpack.c.b16 %v741, %v741
  %v806 = vpack.c.b16 %v742, %v742
  %v807 = vpack.c.b16 %v743, %v743
  %v808 = vpack.c.b16 %v744, %v744
  %v809 = vpack.c.b16 %v745, %v745
  %v810 = vpack.c.b16 %v746, %v746
  %v811 = vpack.c.b16 %v747, %v747
  %v812 = vpack.c.b16 %v748, %v748
  %v813 = vpack.c.b16 %v749, %v749
  %v814 = vpack.c.b16 %v750, %v750
  %v815 = vpack.c.b16 %v751, %v751
  %v816 = vpack.c.b16 %v752, %v752
  %v817 = vpack.c.b16 %v753, %v753
  %v818 = vpack.c.b16 %v754, %v754
  %v819 = vpack.c.b16 %v755, %v755
  %v820 = vpack.c.b16 %v756, %v756
  %v821 = vpack.c.b16 %v757, %v757
  %v822 = vpack.c.b16 %v758, %v758
  %v823 = vpack.c.b16 %v759, %v759
  %v824 = vpack.c.b16 %v760, %v760
  %v825 = vpack.c.b16 %v761, %v761
  %v826 = vpack.c.b16 %v762, %v762
  %v827 = vpack.c.b16 %v763, %v763
  %v828 = vpack.c.b16 %v764, %v764
  %v829 = vpack.c.b16 %v765, %v765
  %v830 = vpack.c.b16 %v766, %v766
  %v831 = vpack.c.b16 %v767, %v767
  %v832 = vpack.c.b16 %v768, %v768
  %v833 = vpack.c.b16 %v769, %v769
  %v834 = vpack.c.b16 %v770, %v770
  %v835 = vpack.c.b16 %v771, %v771
  %v836 = vpack.c.b16 %v772, %v772
  %v837 = vpack.c.b16 %v773, %v773
  %v838 = vpack.c.b16 %v774, %v774
  %v839 = vpack.c.b16 %v775, %v775
  %v840 = vpack.c.b16 %v776, %v776
  %v841 = vpack.c.b16 %v777, %v777
  %v842 = vpack.c.b16 %v778, %v778
  %v843 = vpack.c.b16 %v779, %v779
  %v844 = vpack.c.b16 %v780, %v780
  %v845 = vpack.c.b16 %v781, %v781
  %v846 = vpack.c.b16 %v782, %v782
  %v847 = vpack.c.b16 %v783, %v783
  %vm912 = vcmask 60416
  %913 = vst.msk [vmem:[%s2] sm:$0xf] %vm912, %v784
  %914 = vst.msk [vmem:[%s2 + $0x4] sm:$0xf] %vm912, %v785
  %915 = vst.msk [vmem:[%s2 + $0x8] sm:$0xf] %vm912, %v786
  %916 = vst.msk [vmem:[%s2 + $0xc] sm:$0xf] %vm912, %v787
  %917 = vst.msk [vmem:[%s2 + $0x10] sm:$0xf] %vm912, %v788
  %918 = vst.msk [vmem:[%s2 + $0x14] sm:$0xf] %vm912, %v789
  %919 = vst.msk [vmem:[%s2 + $0x18] sm:$0xf] %vm912, %v790
  %920 = vst.msk [vmem:[%s2 + $0x1c] sm:$0xf] %vm912, %v791
  %921 = vst.msk [vmem:[%s2 + $0x20] sm:$0xf] %vm912, %v792
  %922 = vst.msk [vmem:[%s2 + $0x24] sm:$0xf] %vm912, %v793
  %923 = vst.msk [vmem:[%s2 + $0x28] sm:$0xf] %vm912, %v794
  %924 = vst.msk [vmem:[%s2 + $0x2c] sm:$0xf] %vm912, %v795
  %925 = vst.msk [vmem:[%s2 + $0x30] sm:$0xf] %vm912, %v796
  %926 = vst.msk [vmem:[%s2 + $0x34] sm:$0xf] %vm912, %v797
  %927 = vst.msk [vmem:[%s2 + $0x38] sm:$0xf] %vm912, %v798
  %928 = vst.msk [vmem:[%s2 + $0x3c] sm:$0xf] %vm912, %v799
  %929 = vst.msk [vmem:[%s2 + $0x40] sm:$0xf] %vm912, %v800
  %930 = vst.msk [vmem:[%s2 + $0x44] sm:$0xf] %vm912, %v801
  %931 = vst.msk [vmem:[%s2 + $0x48] sm:$0xf] %vm912, %v802
  %932 = vst.msk [vmem:[%s2 + $0x4c] sm:$0xf] %vm912, %v803
  %933 = vst.msk [vmem:[%s2 + $0x50] sm:$0xf] %vm912, %v804
  %934 = vst.msk [vmem:[%s2 + $0x54] sm:$0xf] %vm912, %v805
  %935 = vst.msk [vmem:[%s2 + $0x58] sm:$0xf] %vm912, %v806
  %936 = vst.msk [vmem:[%s2 + $0x5c] sm:$0xf] %vm912, %v807
  %937 = vst.msk [vmem:[%s2 + $0x60] sm:$0xf] %vm912, %v808
  %938 = vst.msk [vmem:[%s2 + $0x64] sm:$0xf] %vm912, %v809
  %939 = vst.msk [vmem:[%s2 + $0x68] sm:$0xf] %vm912, %v810
  %940 = vst.msk [vmem:[%s2 + $0x6c] sm:$0xf] %vm912, %v811
  %941 = vst.msk [vmem:[%s2 + $0x70] sm:$0xf] %vm912, %v812
  %942 = vst.msk [vmem:[%s2 + $0x74] sm:$0xf] %vm912, %v813
  %943 = vst.msk [vmem:[%s2 + $0x78] sm:$0xf] %vm912, %v814
  %944 = vst.msk [vmem:[%s2 + $0x7c] sm:$0xf] %vm912, %v815
  %945 = vst.msk [vmem:[%s2 + $0x80] sm:$0xf] %vm912, %v816
  %946 = vst.msk [vmem:[%s2 + $0x84] sm:$0xf] %vm912, %v817
  %947 = vst.msk [vmem:[%s2 + $0x88] sm:$0xf] %vm912, %v818
  %948 = vst.msk [vmem:[%s2 + $0x8c] sm:$0xf] %vm912, %v819
  %949 = vst.msk [vmem:[%s2 + $0x90] sm:$0xf] %vm912, %v820
  %950 = vst.msk [vmem:[%s2 + $0x94] sm:$0xf] %vm912, %v821
  %951 = vst.msk [vmem:[%s2 + $0x98] sm:$0xf] %vm912, %v822
  %952 = vst.msk [vmem:[%s2 + $0x9c] sm:$0xf] %vm912, %v823
  %953 = vst.msk [vmem:[%s2 + $0xa0] sm:$0xf] %vm912, %v824
  %954 = vst.msk [vmem:[%s2 + $0xa4] sm:$0xf] %vm912, %v825
  %955 = vst.msk [vmem:[%s2 + $0xa8] sm:$0xf] %vm912, %v826
  %956 = vst.msk [vmem:[%s2 + $0xac] sm:$0xf] %vm912, %v827
  %957 = vst.msk [vmem:[%s2 + $0xb0] sm:$0xf] %vm912, %v828
  %958 = vst.msk [vmem:[%s2 + $0xb4] sm:$0xf] %vm912, %v829
  %959 = vst.msk [vmem:[%s2 + $0xb8] sm:$0xf] %vm912, %v830
  %960 = vst.msk [vmem:[%s2 + $0xbc] sm:$0xf] %vm912, %v831
  %961 = vst.msk [vmem:[%s2 + $0xc0] sm:$0xf] %vm912, %v832
  %962 = vst.msk [vmem:[%s2 + $0xc4] sm:$0xf] %vm912, %v833
  %963 = vst.msk [vmem:[%s2 + $0xc8] sm:$0xf] %vm912, %v834
  %964 = vst.msk [vmem:[%s2 + $0xcc] sm:$0xf] %vm912, %v835
  %965 = vst.msk [vmem:[%s2 + $0xd0] sm:$0xf] %vm912, %v836
  %966 = vst.msk [vmem:[%s2 + $0xd4] sm:$0xf] %vm912, %v837
  %967 = vst.msk [vmem:[%s2 + $0xd8] sm:$0xf] %vm912, %v838
  %968 = vst.msk [vmem:[%s2 + $0xdc] sm:$0xf] %vm912, %v839
  %969 = vst.msk [vmem:[%s2 + $0xe0] sm:$0xf] %vm912, %v840
  %970 = vst.msk [vmem:[%s2 + $0xe4] sm:$0xf] %vm912, %v841
  %971 = vst.msk [vmem:[%s2 + $0xe8] sm:$0xf] %vm912, %v842
  %972 = vst.msk [vmem:[%s2 + $0xec] sm:$0xf] %vm912, %v843
  %973 = vst.msk [vmem:[%s2 + $0xf0] sm:$0xf] %vm912, %v844
  %974 = vst.msk [vmem:[%s2 + $0xf4] sm:$0xf] %vm912, %v845
  %975 = vst.msk [vmem:[%s2 + $0xf8] sm:$0xf] %vm912, %v846
  %976 = vst.msk [vmem:[%s2 + $0xfc] sm:$0xf] %vm912, %v847
  %vm977 = vcmask 64512
  %v978 = vsel %vm977, %v402, 0.0
  %v979 = vsel %vm977, %v405, 0.0
  %v980 = vadd.f32 %v978, %v979
  %v981 = vsel %vm977, %v410, 0.0
  %v982 = vadd.f32 %v980, %v981
  %v983 = vsel %vm977, %v413, 0.0
  %v984 = vadd.f32 %v982, %v983
  %v985 = vsel %vm977, %v418, 0.0
  %v986 = vadd.f32 %v984, %v985
  %v987 = vsel %vm977, %v421, 0.0
  %v988 = vadd.f32 %v986, %v987
  %v989 = vsel %vm977, %v426, 0.0
  %v990 = vadd.f32 %v988, %v989
  %v991 = vsel %vm977, %v429, 0.0
  %v992 = vadd.f32 %v990, %v991
  %v993 = vsel %vm977, %v434, 0.0
  %v994 = vadd.f32 %v992, %v993
  %v995 = vsel %vm977, %v437, 0.0
  %v996 = vadd.f32 %v994, %v995
  %v997 = vsel %vm977, %v442, 0.0
  %v998 = vadd.f32 %v996, %v997
  %v999 = vsel %vm977, %v445, 0.0
  %v1000 = vadd.f32 %v998, %v999
  %v1001 = vsel %vm977, %v450, 0.0
  %v1002 = vadd.f32 %v1000, %v1001
  %v1003 = vsel %vm977, %v453, 0.0
  %v1004 = vadd.f32 %v1002, %v1003
  %v1005 = vsel %vm977, %v458, 0.0
  %v1006 = vadd.f32 %v1004, %v1005
  %v1007 = vsel %vm977, %v461, 0.0
  %v1008 = vadd.f32 %v1006, %v1007
  %v1009 = vsel %vm977, %v466, 0.0
  %v1010 = vadd.f32 %v1008, %v1009
  %v1011 = vsel %vm977, %v469, 0.0
  %v1012 = vadd.f32 %v1010, %v1011
  %v1013 = vsel %vm977, %v474, 0.0
  %v1014 = vadd.f32 %v1012, %v1013
  %v1015 = vsel %vm977, %v477, 0.0
  %v1016 = vadd.f32 %v1014, %v1015
  %v1017 = vsel %vm977, %v482, 0.0
  %v1018 = vadd.f32 %v1016, %v1017
  %v1019 = vsel %vm977, %v485, 0.0
  %v1020 = vadd.f32 %v1018, %v1019
  %v1021 = vsel %vm977, %v490, 0.0
  %v1022 = vadd.f32 %v1020, %v1021
  %v1023 = vsel %vm977, %v493, 0.0
  %v1024 = vadd.f32 %v1022, %v1023
  %v1025 = vsel %vm977, %v498, 0.0
  %v1026 = vadd.f32 %v1024, %v1025
  %v1027 = vsel %vm977, %v501, 0.0
  %v1028 = vadd.f32 %v1026, %v1027
  %v1029 = vsel %vm977, %v506, 0.0
  %v1030 = vadd.f32 %v1028, %v1029
  %v1031 = vsel %vm977, %v509, 0.0
  %v1032 = vadd.f32 %v1030, %v1031
  %v1033 = vsel %vm977, %v514, 0.0
  %v1034 = vadd.f32 %v1032, %v1033
  %v1035 = vsel %vm977, %v517, 0.0
  %v1036 = vadd.f32 %v1034, %v1035
  %v1037 = vsel %vm977, %v522, 0.0
  %v1038 = vadd.f32 %v1036, %v1037
  %v1039 = vsel %vm977, %v525, 0.0
  %v1040 = vadd.f32 %v1038, %v1039
  %v1041 = vsel %vm977, %v530, 0.0
  %v1042 = vadd.f32 %v1040, %v1041
  %v1043 = vsel %vm977, %v533, 0.0
  %v1044 = vadd.f32 %v1042, %v1043
  %v1045 = vsel %vm977, %v538, 0.0
  %v1046 = vadd.f32 %v1044, %v1045
  %v1047 = vsel %vm977, %v541, 0.0
  %v1048 = vadd.f32 %v1046, %v1047
  %v1049 = vsel %vm977, %v546, 0.0
  %v1050 = vadd.f32 %v1048, %v1049
  %v1051 = vsel %vm977, %v549, 0.0
  %v1052 = vadd.f32 %v1050, %v1051
  %v1053 = vsel %vm977, %v554, 0.0
  %v1054 = vadd.f32 %v1052, %v1053
  %v1055 = vsel %vm977, %v557, 0.0
  %v1056 = vadd.f32 %v1054, %v1055
  %v1057 = vsel %vm977, %v562, 0.0
  %v1058 = vadd.f32 %v1056, %v1057
  %v1059 = vsel %vm977, %v565, 0.0
  %v1060 = vadd.f32 %v1058, %v1059
  %v1061 = vsel %vm977, %v570, 0.0
  %v1062 = vadd.f32 %v1060, %v1061
  %v1063 = vsel %vm977, %v573, 0.0
  %v1064 = vadd.f32 %v1062, %v1063
  %v1065 = vsel %vm977, %v578, 0.0
  %v1066 = vadd.f32 %v1064, %v1065
  %v1067 = vsel %vm977, %v581, 0.0
  %v1068 = vadd.f32 %v1066, %v1067
  %v1069 = vsel %vm977, %v586, 0.0
  %v1070 = vadd.f32 %v1068, %v1069
  %v1071 = vsel %vm977, %v589, 0.0
  %v1072 = vadd.f32 %v1070, %v1071
  %v1073 = vsel %vm977, %v594, 0.0
  %v1074 = vadd.f32 %v1072, %v1073
  %v1075 = vsel %vm977, %v597, 0.0
  %v1076 = vadd.f32 %v1074, %v1075
  %v1077 = vsel %vm977, %v602, 0.0
  %v1078 = vadd.f32 %v1076, %v1077
  %v1079 = vsel %vm977, %v605, 0.0
  %v1080 = vadd.f32 %v1078, %v1079
  %v1081 = vsel %vm977, %v610, 0.0
  %v1082 = vadd.f32 %v1080, %v1081
  %v1083 = vsel %vm977, %v613, 0.0
  %v1084 = vadd.f32 %v1082, %v1083
  %v1085 = vsel %vm977, %v618, 0.0
  %v1086 = vadd.f32 %v1084, %v1085
  %v1087 = vsel %vm977, %v621, 0.0
  %v1088 = vadd.f32 %v1086, %v1087
  %v1089 = vsel %vm977, %v626, 0.0
  %v1090 = vadd.f32 %v1088, %v1089
  %v1091 = vsel %vm977, %v629, 0.0
  %v1092 = vadd.f32 %v1090, %v1091
  %v1093 = vsel %vm977, %v634, 0.0
  %v1094 = vadd.f32 %v1092, %v1093
  %v1095 = vsel %vm977, %v637, 0.0
  %v1096 = vadd.f32 %v1094, %v1095
  %v1097 = vsel %vm977, %v642, 0.0
  %v1098 = vadd.f32 %v1096, %v1097
  %v1099 = vsel %vm977, %v645, 0.0
  %v1100 = vadd.f32 %v1098, %v1099
  %v1101 = vsel %vm977, %v650, 0.0
  %v1102 = vadd.f32 %v1100, %v1101
  %v1103 = vsel %vm977, %v653, 0.0
  %v1104 = vadd.f32 %v1102, %v1103
  %v1105 = vrot.slane %v1104, 4
  %v1106 = vadd.f32 %v1104, %v1105
  %v1107 = vrot.slane %v1106, 2
  %v1108 = vadd.f32 %v1106, %v1107
  %v1109 = vrot.slane %v1108, 1
  %v1110 = vadd.f32 %v1108, %v1109
  %v1111 = vmul.f32 %v402, %v402
  %v1112 = vmul.f32 %v405, %v405
  %v1113 = vmul.f32 %v410, %v410
  %v1114 = vmul.f32 %v413, %v413
  %v1115 = vmul.f32 %v418, %v418
  %v1116 = vmul.f32 %v421, %v421
  %v1117 = vmul.f32 %v426, %v426
  %v1118 = vmul.f32 %v429, %v429
  %v1119 = vmul.f32 %v434, %v434
  %v1120 = vmul.f32 %v437, %v437
  %v1121 = vmul.f32 %v442, %v442
  %v1122 = vmul.f32 %v445, %v445
  %v1123 = vmul.f32 %v450, %v450
  %v1124 = vmul.f32 %v453, %v453
  %v1125 = vmul.f32 %v458, %v458
  %v1126 = vmul.f32 %v461, %v461
  %v1127 = vmul.f32 %v466, %v466
  %v1128 = vmul.f32 %v469, %v469
  %v1129 = vmul.f32 %v474, %v474
  %v1130 = vmul.f32 %v477, %v477
  %v1131 = vmul.f32 %v482, %v482
  %v1132 = vmul.f32 %v485, %v485
  %v1133 = vmul.f32 %v490, %v490
  %v1134 = vmul.f32 %v493, %v493
  %v1135 = vmul.f32 %v498, %v498
  %v1136 = vmul.f32 %v501, %v501
  %v1137 = vmul.f32 %v506, %v506
  %v1138 = vmul.f32 %v509, %v509
  %v1139 = vmul.f32 %v514, %v514
  %v1140 = vmul.f32 %v517, %v517
  %v1141 = vmul.f32 %v522, %v522
  %v1142 = vmul.f32 %v525, %v525
  %v1143 = vmul.f32 %v530, %v530
  %v1144 = vmul.f32 %v533, %v533
  %v1145 = vmul.f32 %v538, %v538
  %v1146 = vmul.f32 %v541, %v541
  %v1147 = vmul.f32 %v546, %v546
  %v1148 = vmul.f32 %v549, %v549
  %v1149 = vmul.f32 %v554, %v554
  %v1150 = vmul.f32 %v557, %v557
  %v1151 = vmul.f32 %v562, %v562
  %v1152 = vmul.f32 %v565, %v565
  %v1153 = vmul.f32 %v570, %v570
  %v1154 = vmul.f32 %v573, %v573
  %v1155 = vmul.f32 %v578, %v578
  %v1156 = vmul.f32 %v581, %v581
  %v1157 = vmul.f32 %v586, %v586
  %v1158 = vmul.f32 %v589, %v589
  %v1159 = vmul.f32 %v594, %v594
  %v1160 = vmul.f32 %v597, %v597
  %v1161 = vmul.f32 %v602, %v602
  %v1162 = vmul.f32 %v605, %v605
  %v1163 = vmul.f32 %v610, %v610
  %v1164 = vmul.f32 %v613, %v613
  %v1165 = vmul.f32 %v618, %v618
  %v1166 = vmul.f32 %v621, %v621
  %v1167 = vmul.f32 %v626, %v626
  %v1168 = vmul.f32 %v629, %v629
  %v1169 = vmul.f32 %v634, %v634
  %v1170 = vmul.f32 %v637, %v637
  %v1171 = vmul.f32 %v642, %v642
  %v1172 = vmul.f32 %v645, %v645
  %v1173 = vmul.f32 %v650, %v650
  %v1174 = vmul.f32 %v653, %v653
  %v1175 = vsel %vm977, %v1111, 0.0
  %v1176 = vsel %vm977, %v1112, 0.0
  %v1177 = vadd.f32 %v1175, %v1176
  %v1178 = vsel %vm977, %v1113, 0.0
  %v1179 = vadd.f32 %v1177, %v1178
  %v1180 = vsel %vm977, %v1114, 0.0
  %v1181 = vadd.f32 %v1179, %v1180
  %v1182 = vsel %vm977, %v1115, 0.0
  %v1183 = vadd.f32 %v1181, %v1182
  %v1184 = vsel %vm977, %v1116, 0.0
  %v1185 = vadd.f32 %v1183, %v1184
  %v1186 = vsel %vm977, %v1117, 0.0
  %v1187 = vadd.f32 %v1185, %v1186
  %v1188 = vsel %vm977, %v1118, 0.0
  %v1189 = vadd.f32 %v1187, %v1188
  %v1190 = vsel %vm977, %v1119, 0.0
  %v1191 = vadd.f32 %v1189, %v1190
  %v1192 = vsel %vm977, %v1120, 0.0
  %v1193 = vadd.f32 %v1191, %v1192
  %v1194 = vsel %vm977, %v1121, 0.0
  %v1195 = vadd.f32 %v1193, %v1194
  %v1196 = vsel %vm977, %v1122, 0.0
  %v1197 = vadd.f32 %v1195, %v1196
  %v1198 = vsel %vm977, %v1123, 0.0
  %v1199 = vadd.f32 %v1197, %v1198
  %v1200 = vsel %vm977, %v1124, 0.0
  %v1201 = vadd.f32 %v1199, %v1200
  %v1202 = vsel %vm977, %v1125, 0.0
  %v1203 = vadd.f32 %v1201, %v1202
  %v1204 = vsel %vm977, %v1126, 0.0
  %v1205 = vadd.f32 %v1203, %v1204
  %v1206 = vsel %vm977, %v1127, 0.0
  %v1207 = vadd.f32 %v1205, %v1206
  %v1208 = vsel %vm977, %v1128, 0.0
  %v1209 = vadd.f32 %v1207, %v1208
  %v1210 = vsel %vm977, %v1129, 0.0
  %v1211 = vadd.f32 %v1209, %v1210
  %v1212 = vsel %vm977, %v1130, 0.0
  %v1213 = vadd.f32 %v1211, %v1212
  %v1214 = vsel %vm977, %v1131, 0.0
  %v1215 = vadd.f32 %v1213, %v1214
  %v1216 = vsel %vm977, %v1132, 0.0
  %v1217 = vadd.f32 %v1215, %v1216
  %v1218 = vsel %vm977, %v1133, 0.0
  %v1219 = vadd.f32 %v1217, %v1218
  %v1220 = vsel %vm977, %v1134, 0.0
  %v1221 = vadd.f32 %v1219, %v1220
  %v1222 = vsel %vm977, %v1135, 0.0
  %v1223 = vadd.f32 %v1221, %v1222
  %v1224 = vsel %vm977, %v1136, 0.0
  %v1225 = vadd.f32 %v1223, %v1224
  %v1226 = vsel %vm977, %v1137, 0.0
  %v1227 = vadd.f32 %v1225, %v1226
  %v1228 = vsel %vm977, %v1138, 0.0
  %v1229 = vadd.f32 %v1227, %v1228
  %v1230 = vsel %vm977, %v1139, 0.0
  %v1231 = vadd.f32 %v1229, %v1230
  %v1232 = vsel %vm977, %v1140, 0.0
  %v1233 = vadd.f32 %v1231, %v1232
  %v1234 = vsel %vm977, %v1141, 0.0
  %v1235 = vadd.f32 %v1233, %v1234
  %v1236 = vsel %vm977, %v1142, 0.0
  %v1237 = vadd.f32 %v1235, %v1236
  %v1238 = vsel %vm977, %v1143, 0.0
  %v1239 = vadd.f32 %v1237, %v1238
  %v1240 = vsel %vm977, %v1144, 0.0
  %v1241 = vadd.f32 %v1239, %v1240
  %v1242 = vsel %vm977, %v1145, 0.0
  %v1243 = vadd.f32 %v1241, %v1242
  %v1244 = vsel %vm977, %v1146, 0.0
  %v1245 = vadd.f32 %v1243, %v1244
  %v1246 = vsel %vm977, %v1147, 0.0
  %v1247 = vadd.f32 %v1245, %v1246
  %v1248 = vsel %vm977, %v1148, 0.0
  %v1249 = vadd.f32 %v1247, %v1248
  %v1250 = vsel %vm977, %v1149, 0.0
  %v1251 = vadd.f32 %v1249, %v1250
  %v1252 = vsel %vm977, %v1150, 0.0
  %v1253 = vadd.f32 %v1251, %v1252
  %v1254 = vsel %vm977, %v1151, 0.0
  %v1255 = vadd.f32 %v1253, %v1254
  %v1256 = vsel %vm977, %v1152, 0.0
  %v1257 = vadd.f32 %v1255, %v1256
  %v1258 = vsel %vm977, %v1153, 0.0
  %v1259 = vadd.f32 %v1257, %v1258
  %v1260 = vsel %vm977, %v1154, 0.0
  %v1261 = vadd.f32 %v1259, %v1260
  %v1262 = vsel %vm977, %v1155, 0.0
  %v1263 = vadd.f32 %v1261, %v1262
  %v1264 = vsel %vm977, %v1156, 0.0
  %v1265 = vadd.f32 %v1263, %v1264
  %v1266 = vsel %vm977, %v1157, 0.0
  %v1267 = vadd.f32 %v1265, %v1266
  %v1268 = vsel %vm977, %v1158, 0.0
  %v1269 = vadd.f32 %v1267, %v1268
  %v1270 = vsel %vm977, %v1159, 0.0
  %v1271 = vadd.f32 %v1269, %v1270
  %v1272 = vsel %vm977, %v1160, 0.0
  %v1273 = vadd.f32 %v1271, %v1272
  %v1274 = vsel %vm977, %v1161, 0.0
  %v1275 = vadd.f32 %v1273, %v1274
  %v1276 = vsel %vm977, %v1162, 0.0
  %v1277 = vadd.f32 %v1275, %v1276
  %v1278 = vsel %vm977, %v1163, 0.0
  %v1279 = vadd.f32 %v1277, %v1278
  %v1280 = vsel %vm977, %v1164, 0.0
  %v1281 = vadd.f32 %v1279, %v1280
  %v1282 = vsel %vm977, %v1165, 0.0
  %v1283 = vadd.f32 %v1281, %v1282
  %v1284 = vsel %vm977, %v1166, 0.0
  %v1285 = vadd.f32 %v1283, %v1284
  %v1286 = vsel %vm977, %v1167, 0.0
  %v1287 = vadd.f32 %v1285, %v1286
  %v1288 = vsel %vm977, %v1168, 0.0
  %v1289 = vadd.f32 %v1287, %v1288
  %v1290 = vsel %vm977, %v1169, 0.0
  %v1291 = vadd.f32 %v1289, %v1290
  %v1292 = vsel %vm977, %v1170, 0.0
  %v1293 = vadd.f32 %v1291, %v1292
  %v1294 = vsel %vm977, %v1171, 0.0
  %v1295 = vadd.f32 %v1293, %v1294
  %v1296 = vsel %vm977, %v1172, 0.0
  %v1297 = vadd.f32 %v1295, %v1296
  %v1298 = vsel %vm977, %v1173, 0.0
  %v1299 = vadd.f32 %v1297, %v1298
  %v1300 = vsel %vm977, %v1174, 0.0
  %v1301 = vadd.f32 %v1299, %v1300
  %v1302 = vrot.slane %v1301, 4
  %v1303 = vadd.f32 %v1301, %v1302
  %v1304 = vrot.slane %v1303, 2
  %v1305 = vadd.f32 %v1303, %v1304
  %v1306 = vrot.slane %v1305, 1
  %v1307 = vadd.f32 %v1305, %v1306
  %v1308 = vlaneseq
  %v1309 = vshrl.u32 %v1308, 7
  %vm1310 = vcmp.eq.s32.totalorder %v1309, 0
  %vm1311 = vcmp.eq.s32.totalorder %v1309, 1
  %v1312 = vsel %vm1311, 1, 0
  %vm1313 = vcmp.eq.s32.totalorder %v1312, 1
  %v1314 = vsel %vm1313, %v1307, 0.0
  %v1315 = vsel %vm1310, 1, 0
  %vm1316 = vcmp.eq.s32.totalorder %v1315, 1
  %v1317 = vsel %vm1316, %v1110, %v1314
  %1318 = vst.msk [vmem:[%s3] sm:$0xff] %vm977, %v1317
  // Predicated region
  $region10: #{generator_forward.48} parent=0 // pred_check
    _
  $region11: #{generator_forward.48} parent=0 // pred_check_branch
    %1320 = sbr.rel (0) target = $region13
  $region12: #{generator_forward.48} parent=0 // pred_region
    _
  $region13: #{generator_forward.48} parent=0 // pred_fallthru
    _
  // Predicated region
  $region14: #{generator_forward.48} parent=0 // pred_check
    _
  $region15: #{generator_forward.48} parent=0 // pred_check_branch
    %1322 = sbr.rel (0) target = $region17
  $region16: #{generator_forward.48} parent=0 // pred_region
    _
  $region17: #{generator_forward.48} parent=0 // pred_fallthru
    _
  // Predicated region
  $region18: #{generator_forward.48} parent=0 // pred_check
    _
  $region19: #{generator_forward.48} parent=0 // pred_check_branch
    %1324 = sbr.rel (0) target = $region21
  $region20: #{generator_forward.48} parent=0 // pred_region
    _
  $region21: #{generator_forward.48} parent=0 // pred_fallthru
    _
  // Predicated region
  $region22: #{generator_forward.48} parent=0 // pred_check
    _
  $region23: #{generator_forward.48} parent=0 // pred_check_branch
    %1326 = sbr.rel (0) target = $region25
  $region24: #{generator_forward.48} parent=0 // pred_region
    _
  $region25: #{generator_forward.48} parent=0 // pred_fallthru
    _

// kernel: generator_forward.52
$region0: #{generator_forward.52}
  #allocation0 [shape = 'u32[]', space=smem, size = 0x4, offset = 0x4, fixed_abs, tag = 'smem constant byte address 0x4 - core index']
  #allocation1 [shape = 'u32[144,128]{1,0:T(1,128)}', space=vmem, size = 0x12000, scoped, tag = 'internal scratch']
  %s0 = inlined_call_operand.vmem [shape: bf16[512,8], index: 0, kind: input, shape index: {}]
  %s1 = inlined_call_operand.vmem [shape: f32[1,8], index: 1, kind: input, shape index: {}]
  %s2 = inlined_call_operand.vmem [shape: f32[1,8], index: 2, kind: input, shape index: {}]
  %s3 = inlined_call_operand.vmem [shape: bf16[512,8], index: 3, kind: output, shape index: {}]
  %s4 = sld [smem:[#allocation0]]
  $region22: #{generator_forward.52} parent=0
    _
  %s6 = ssub.s32 1, %s4
  %s7 = scalar_select 0, %s6, %s4
  // Predicated region
  $region2: #{generator_forward.52} parent=0 // pred_check
    _
  $region3: #{generator_forward.52} parent=0 // pred_check_branch
    %9 = sbr.rel (0) target = $region5
  $region4: #{generator_forward.52} parent=0 // pred_region
    _
  $region5: #{generator_forward.52} parent=0 // pred_fallthru
    _
  // Predicated region
  $region6: #{generator_forward.52} parent=0 // pred_check
    _
  $region7: #{generator_forward.52} parent=0 // pred_check_branch
    %11 = sbr.rel (0) target = $region9
  $region8: #{generator_forward.52} parent=0 // pred_region
    _
  $region9: #{generator_forward.52} parent=0 // pred_fallthru
    _
  // Predicated region
  $region10: #{generator_forward.52} parent=0 // pred_check
    _
  $region11: #{generator_forward.52} parent=0 // pred_check_branch
    %13 = sbr.rel (0) target = $region13
  $region12: #{generator_forward.52} parent=0 // pred_region
    _
  $region13: #{generator_forward.52} parent=0 // pred_fallthru
    _
  %v14 = vld [vmem:[%s0] sm:$0xf]
  %v15 = vld [vmem:[%s0 + $0x4] sm:$0xf]
  %v16 = vld [vmem:[%s0 + $0x8] sm:$0xf]
  %v17 = vld [vmem:[%s0 + $0xc] sm:$0xf]
  %v18 = vld [vmem:[%s0 + $0x10] sm:$0xf]
  %v19 = vld [vmem:[%s0 + $0x14] sm:$0xf]
  %v20 = vld [vmem:[%s0 + $0x18] sm:$0xf]
  %v21 = vld [vmem:[%s0 + $0x1c] sm:$0xf]
  %v22 = vld [vmem:[%s0 + $0x20] sm:$0xf]
  %v23 = vld [vmem:[%s0 + $0x24] sm:$0xf]
  %v24 = vld [vmem:[%s0 + $0x28] sm:$0xf]
  %v25 = vld [vmem:[%s0 + $0x2c] sm:$0xf]
  %v26 = vld [vmem:[%s0 + $0x30] sm:$0xf]
  %v27 = vld [vmem:[%s0 + $0x34] sm:$0xf]
  %v28 = vld [vmem:[%s0 + $0x38] sm:$0xf]
  %v29 = vld [vmem:[%s0 + $0x3c] sm:$0xf]
  %v30 = vld [vmem:[%s0 + $0x40] sm:$0xf]
  %v31 = vld [vmem:[%s0 + $0x44] sm:$0xf]
  %v32 = vld [vmem:[%s0 + $0x48] sm:$0xf]
  %v33 = vld [vmem:[%s0 + $0x4c] sm:$0xf]
  %v34 = vld [vmem:[%s0 + $0x50] sm:$0xf]
  %v35 = vld [vmem:[%s0 + $0x54] sm:$0xf]
  %v36 = vld [vmem:[%s0 + $0x58] sm:$0xf]
  %v37 = vld [vmem:[%s0 + $0x5c] sm:$0xf]
  %v38 = vld [vmem:[%s0 + $0x60] sm:$0xf]
  %v39 = vld [vmem:[%s0 + $0x64] sm:$0xf]
  %v40 = vld [vmem:[%s0 + $0x68] sm:$0xf]
  %v41 = vld [vmem:[%s0 + $0x6c] sm:$0xf]
  %v42 = vld [vmem:[%s0 + $0x70] sm:$0xf]
  %v43 = vld [vmem:[%s0 + $0x74] sm:$0xf]
  %v44 = vld [vmem:[%s0 + $0x78] sm:$0xf]
  %v45 = vld [vmem:[%s0 + $0x7c] sm:$0xf]
  %v46 = vld [vmem:[%s0 + $0x80] sm:$0xf]
  %v47 = vld [vmem:[%s0 + $0x84] sm:$0xf]
  %v48 = vld [vmem:[%s0 + $0x88] sm:$0xf]
  %v49 = vld [vmem:[%s0 + $0x8c] sm:$0xf]
  %v50 = vld [vmem:[%s0 + $0x90] sm:$0xf]
  %v51 = vld [vmem:[%s0 + $0x94] sm:$0xf]
  %v52 = vld [vmem:[%s0 + $0x98] sm:$0xf]
  %v53 = vld [vmem:[%s0 + $0x9c] sm:$0xf]
  %v54 = vld [vmem:[%s0 + $0xa0] sm:$0xf]
  %v55 = vld [vmem:[%s0 + $0xa4] sm:$0xf]
  %v56 = vld [vmem:[%s0 + $0xa8] sm:$0xf]
  %v57 = vld [vmem:[%s0 + $0xac] sm:$0xf]
  %v58 = vld [vmem:[%s0 + $0xb0] sm:$0xf]
  %v59 = vld [vmem:[%s0 + $0xb4] sm:$0xf]
  %v60 = vld [vmem:[%s0 + $0xb8] sm:$0xf]
  %v61 = vld [vmem:[%s0 + $0xbc] sm:$0xf]
  %v62 = vld [vmem:[%s0 + $0xc0] sm:$0xf]
  %v63 = vld [vmem:[%s0 + $0xc4] sm:$0xf]
  %v64 = vld [vmem:[%s0 + $0xc8] sm:$0xf]
  %v65 = vld [vmem:[%s0 + $0xcc] sm:$0xf]
  %v66 = vld [vmem:[%s0 + $0xd0] sm:$0xf]
  %v67 = vld [vmem:[%s0 + $0xd4] sm:$0xf]
  %v68 = vld [vmem:[%s0 + $0xd8] sm:$0xf]
  %v69 = vld [vmem:[%s0 + $0xdc] sm:$0xf]
  %v70 = vld [vmem:[%s0 + $0xe0] sm:$0xf]
  %v71 = vld [vmem:[%s0 + $0xe4] sm:$0xf]
  %v72 = vld [vmem:[%s0 + $0xe8] sm:$0xf]
  %v73 = vld [vmem:[%s0 + $0xec] sm:$0xf]
  %v74 = vld [vmem:[%s0 + $0xf0] sm:$0xf]
  %v75 = vld [vmem:[%s0 + $0xf4] sm:$0xf]
  %v76 = vld [vmem:[%s0 + $0xf8] sm:$0xf]
  %v77 = vld [vmem:[%s0 + $0xfc] sm:$0xf]
  %v78 = vunpack.c.l.bf16 %v14
  %v79 = vunpack.c.l.bf16 %v15
  %v80 = vunpack.c.l.bf16 %v16
  %v81 = vunpack.c.l.bf16 %v17
  %v82 = vunpack.c.l.bf16 %v18
  %v83 = vunpack.c.l.bf16 %v19
  %v84 = vunpack.c.l.bf16 %v20
  %v85 = vunpack.c.l.bf16 %v21
  %v86 = vunpack.c.l.bf16 %v22
  %v87 = vunpack.c.l.bf16 %v23
  %v88 = vunpack.c.l.bf16 %v24
  %v89 = vunpack.c.l.bf16 %v25
  %v90 = vunpack.c.l.bf16 %v26
  %v91 = vunpack.c.l.bf16 %v27
  %v92 = vunpack.c.l.bf16 %v28
  %v93 = vunpack.c.l.bf16 %v29
  %v94 = vunpack.c.l.bf16 %v30
  %v95 = vunpack.c.l.bf16 %v31
  %v96 = vunpack.c.l.bf16 %v32
  %v97 = vunpack.c.l.bf16 %v33
  %v98 = vunpack.c.l.bf16 %v34
  %v99 = vunpack.c.l.bf16 %v35
  %v100 = vunpack.c.l.bf16 %v36
  %v101 = vunpack.c.l.bf16 %v37
  %v102 = vunpack.c.l.bf16 %v38
  %v103 = vunpack.c.l.bf16 %v39
  %v104 = vunpack.c.l.bf16 %v40
  %v105 = vunpack.c.l.bf16 %v41
  %v106 = vunpack.c.l.bf16 %v42
  %v107 = vunpack.c.l.bf16 %v43
  %v108 = vunpack.c.l.bf16 %v44
  %v109 = vunpack.c.l.bf16 %v45
  %v110 = vunpack.c.l.bf16 %v46
  %v111 = vunpack.c.l.bf16 %v47
  %v112 = vunpack.c.l.bf16 %v48
  %v113 = vunpack.c.l.bf16 %v49
  %v114 = vunpack.c.l.bf16 %v50
  %v115 = vunpack.c.l.bf16 %v51
  %v116 = vunpack.c.l.bf16 %v52
  %v117 = vunpack.c.l.bf16 %v53
  %v118 = vunpack.c.l.bf16 %v54
  %v119 = vunpack.c.l.bf16 %v55
  %v120 = vunpack.c.l.bf16 %v56
  %v121 = vunpack.c.l.bf16 %v57
  %v122 = vunpack.c.l.bf16 %v58
  %v123 = vunpack.c.l.bf16 %v59
  %v124 = vunpack.c.l.bf16 %v60
  %v125 = vunpack.c.l.bf16 %v61
  %v126 = vunpack.c.l.bf16 %v62
  %v127 = vunpack.c.l.bf16 %v63
  %v128 = vunpack.c.l.bf16 %v64
  %v129 = vunpack.c.l.bf16 %v65
  %v130 = vunpack.c.l.bf16 %v66
  %v131 = vunpack.c.l.bf16 %v67
  %v132 = vunpack.c.l.bf16 %v68
  %v133 = vunpack.c.l.bf16 %v69
  %v134 = vunpack.c.l.bf16 %v70
  %v135 = vunpack.c.l.bf16 %v71
  %v136 = vunpack.c.l.bf16 %v72
  %v137 = vunpack.c.l.bf16 %v73
  %v138 = vunpack.c.l.bf16 %v74
  %v139 = vunpack.c.l.bf16 %v75
  %v140 = vunpack.c.l.bf16 %v76
  %v141 = vunpack.c.l.bf16 %v77
  %v142 = vld [vmem:[%s1] sm:$0x1]
  %v144 = vlaneseq
  %v145 = vshrl.u32 %v144, 7
  %v146 = vsub.s32 0, %v145
  %v147 = vrot.slane %v142, %v146
  %v149 = vmul.f32 %v78, %v147
  %v150 = vmul.f32 %v79, %v147
  %v151 = vmul.f32 %v80, %v147
  %v152 = vmul.f32 %v81, %v147
  %v153 = vmul.f32 %v82, %v147
  %v154 = vmul.f32 %v83, %v147
  %v155 = vmul.f32 %v84, %v147
  %v156 = vmul.f32 %v85, %v147
  %v157 = vmul.f32 %v86, %v147
  %v158 = vmul.f32 %v87, %v147
  %v159 = vmul.f32 %v88, %v147
  %v160 = vmul.f32 %v89, %v147
  %v161 = vmul.f32 %v90, %v147
  %v162 = vmul.f32 %v91, %v147
  %v163 = vmul.f32 %v92, %v147
  %v164 = vmul.f32 %v93, %v147
  %v165 = vmul.f32 %v94, %v147
  %v166 = vmul.f32 %v95, %v147
  %v167 = vmul.f32 %v96, %v147
  %v168 = vmul.f32 %v97, %v147
  %v169 = vmul.f32 %v98, %v147
  %v170 = vmul.f32 %v99, %v147
  %v171 = vmul.f32 %v100, %v147
  %v172 = vmul.f32 %v101, %v147
  %v173 = vmul.f32 %v102, %v147
  %v174 = vmul.f32 %v103, %v147
  %v175 = vmul.f32 %v104, %v147
  %v176 = vmul.f32 %v105, %v147
  %v177 = vmul.f32 %v106, %v147
  %v178 = vmul.f32 %v107, %v147
  %v179 = vmul.f32 %v108, %v147
  %v180 = vmul.f32 %v109, %v147
  %v181 = vmul.f32 %v110, %v147
  %v182 = vmul.f32 %v111, %v147
  %v183 = vmul.f32 %v112, %v147
  %v184 = vmul.f32 %v113, %v147
  %v185 = vmul.f32 %v114, %v147
  %v186 = vmul.f32 %v115, %v147
  %v187 = vmul.f32 %v116, %v147
  %v188 = vmul.f32 %v117, %v147
  %v189 = vmul.f32 %v118, %v147
  %v190 = vmul.f32 %v119, %v147
  %v191 = vmul.f32 %v120, %v147
  %v192 = vmul.f32 %v121, %v147
  %v193 = vmul.f32 %v122, %v147
  %v194 = vmul.f32 %v123, %v147
  %v195 = vmul.f32 %v124, %v147
  %v196 = vmul.f32 %v125, %v147
  %v197 = vmul.f32 %v126, %v147
  %v198 = vmul.f32 %v127, %v147
  %v199 = vmul.f32 %v128, %v147
  %v200 = vmul.f32 %v129, %v147
  %v201 = vmul.f32 %v130, %v147
  %v202 = vmul.f32 %v131, %v147
  %v203 = vmul.f32 %v132, %v147
  %v204 = vmul.f32 %v133, %v147
  %v205 = vmul.f32 %v134, %v147
  %v206 = vmul.f32 %v135, %v147
  %v207 = vmul.f32 %v136, %v147
  %v208 = vmul.f32 %v137, %v147
  %v209 = vmul.f32 %v138, %v147
  %v210 = vmul.f32 %v139, %v147
  %v211 = vmul.f32 %v140, %v147
  %v212 = vmul.f32 %v141, %v147
  %v213 = vld [vmem:[%s2] sm:$0x1]
  %v215 = vlaneseq
  %v216 = vshrl.u32 %v215, 7
  %v217 = vsub.s32 0, %v216
  %v218 = vrot.slane %v213, %v217
  %v220 = vadd.f32 %v149, %v218
  %v221 = vadd.f32 %v150, %v218
  %v222 = vadd.f32 %v151, %v218
  %v223 = vadd.f32 %v152, %v218
  %v224 = vadd.f32 %v153, %v218
  %v225 = vadd.f32 %v154, %v218
  %v226 = vadd.f32 %v155, %v218
  %v227 = vadd.f32 %v156, %v218
  %v228 = vadd.f32 %v157, %v218
  %v229 = vadd.f32 %v158, %v218
  %v230 = vadd.f32 %v159, %v218
  %v231 = vadd.f32 %v160, %v218
  %v232 = vadd.f32 %v161, %v218
  %v233 = vadd.f32 %v162, %v218
  %v234 = vadd.f32 %v163, %v218
  %v235 = vadd.f32 %v164, %v218
  %v236 = vadd.f32 %v165, %v218
  %v237 = vadd.f32 %v166, %v218
  %v238 = vadd.f32 %v167, %v218
  %v239 = vadd.f32 %v168, %v218
  %v240 = vadd.f32 %v169, %v218
  %v241 = vadd.f32 %v170, %v218
  %v242 = vadd.f32 %v171, %v218
  %v243 = vadd.f32 %v172, %v218
  %v244 = vadd.f32 %v173, %v218
  %v245 = vadd.f32 %v174, %v218
  %v246 = vadd.f32 %v175, %v218
  %v247 = vadd.f32 %v176, %v218
  %v248 = vadd.f32 %v177, %v218
  %v249 = vadd.f32 %v178, %v218
  %v250 = vadd.f32 %v179, %v218
  %v251 = vadd.f32 %v180, %v218
  %v252 = vadd.f32 %v181, %v218
  %v253 = vadd.f32 %v182, %v218
  %v254 = vadd.f32 %v183, %v218
  %v255 = vadd.f32 %v184, %v218
  %v256 = vadd.f32 %v185, %v218
  %v257 = vadd.f32 %v186, %v218
  %v258 = vadd.f32 %v187, %v218
  %v259 = vadd.f32 %v188, %v218
  %v260 = vadd.f32 %v189, %v218
  %v261 = vadd.f32 %v190, %v218
  %v262 = vadd.f32 %v191, %v218
  %v263 = vadd.f32 %v192, %v218
  %v264 = vadd.f32 %v193, %v218
  %v265 = vadd.f32 %v194, %v218
  %v266 = vadd.f32 %v195, %v218
  %v267 = vadd.f32 %v196, %v218
  %v268 = vadd.f32 %v197, %v218
  %v269 = vadd.f32 %v198, %v218
  %v270 = vadd.f32 %v199, %v218
  %v271 = vadd.f32 %v200, %v218
  %v272 = vadd.f32 %v201, %v218
  %v273 = vadd.f32 %v202, %v218
  %v274 = vadd.f32 %v203, %v218
  %v275 = vadd.f32 %v204, %v218
  %v276 = vadd.f32 %v205, %v218
  %v277 = vadd.f32 %v206, %v218
  %v278 = vadd.f32 %v207, %v218
  %v279 = vadd.f32 %v208, %v218
  %v280 = vadd.f32 %v209, %v218
  %v281 = vadd.f32 %v210, %v218
  %v282 = vadd.f32 %v211, %v218
  %v283 = vadd.f32 %v212, %v218
  %v284 = vmax.f32 %v220, 0.0
  %v285 = vmax.f32 %v221, 0.0
  %v286 = vmax.f32 %v222, 0.0
  %v287 = vmax.f32 %v223, 0.0
  %v288 = vmax.f32 %v224, 0.0
  %v289 = vmax.f32 %v225, 0.0
  %v290 = vmax.f32 %v226, 0.0
  %v291 = vmax.f32 %v227, 0.0
  %v292 = vmax.f32 %v228, 0.0
  %v293 = vmax.f32 %v229, 0.0
  %v294 = vmax.f32 %v230, 0.0
  %v295 = vmax.f32 %v231, 0.0
  %v296 = vmax.f32 %v232, 0.0
  %v297 = vmax.f32 %v233, 0.0
  %v298 = vmax.f32 %v234, 0.0
  %v299 = vmax.f32 %v235, 0.0
  %v300 = vmax.f32 %v236, 0.0
  %v301 = vmax.f32 %v237, 0.0
  %v302 = vmax.f32 %v238, 0.0
  %v303 = vmax.f32 %v239, 0.0
  %v304 = vmax.f32 %v240, 0.0
  %v305 = vmax.f32 %v241, 0.0
  %v306 = vmax.f32 %v242, 0.0
  %v307 = vmax.f32 %v243, 0.0
  %v308 = vmax.f32 %v244, 0.0
  %v309 = vmax.f32 %v245, 0.0
  %v310 = vmax.f32 %v246, 0.0
  %v311 = vmax.f32 %v247, 0.0
  %v312 = vmax.f32 %v248, 0.0
  %v313 = vmax.f32 %v249, 0.0
  %v314 = vmax.f32 %v250, 0.0
  %v315 = vmax.f32 %v251, 0.0
  %v316 = vmax.f32 %v252, 0.0
  %v317 = vmax.f32 %v253, 0.0
  %v318 = vmax.f32 %v254, 0.0
  %v319 = vmax.f32 %v255, 0.0
  %v320 = vmax.f32 %v256, 0.0
  %v321 = vmax.f32 %v257, 0.0
  %v322 = vmax.f32 %v258, 0.0
  %v323 = vmax.f32 %v259, 0.0
  %v324 = vmax.f32 %v260, 0.0
  %v325 = vmax.f32 %v261, 0.0
  %v326 = vmax.f32 %v262, 0.0
  %v327 = vmax.f32 %v263, 0.0
  %v328 = vmax.f32 %v264, 0.0
  %v329 = vmax.f32 %v265, 0.0
  %v330 = vmax.f32 %v266, 0.0
  %v331 = vmax.f32 %v267, 0.0
  %v332 = vmax.f32 %v268, 0.0
  %v333 = vmax.f32 %v269, 0.0
  %v334 = vmax.f32 %v270, 0.0
  %v335 = vmax.f32 %v271, 0.0
  %v336 = vmax.f32 %v272, 0.0
  %v337 = vmax.f32 %v273, 0.0
  %v338 = vmax.f32 %v274, 0.0
  %v339 = vmax.f32 %v275, 0.0
  %v340 = vmax.f32 %v276, 0.0
  %v341 = vmax.f32 %v277, 0.0
  %v342 = vmax.f32 %v278, 0.0
  %v343 = vmax.f32 %v279, 0.0
  %v344 = vmax.f32 %v280, 0.0
  %v345 = vmax.f32 %v281, 0.0
  %v346 = vmax.f32 %v282, 0.0
  %v347 = vmax.f32 %v283, 0.0
  %v348 = vpack.c.bf16 %v285, %v284
  %v349 = vpack.c.bf16 %v287, %v286
  %v350 = vpack.c.bf16 %v289, %v288
  %v351 = vpack.c.bf16 %v291, %v290
  %v352 = vpack.c.bf16 %v293, %v292
  %v353 = vpack.c.bf16 %v295, %v294
  %v354 = vpack.c.bf16 %v297, %v296
  %v355 = vpack.c.bf16 %v299, %v298
  %v356 = vpack.c.bf16 %v301, %v300
  %v357 = vpack.c.bf16 %v303, %v302
  %v358 = vpack.c.bf16 %v305, %v304
  %v359 = vpack.c.bf16 %v307, %v306
  %v360 = vpack.c.bf16 %v309, %v308
  %v361 = vpack.c.bf16 %v311, %v310
  %v362 = vpack.c.bf16 %v313, %v312
  %v363 = vpack.c.bf16 %v315, %v314
  %v364 = vpack.c.bf16 %v317, %v316
  %v365 = vpack.c.bf16 %v319, %v318
  %v366 = vpack.c.bf16 %v321, %v320
  %v367 = vpack.c.bf16 %v323, %v322
  %v368 = vpack.c.bf16 %v325, %v324
  %v369 = vpack.c.bf16 %v327, %v326
  %v370 = vpack.c.bf16 %v329, %v328
  %v371 = vpack.c.bf16 %v331, %v330
  %v372 = vpack.c.bf16 %v333, %v332
  %v373 = vpack.c.bf16 %v335, %v334
  %v374 = vpack.c.bf16 %v337, %v336
  %v375 = vpack.c.bf16 %v339, %v338
  %v376 = vpack.c.bf16 %v341, %v340
  %v377 = vpack.c.bf16 %v343, %v342
  %v378 = vpack.c.bf16 %v345, %v344
  %v379 = vpack.c.bf16 %v347, %v346
  %v412 = vunpack.c.l.b16 %v348
  %v413 = vunpack.c.h.b16 %v348
  %v414 = vunpack.c.l.b16 %v349
  %v415 = vunpack.c.h.b16 %v349
  %v416 = vunpack.c.l.b16 %v350
  %v417 = vunpack.c.h.b16 %v350
  %v418 = vunpack.c.l.b16 %v351
  %v419 = vunpack.c.h.b16 %v351
  %v420 = vunpack.c.l.b16 %v352
  %v421 = vunpack.c.h.b16 %v352
  %v422 = vunpack.c.l.b16 %v353
  %v423 = vunpack.c.h.b16 %v353
  %v424 = vunpack.c.l.b16 %v354
  %v425 = vunpack.c.h.b16 %v354
  %v426 = vunpack.c.l.b16 %v355
  %v427 = vunpack.c.h.b16 %v355
  %v428 = vunpack.c.l.b16 %v356
  %v429 = vunpack.c.h.b16 %v356
  %v430 = vunpack.c.l.b16 %v357
  %v431 = vunpack.c.h.b16 %v357
  %v432 = vunpack.c.l.b16 %v358
  %v433 = vunpack.c.h.b16 %v358
  %v434 = vunpack.c.l.b16 %v359
  %v435 = vunpack.c.h.b16 %v359
  %v436 = vunpack.c.l.b16 %v360
  %v437 = vunpack.c.h.b16 %v360
  %v438 = vunpack.c.l.b16 %v361
  %v439 = vunpack.c.h.b16 %v361
  %v440 = vunpack.c.l.b16 %v362
  %v441 = vunpack.c.h.b16 %v362
  %v442 = vunpack.c.l.b16 %v363
  %v443 = vunpack.c.h.b16 %v363
  %v444 = vunpack.c.l.b16 %v364
  %v445 = vunpack.c.h.b16 %v364
  %v446 = vunpack.c.l.b16 %v365
  %v447 = vunpack.c.h.b16 %v365
  %v448 = vunpack.c.l.b16 %v366
  %v449 = vunpack.c.h.b16 %v366
  %v450 = vunpack.c.l.b16 %v367
  %v451 = vunpack.c.h.b16 %v367
  %v452 = vunpack.c.l.b16 %v368
  %v453 = vunpack.c.h.b16 %v368
  %v454 = vunpack.c.l.b16 %v369
  %v455 = vunpack.c.h.b16 %v369
  %v456 = vunpack.c.l.b16 %v370
  %v457 = vunpack.c.h.b16 %v370
  %v458 = vunpack.c.l.b16 %v371
  %v459 = vunpack.c.h.b16 %v371
  %v460 = vunpack.c.l.b16 %v372
  %v461 = vunpack.c.h.b16 %v372
  %v462 = vunpack.c.l.b16 %v373
  %v463 = vunpack.c.h.b16 %v373
  %v464 = vunpack.c.l.b16 %v374
  %v465 = vunpack.c.h.b16 %v374
  %v466 = vunpack.c.l.b16 %v375
  %v467 = vunpack.c.h.b16 %v375
  %v468 = vunpack.c.l.b16 %v376
  %v469 = vunpack.c.h.b16 %v376
  %v470 = vunpack.c.l.b16 %v377
  %v471 = vunpack.c.h.b16 %v377
  %v472 = vunpack.c.l.b16 %v378
  %v473 = vunpack.c.h.b16 %v378
  %v474 = vunpack.c.l.b16 %v379
  %v475 = vunpack.c.h.b16 %v379
  %v476 = vpack.c.b16 %v412, %v412
  %v477 = vpack.c.b16 %v413, %v413
  %v478 = vpack.c.b16 %v414, %v414
  %v479 = vpack.c.b16 %v415, %v415
  %v480 = vpack.c.b16 %v416, %v416
  %v481 = vpack.c.b16 %v417, %v417
  %v482 = vpack.c.b16 %v418, %v418
  %v483 = vpack.c.b16 %v419, %v419
  %v484 = vpack.c.b16 %v420, %v420
  %v485 = vpack.c.b16 %v421, %v421
  %v486 = vpack.c.b16 %v422, %v422
  %v487 = vpack.c.b16 %v423, %v423
  %v488 = vpack.c.b16 %v424, %v424
  %v489 = vpack.c.b16 %v425, %v425
  %v490 = vpack.c.b16 %v426, %v426
  %v491 = vpack.c.b16 %v427, %v427
  %v492 = vpack.c.b16 %v428, %v428
  %v493 = vpack.c.b16 %v429, %v429
  %v494 = vpack.c.b16 %v430, %v430
  %v495 = vpack.c.b16 %v431, %v431
  %v496 = vpack.c.b16 %v432, %v432
  %v497 = vpack.c.b16 %v433, %v433
  %v498 = vpack.c.b16 %v434, %v434
  %v499 = vpack.c.b16 %v435, %v435
  %v500 = vpack.c.b16 %v436, %v436
  %v501 = vpack.c.b16 %v437, %v437
  %v502 = vpack.c.b16 %v438, %v438
  %v503 = vpack.c.b16 %v439, %v439
  %v504 = vpack.c.b16 %v440, %v440
  %v505 = vpack.c.b16 %v441, %v441
  %v506 = vpack.c.b16 %v442, %v442
  %v507 = vpack.c.b16 %v443, %v443
  %v508 = vpack.c.b16 %v444, %v444
  %v509 = vpack.c.b16 %v445, %v445
  %v510 = vpack.c.b16 %v446, %v446
  %v511 = vpack.c.b16 %v447, %v447
  %v512 = vpack.c.b16 %v448, %v448
  %v513 = vpack.c.b16 %v449, %v449
  %v514 = vpack.c.b16 %v450, %v450
  %v515 = vpack.c.b16 %v451, %v451
  %v516 = vpack.c.b16 %v452, %v452
  %v517 = vpack.c.b16 %v453, %v453
  %v518 = vpack.c.b16 %v454, %v454
  %v519 = vpack.c.b16 %v455, %v455
  %v520 = vpack.c.b16 %v456, %v456
  %v521 = vpack.c.b16 %v457, %v457
  %v522 = vpack.c.b16 %v458, %v458
  %v523 = vpack.c.b16 %v459, %v459
  %v524 = vpack.c.b16 %v460, %v460
  %v525 = vpack.c.b16 %v461, %v461
  %v526 = vpack.c.b16 %v462, %v462
  %v527 = vpack.c.b16 %v463, %v463
  %v528 = vpack.c.b16 %v464, %v464
  %v529 = vpack.c.b16 %v465, %v465
  %v530 = vpack.c.b16 %v466, %v466
  %v531 = vpack.c.b16 %v467, %v467
  %v532 = vpack.c.b16 %v468, %v468
  %v533 = vpack.c.b16 %v469, %v469
  %v534 = vpack.c.b16 %v470, %v470
  %v535 = vpack.c.b16 %v471, %v471
  %v536 = vpack.c.b16 %v472, %v472
  %v537 = vpack.c.b16 %v473, %v473
  %v538 = vpack.c.b16 %v474, %v474
  %v539 = vpack.c.b16 %v475, %v475
  %vm604 = vcmask 60416
  %605 = vst.msk [vmem:[%s3] sm:$0xf] %vm604, %v476
  %606 = vst.msk [vmem:[%s3 + $0x4] sm:$0xf] %vm604, %v477
  %607 = vst.msk [vmem:[%s3 + $0x8] sm:$0xf] %vm604, %v478
  %608 = vst.msk [vmem:[%s3 + $0xc] sm:$0xf] %vm604, %v479
  %609 = vst.msk [vmem:[%s3 + $0x10] sm:$0xf] %vm604, %v480
  %610 = vst.msk [vmem:[%s3 + $0x14] sm:$0xf] %vm604, %v481
  %611 = vst.msk [vmem:[%s3 + $0x18] sm:$0xf] %vm604, %v482
  %612 = vst.msk [vmem:[%s3 + $0x1c] sm:$0xf] %vm604, %v483
  %613 = vst.msk [vmem:[%s3 + $0x20] sm:$0xf] %vm604, %v484
  %614 = vst.msk [vmem:[%s3 + $0x24] sm:$0xf] %vm604, %v485
  %615 = vst.msk [vmem:[%s3 + $0x28] sm:$0xf] %vm604, %v486
  %616 = vst.msk [vmem:[%s3 + $0x2c] sm:$0xf] %vm604, %v487
  %617 = vst.msk [vmem:[%s3 + $0x30] sm:$0xf] %vm604, %v488
  %618 = vst.msk [vmem:[%s3 + $0x34] sm:$0xf] %vm604, %v489
  %619 = vst.msk [vmem:[%s3 + $0x38] sm:$0xf] %vm604, %v490
  %620 = vst.msk [vmem:[%s3 + $0x3c] sm:$0xf] %vm604, %v491
  %621 = vst.msk [vmem:[%s3 + $0x40] sm:$0xf] %vm604, %v492
  %622 = vst.msk [vmem:[%s3 + $0x44] sm:$0xf] %vm604, %v493
  %623 = vst.msk [vmem:[%s3 + $0x48] sm:$0xf] %vm604, %v494
  %624 = vst.msk [vmem:[%s3 + $0x4c] sm:$0xf] %vm604, %v495
  %625 = vst.msk [vmem:[%s3 + $0x50] sm:$0xf] %vm604, %v496
  %626 = vst.msk [vmem:[%s3 + $0x54] sm:$0xf] %vm604, %v497
  %627 = vst.msk [vmem:[%s3 + $0x58] sm:$0xf] %vm604, %v498
  %628 = vst.msk [vmem:[%s3 + $0x5c] sm:$0xf] %vm604, %v499
  %629 = vst.msk [vmem:[%s3 + $0x60] sm:$0xf] %vm604, %v500
  %630 = vst.msk [vmem:[%s3 + $0x64] sm:$0xf] %vm604, %v501
  %631 = vst.msk [vmem:[%s3 + $0x68] sm:$0xf] %vm604, %v502
  %632 = vst.msk [vmem:[%s3 + $0x6c] sm:$0xf] %vm604, %v503
  %633 = vst.msk [vmem:[%s3 + $0x70] sm:$0xf] %vm604, %v504
  %634 = vst.msk [vmem:[%s3 + $0x74] sm:$0xf] %vm604, %v505
  %635 = vst.msk [vmem:[%s3 + $0x78] sm:$0xf] %vm604, %v506
  %636 = vst.msk [vmem:[%s3 + $0x7c] sm:$0xf] %vm604, %v507
  %637 = vst.msk [vmem:[%s3 + $0x80] sm:$0xf] %vm604, %v508
  %638 = vst.msk [vmem:[%s3 + $0x84] sm:$0xf] %vm604, %v509
  %639 = vst.msk [vmem:[%s3 + $0x88] sm:$0xf] %vm604, %v510
  %640 = vst.msk [vmem:[%s3 + $0x8c] sm:$0xf] %vm604, %v511
  %641 = vst.msk [vmem:[%s3 + $0x90] sm:$0xf] %vm604, %v512
  %642 = vst.msk [vmem:[%s3 + $0x94] sm:$0xf] %vm604, %v513
  %643 = vst.msk [vmem:[%s3 + $0x98] sm:$0xf] %vm604, %v514
  %644 = vst.msk [vmem:[%s3 + $0x9c] sm:$0xf] %vm604, %v515
  %645 = vst.msk [vmem:[%s3 + $0xa0] sm:$0xf] %vm604, %v516
  %646 = vst.msk [vmem:[%s3 + $0xa4] sm:$0xf] %vm604, %v517
  %647 = vst.msk [vmem:[%s3 + $0xa8] sm:$0xf] %vm604, %v518
  %648 = vst.msk [vmem:[%s3 + $0xac] sm:$0xf] %vm604, %v519
  %649 = vst.msk [vmem:[%s3 + $0xb0] sm:$0xf] %vm604, %v520
  %650 = vst.msk [vmem:[%s3 + $0xb4] sm:$0xf] %vm604, %v521
  %651 = vst.msk [vmem:[%s3 + $0xb8] sm:$0xf] %vm604, %v522
  %652 = vst.msk [vmem:[%s3 + $0xbc] sm:$0xf] %vm604, %v523
  %653 = vst.msk [vmem:[%s3 + $0xc0] sm:$0xf] %vm604, %v524
  %654 = vst.msk [vmem:[%s3 + $0xc4] sm:$0xf] %vm604, %v525
  %655 = vst.msk [vmem:[%s3 + $0xc8] sm:$0xf] %vm604, %v526
  %656 = vst.msk [vmem:[%s3 + $0xcc] sm:$0xf] %vm604, %v527
  %657 = vst.msk [vmem:[%s3 + $0xd0] sm:$0xf] %vm604, %v528
  %658 = vst.msk [vmem:[%s3 + $0xd4] sm:$0xf] %vm604, %v529
  %659 = vst.msk [vmem:[%s3 + $0xd8] sm:$0xf] %vm604, %v530
  %660 = vst.msk [vmem:[%s3 + $0xdc] sm:$0xf] %vm604, %v531
  %661 = vst.msk [vmem:[%s3 + $0xe0] sm:$0xf] %vm604, %v532
  %662 = vst.msk [vmem:[%s3 + $0xe4] sm:$0xf] %vm604, %v533
  %663 = vst.msk [vmem:[%s3 + $0xe8] sm:$0xf] %vm604, %v534
  %664 = vst.msk [vmem:[%s3 + $0xec] sm:$0xf] %vm604, %v535
  %665 = vst.msk [vmem:[%s3 + $0xf0] sm:$0xf] %vm604, %v536
  %666 = vst.msk [vmem:[%s3 + $0xf4] sm:$0xf] %vm604, %v537
  %667 = vst.msk [vmem:[%s3 + $0xf8] sm:$0xf] %vm604, %v538
  %668 = vst.msk [vmem:[%s3 + $0xfc] sm:$0xf] %vm604, %v539
  // Predicated region
  $region14: #{generator_forward.52} parent=0 // pred_check
    _
  $region15: #{generator_forward.52} parent=0 // pred_check_branch
    %670 = sbr.rel (0) target = $region17
  $region16: #{generator_forward.52} parent=0 // pred_region
    _
  $region17: #{generator_forward.52} parent=0 // pred_fallthru
    _
  // Predicated region
  $region18: #{generator_forward.52} parent=0 // pred_check
    _
  $region19: #{generator_forward.52} parent=0 // pred_check_branch
    %672 = sbr.rel (0) target = $region21
  $region20: #{generator_forward.52} parent=0 // pred_region
    _
  $region21: #{generator_forward.52} parent=0 // pred_fallthru
    _

// kernel: generator_forward.56
$region0: #{generator_forward.56}
  #allocation0 [shape = 'u32[]', space=smem, size = 0x4, offset = 0x4, fixed_abs, tag = 'smem constant byte address 0x4 - core index']
  #allocation1 [shape = 'u32[144,128]{1,0:T(1,128)}', space=vmem, size = 0x12000, scoped, tag = 'internal scratch']
  %s0 = inlined_call_operand.vmem [shape: bf16[2048,32], index: 0, kind: input, shape index: {}]
  %s1 = inlined_call_operand.vmem [shape: bf16[32,3], index: 1, kind: input, shape index: {}]
  %s2 = inlined_call_operand.vmem [shape: f32[2048,3], index: 2, kind: output, shape index: {}]
  %s3 = sld [smem:[#allocation0]]
  $region41: #{generator_forward.56} parent=0
    _
  %s5 = ssub.s32 1, %s3
  %s6 = scalar_select 0, %s5, %s3
  loop: start=0, step=1, limit=6
  $region2: #{generator_forward.56} parent=0 // loop_pre_header
    _
  $region3: #{generator_forward.56} parent=0 // loop_header
    %s8 = sphi 0, %s12
    %p9 = scmp.ge.s32.totalorder %s8, 6
    %s15 = sphi 0, %s27
    %s16 = sphi 0, %s23
    %s17 = sphi 0, %s15
    %s18 = sphi 0, %s16
    %s19 = sphi 0, %s17
    %s20 = sphi 0, %s18
    %s30 = sphi 0, %s32
    %s33 = sphi 0, %s30
    %s34 = sphi 0, %s33
    %s50 = sphi 0, %s34
    %s56 = sphi 0, %s58
    %s59 = sphi 0, %s56
    %s60 = sphi 0, %s59
    %s76 = sphi 0, %s60
    %s84 = sphi 0, %s86
    %s87 = sphi 0, %s84
    %s88 = sphi 0, %s87
    %s104 = sphi 0, %s88
  $region4: #{generator_forward.56} parent=0 // loop_header_branch
    %11 = sbr.rel (%p9) target = $region8
  $region5: #{generator_forward.56} parent=0 // loop_body
    %s13 = ssub.s32 %s8, 1
    %s14 = ssub.s32 %s8, 2
    %s21 = sadd.s32 1, %s16
    %p22 = scmp.ge.s32.totalorder %s21, 1
    %s23 = scalar_select %p22, 0, %s21
    %s24 = sadd.s32 1, %s15
    %s25 = scalar_select %p22, %s24, %s15
    %p26 = scmp.ge.s32.totalorder %s25, 4
    %s27 = scalar_select %p26, 0, %s25
    %s28 = ssub.s32 %s15, %s27
    %p29 = scmp.eq.s32.totalorder %s28, 0
    %s31 = sadd.s32 %s30, 1
    %s32 = scalar_select %p29, %s30, %s31
    %p35 = pneg %p29
    %p36 = scmp.eq.s32.totalorder %s8, 3
    %p37 = por %p35, %p36
    %p38 = scmp.ne.s32.totalorder %s30, %s33
    %p39 = scmp.eq.s32.totalorder %s8, 0
    %p40 = por %p38, %p39
    %p41 = scmp.ne.s32.totalorder %s30, %s33
    %p42 = scmp.eq.s32.totalorder %s13, 3
    %p43 = por %p41, %p42
    %p44 = scmp.ne.s32.totalorder %s33, %s34
    %p45 = scmp.eq.s32.totalorder %s13, 0
    %p46 = por %p44, %p45
    %p47 = scmp.ne.s32.totalorder %s33, %s34
    %p48 = scmp.eq.s32.totalorder %s14, 3
    %p49 = por %p47, %p48
    %p51 = scmp.ne.s32.totalorder %s34, %s50
    %p52 = scmp.eq.s32.totalorder %s14, 0
    %p53 = por %p51, %p52
    %s54 = ssub.s32 %s16, %s23
    %p55 = scmp.eq.s32.totalorder %s54, 0
    %s57 = sadd.s32 %s56, 1
    %s58 = scalar_select %p55, %s56, %s57
    %p61 = pneg %p55
    %p62 = scmp.eq.s32.totalorder %s8, 3
    %p63 = por %p61, %p62
    %p64 = scmp.ne.s32.totalorder %s56, %s59
    %p65 = scmp.eq.s32.totalorder %s8, 0
    %p66 = por %p64, %p65
    %p67 = scmp.ne.s32.totalorder %s56, %s59
    %p68 = scmp.eq.s32.totalorder %s13, 3
    %p69 = por %p67, %p68
    %p70 = scmp.ne.s32.totalorder %s59, %s60
    %p71 = scmp.eq.s32.totalorder %s13, 0
    %p72 = por %p70, %p71
    %p73 = scmp.ne.s32.totalorder %s59, %s60
    %p74 = scmp.eq.s32.totalorder %s14, 3
    %p75 = por %p73, %p74
    %p77 = scmp.ne.s32.totalorder %s60, %s76
    %p78 = scmp.eq.s32.totalorder %s14, 0
    %p79 = por %p77, %p78
    %s80 = ssub.s32 %s15, %s27
    %s81 = ssub.s32 %s16, %s23
    %s82 = sor.u32 %s80, %s81
    %p83 = scmp.eq.s32.totalorder %s82, 0
    %s85 = sadd.s32 %s84, 1
    %s86 = scalar_select %p83, %s84, %s85
    %p89 = pneg %p83
    %p90 = scmp.eq.s32.totalorder %s8, 3
    %p91 = por %p89, %p90
    %p92 = scmp.ne.s32.totalorder %s84, %s87
    %p93 = scmp.eq.s32.totalorder %s8, 0
    %p94 = por %p92, %p93
    %p95 = scmp.ne.s32.totalorder %s84, %s87
    %p96 = scmp.eq.s32.totalorder %s13, 3
    %p97 = por %p95, %p96
    %p98 = scmp.ne.s32.totalorder %s87, %s88
    %p99 = scmp.eq.s32.totalorder %s13, 0
    %p100 = por %p98, %p99
    %p101 = scmp.ne.s32.totalorder %s87, %s88
    %p102 = scmp.eq.s32.totalorder %s14, 3
    %p103 = por %p101, %p102
    %p105 = scmp.ne.s32.totalorder %s88, %s104
    %p106 = scmp.eq.s32.totalorder %s14, 0
    %p107 = por %p105, %p106
    %p108 = scmp.le.s32.totalorder 1, %s8
    %p109 = scmp.lt.s32.totalorder %s8, 5
    %p110 = pnand %p108, %p109
    %p111 = pneg %p110
    // Predicated region
    $region9: #{generator_forward.56} parent=5 // pred_check
      _
    $region10: #{generator_forward.56} parent=5 // pred_check_branch
      %113 = sbr.rel (%p110) target = $region12
    $region11: #{generator_forward.56} parent=5 // pred_region
      %s114 = ssub.s32 %s8, 1
      // Predicated region
      $region13: #{generator_forward.56} parent=11 // pred_check
        %p115 = pneg %p72
      $region14: #{generator_forward.56} parent=11 // pred_check_branch
        %117 = sbr.rel (%p115) target = $region16
      $region15: #{generator_forward.56} parent=11 // pred_region
        %p118 = scmp.lt.s32.totalorder %s18, 0
        %s119 = scalar_select %p118, %s18, 0
        %s120 = smul.addr %s119, 4
        %s121 = scalar_lea.vmem %s1, %s120
      $region16: #{generator_forward.56} parent=11 // pred_fallthru
        _
    $region12: #{generator_forward.56} parent=5 // pred_fallthru
      _
    %p122 = scmp.lt.s32.totalorder %s8, 4
    // Predicated region
    $region17: #{generator_forward.56} parent=5 // pred_check
      %p123 = pneg %p122
    $region18: #{generator_forward.56} parent=5 // pred_check_branch
      %125 = sbr.rel (%p123) target = $region20
    $region19: #{generator_forward.56} parent=5 // pred_region
      // Predicated region
      $region21: #{generator_forward.56} parent=19 // pred_check
        %p126 = pneg %p40
      $region22: #{generator_forward.56} parent=19 // pred_check_branch
        %128 = sbr.rel (%p126) target = $region24
      $region23: #{generator_forward.56} parent=19 // pred_region
        %s129 = smul.u32 64, %s15
        %p130 = scmp.lt.s32.totalorder %s129, 255
        %s131 = scalar_select %p130, %s129, 255
        %s132 = smul.addr %s131, 4
        %s133 = scalar_lea.vmem %s0, %s132
        %s134 = smul.u32 64, %s15
      $region24: #{generator_forward.56} parent=19 // pred_fallthru
        _
    $region20: #{generator_forward.56} parent=5 // pred_fallthru
      _
    %p135 = scmp.le.s32.totalorder 1, %s8
    %p136 = scmp.lt.s32.totalorder %s8, 5
    %p137 = pnand %p135, %p136
    %p138 = pneg %p137
    // Predicated region
    $region25: #{generator_forward.56} parent=5 // pred_check
      _
    $region26: #{generator_forward.56} parent=5 // pred_check_branch
      %140 = sbr.rel (%p137) target = $region28
    $region27: #{generator_forward.56} parent=5 // pred_region
      %s141 = ssub.s32 %s8, 1
      %s142 = smul.u32 64, %s17
      %p143 = scmp.lt.s32.totalorder %s142, 255
      %s144 = scalar_select %p143, %s142, 255
      %s145 = smul.addr %s144, 4
      %s146 = scalar_lea.vmem %s0, %s145
      %p147 = pneg %p46
      %p148 = pneg %p43
      %p149 = scmp.lt.s32.totalorder %s18, 0
      %s150 = scalar_select %p149, %s18, 0
      %s151 = smul.addr %s150, 4
      %s152 = scalar_lea.vmem %s1, %s151
      %p153 = pneg %p72
      %p154 = pneg %p69
      %p155 = pneg %p100
      %p156 = pneg %p97
      %s157 = smul.u32 64, %s17
      %p158 = scmp.lt.s32.totalorder %s157, 255
      %s159 = scalar_select %p158, %s157, 255
      %p160 = scmp.lt.s32.totalorder %s18, 0
      %s161 = scalar_select %p160, %s18, 0
      %s162 = sadd.s32 %s161, %s159
      %s163 = smul.addr %s162, 8
      %s164 = scalar_lea.vmem %s2, %s163
      %s165 = smul.u32 64, %s17
      %p166 = scmp.lt.s32.totalorder %s165, 255
      %s167 = scalar_select %p166, %s165, 255
      %s168 = smul.addr %s167, 4
      %s169 = scalar_lea.vmem %s0, %s168
      %s170 = smul.u32 64, %s17
      %p171 = scmp.lt.s32.totalorder %s18, 0
      %s172 = scalar_select %p171, %s18, 0
      %s173 = smul.addr %s172, 4
      %s174 = scalar_lea.vmem %s1, %s173
      %s175 = smul.u32 64, %s17
      %p176 = scmp.lt.s32.totalorder %s175, 255
      %s177 = scalar_select %p176, %s175, 255
      %p178 = scmp.lt.s32.totalorder %s18, 0
      %s179 = scalar_select %p178, %s18, 0
      %s180 = sadd.s32 %s179, %s177
      %s181 = smul.addr %s180, 8
      %s182 = scalar_lea.vmem %s2, %s181
      %s183 = smul.u32 64, %s17
      %v185 = vld [vmem:[%s169] sm:$0xf]
      %v186 = vld [vmem:[%s169 + $0x4] sm:$0xf]
      %v187 = vld [vmem:[%s169 + $0x8] sm:$0xf]
      %v188 = vld [vmem:[%s169 + $0xc] sm:$0xf]
      %v189 = vld [vmem:[%s169 + $0x10] sm:$0xf]
      %v190 = vld [vmem:[%s169 + $0x14] sm:$0xf]
      %v191 = vld [vmem:[%s169 + $0x18] sm:$0xf]
      %v192 = vld [vmem:[%s169 + $0x1c] sm:$0xf]
      %v193 = vld [vmem:[%s169 + $0x20] sm:$0xf]
      %v194 = vld [vmem:[%s169 + $0x24] sm:$0xf]
      %v195 = vld [vmem:[%s169 + $0x28] sm:$0xf]
      %v196 = vld [vmem:[%s169 + $0x2c] sm:$0xf]
      %v197 = vld [vmem:[%s169 + $0x30] sm:$0xf]
      %v198 = vld [vmem:[%s169 + $0x34] sm:$0xf]
      %v199 = vld [vmem:[%s169 + $0x38] sm:$0xf]
      %v200 = vld [vmem:[%s169 + $0x3c] sm:$0xf]
      %v201 = vld [vmem:[%s169 + $0x40] sm:$0xf]
      %v202 = vld [vmem:[%s169 + $0x44] sm:$0xf]
      %v203 = vld [vmem:[%s169 + $0x48] sm:$0xf]
      %v204 = vld [vmem:[%s169 + $0x4c] sm:$0xf]
      %v205 = vld [vmem:[%s169 + $0x50] sm:$0xf]
      %v206 = vld [vmem:[%s169 + $0x54] sm:$0xf]
      %v207 = vld [vmem:[%s169 + $0x58] sm:$0xf]
      %v208 = vld [vmem:[%s169 + $0x5c] sm:$0xf]
      %v209 = vld [vmem:[%s169 + $0x60] sm:$0xf]
      %v210 = vld [vmem:[%s169 + $0x64] sm:$0xf]
      %v211 = vld [vmem:[%s169 + $0x68] sm:$0xf]
      %v212 = vld [vmem:[%s169 + $0x6c] sm:$0xf]
      %v213 = vld [vmem:[%s169 + $0x70] sm:$0xf]
      %v214 = vld [vmem:[%s169 + $0x74] sm:$0xf]
      %v215 = vld [vmem:[%s169 + $0x78] sm:$0xf]
      %v216 = vld [vmem:[%s169 + $0x7c] sm:$0xf]
      %v217 = vld [vmem:[%s169 + $0x80] sm:$0xf]
      %v218 = vld [vmem:[%s169 + $0x84] sm:$0xf]
      %v219 = vld [vmem:[%s169 + $0x88] sm:$0xf]
      %v220 = vld [vmem:[%s169 + $0x8c] sm:$0xf]
      %v221 = vld [vmem:[%s169 + $0x90] sm:$0xf]
      %v222 = vld [vmem:[%s169 + $0x94] sm:$0xf]
      %v223 = vld [vmem:[%s169 + $0x98] sm:$0xf]
      %v224 = vld [vmem:[%s169 + $0x9c] sm:$0xf]
      %v225 = vld [vmem:[%s169 + $0xa0] sm:$0xf]
      %v226 = vld [vmem:[%s169 + $0xa4] sm:$0xf]
      %v227 = vld [vmem:[%s169 + $0xa8] sm:$0xf]
      %v228 = vld [vmem:[%s169 + $0xac] sm:$0xf]
      %v229 = vld [vmem:[%s169 + $0xb0] sm:$0xf]
      %v230 = vld [vmem:[%s169 + $0xb4] sm:$0xf]
      %v231 = vld [vmem:[%s169 + $0xb8] sm:$0xf]
      %v232 = vld [vmem:[%s169 + $0xbc] sm:$0xf]
      %v233 = vld [vmem:[%s169 + $0xc0] sm:$0xf]
      %v234 = vld [vmem:[%s169 + $0xc4] sm:$0xf]
      %v235 = vld [vmem:[%s169 + $0xc8] sm:$0xf]
      %v236 = vld [vmem:[%s169 + $0xcc] sm:$0xf]
      %v237 = vld [vmem:[%s169 + $0xd0] sm:$0xf]
      %v238 = vld [vmem:[%s169 + $0xd4] sm:$0xf]
      %v239 = vld [vmem:[%s169 + $0xd8] sm:$0xf]
      %v240 = vld [vmem:[%s169 + $0xdc] sm:$0xf]
      %v241 = vld [vmem:[%s169 + $0xe0] sm:$0xf]
      %v242 = vld [vmem:[%s169 + $0xe4] sm:$0xf]
      %v243 = vld [vmem:[%s169 + $0xe8] sm:$0xf]
      %v244 = vld [vmem:[%s169 + $0xec] sm:$0xf]
      %v245 = vld [vmem:[%s169 + $0xf0] sm:$0xf]
      %v246 = vld [vmem:[%s169 + $0xf4] sm:$0xf]
      %v247 = vld [vmem:[%s169 + $0xf8] sm:$0xf]
      %v248 = vld [vmem:[%s169 + $0xfc] sm:$0xf]
      %v249 = vld [vmem:[%s174] sm:$0xf]
      %v250 = vld [vmem:[%s174 + $0x4] sm:$0xf]
      %v251 = vld [vmem:[%s174 + $0x8] sm:$0xf]
      %v252 = vld [vmem:[%s174 + $0xc] sm:$0xf]
      %v317 = vunpack.c.l.b16 %v185
      %v318 = vunpack.c.l.b16 %v186
      %v319 = vunpack.c.l.b16 %v187
      %v320 = vunpack.c.l.b16 %v188
      %v321 = vunpack.c.l.b16 %v189
      %v322 = vunpack.c.l.b16 %v190
      %v323 = vunpack.c.l.b16 %v191
      %v324 = vunpack.c.l.b16 %v192
      %v325 = vunpack.c.l.b16 %v193
      %v326 = vunpack.c.l.b16 %v194
      %v327 = vunpack.c.l.b16 %v195
      %v328 = vunpack.c.l.b16 %v196
      %v329 = vunpack.c.l.b16 %v197
      %v330 = vunpack.c.l.b16 %v198
      %v331 = vunpack.c.l.b16 %v199
      %v332 = vunpack.c.l.b16 %v200
      %v333 = vunpack.c.l.b16 %v201
      %v334 = vunpack.c.l.b16 %v202
      %v335 = vunpack.c.l.b16 %v203
      %v336 = vunpack.c.l.b16 %v204
      %v337 = vunpack.c.l.b16 %v205
      %v338 = vunpack.c.l.b16 %v206
      %v339 = vunpack.c.l.b16 %v207
      %v340 = vunpack.c.l.b16 %v208
      %v341 = vunpack.c.l.b16 %v209
      %v342 = vunpack.c.l.b16 %v210
      %v343 = vunpack.c.l.b16 %v211
      %v344 = vunpack.c.l.b16 %v212
      %v345 = vunpack.c.l.b16 %v213
      %v346 = vunpack.c.l.b16 %v214
      %v347 = vunpack.c.l.b16 %v215
      %v348 = vunpack.c.l.b16 %v216
      %v349 = vunpack.c.l.b16 %v217
      %v350 = vunpack.c.l.b16 %v218
      %v351 = vunpack.c.l.b16 %v219
      %v352 = vunpack.c.l.b16 %v220
      %v353 = vunpack.c.l.b16 %v221
      %v354 = vunpack.c.l.b16 %v222
      %v355 = vunpack.c.l.b16 %v223
      %v356 = vunpack.c.l.b16 %v224
      %v357 = vunpack.c.l.b16 %v225
      %v358 = vunpack.c.l.b16 %v226
      %v359 = vunpack.c.l.b16 %v227
      %v360 = vunpack.c.l.b16 %v228
      %v361 = vunpack.c.l.b16 %v229
      %v362 = vunpack.c.l.b16 %v230
      %v363 = vunpack.c.l.b16 %v231
      %v364 = vunpack.c.l.b16 %v232
      %v365 = vunpack.c.l.b16 %v233
      %v366 = vunpack.c.l.b16 %v234
      %v367 = vunpack.c.l.b16 %v235
      %v368 = vunpack.c.l.b16 %v236
      %v369 = vunpack.c.l.b16 %v237
      %v370 = vunpack.c.l.b16 %v238
      %v371 = vunpack.c.l.b16 %v239
      %v372 = vunpack.c.l.b16 %v240
      %v373 = vunpack.c.l.b16 %v241
      %v374 = vunpack.c.l.b16 %v242
      %v375 = vunpack.c.l.b16 %v243
      %v376 = vunpack.c.l.b16 %v244
      %v377 = vunpack.c.l.b16 %v245
      %v378 = vunpack.c.l.b16 %v246
      %v379 = vunpack.c.l.b16 %v247
      %v380 = vunpack.c.l.b16 %v248
      %v381 = vpack.c.b16 %v318, %v317
      %v382 = vpack.c.b16 %v320, %v319
      %v383 = vpack.c.b16 %v322, %v321
      %v384 = vpack.c.b16 %v324, %v323
      %v385 = vpack.c.b16 %v326, %v325
      %v386 = vpack.c.b16 %v328, %v327
      %v387 = vpack.c.b16 %v330, %v329
      %v388 = vpack.c.b16 %v332, %v331
      %v389 = vpack.c.b16 %v334, %v333
      %v390 = vpack.c.b16 %v336, %v335
      %v391 = vpack.c.b16 %v338, %v337
      %v392 = vpack.c.b16 %v340, %v339
      %v393 = vpack.c.b16 %v342, %v341
      %v394 = vpack.c.b16 %v344, %v343
      %v395 = vpack.c.b16 %v346, %v345
      %v396 = vpack.c.b16 %v348, %v347
      %v397 = vpack.c.b16 %v350, %v349
      %v398 = vpack.c.b16 %v352, %v351
      %v399 = vpack.c.b16 %v354, %v353
      %v400 = vpack.c.b16 %v356, %v355
      %v401 = vpack.c.b16 %v358, %v357
      %v402 = vpack.c.b16 %v360, %v359
      %v403 = vpack.c.b16 %v362, %v361
      %v404 = vpack.c.b16 %v364, %v363
      %v405 = vpack.c.b16 %v366, %v365
      %v406 = vpack.c.b16 %v368, %v367
      %v407 = vpack.c.b16 %v370, %v369
      %v408 = vpack.c.b16 %v372, %v371
      %v409 = vpack.c.b16 %v374, %v373
      %v410 = vpack.c.b16 %v376, %v375
      %v411 = vpack.c.b16 %v378, %v377
      %v412 = vpack.c.b16 %v380, %v379
      %v417 = vunpack.c.l.b16 %v249
      %v418 = vunpack.c.l.b16 %v250
      %v419 = vunpack.c.l.b16 %v251
      %v420 = vunpack.c.l.b16 %v252
      %v421 = vpack.c.b16 %v418, %v417
      %v422 = vpack.c.b16 %v420, %v419
      %vm425 = vcmask 261120
      %v427 = vsel %vm425, %v381, 0
      %v430 = vsel %vm425, %v382, 0
      %v433 = vsel %vm425, %v383, 0
      %v436 = vsel %vm425, %v384, 0
      %v439 = vsel %vm425, %v385, 0
      %v442 = vsel %vm425, %v386, 0
      %v445 = vsel %vm425, %v387, 0
      %v448 = vsel %vm425, %v388, 0
      %v451 = vsel %vm425, %v389, 0
      %v454 = vsel %vm425, %v390, 0
      %v457 = vsel %vm425, %v391, 0
      %v460 = vsel %vm425, %v392, 0
      %v463 = vsel %vm425, %v393, 0
      %v466 = vsel %vm425, %v394, 0
      %v469 = vsel %vm425, %v395, 0
      %v472 = vsel %vm425, %v396, 0
      %v475 = vsel %vm425, %v397, 0
      %v478 = vsel %vm425, %v398, 0
      %v481 = vsel %vm425, %v399, 0
      %v484 = vsel %vm425, %v400, 0
      %v487 = vsel %vm425, %v401, 0
      %v490 = vsel %vm425, %v402, 0
      %v493 = vsel %vm425, %v403, 0
      %v496 = vsel %vm425, %v404, 0
      %v499 = vsel %vm425, %v405, 0
      %v502 = vsel %vm425, %v406, 0
      %v505 = vsel %vm425, %v407, 0
      %v508 = vsel %vm425, %v408, 0
      %v511 = vsel %vm425, %v409, 0
      %v514 = vsel %vm425, %v410, 0
      %v517 = vsel %vm425, %v411, 0
      %v520 = vsel %vm425, %v412, 0
      %522 = vmatprep.subr.bf16.mxu0 0
      %523 = vmatpush1.bf16.msra.mxu0 %v421
      %524 = vmatprep.subr.bf16.mxu0 0
      %525 = vmatpush1.bf16.msra.mxu0 %v422
      %526 = vmatprep.subr.bf16.mxu0 0
      %527 = vmatpush1.bf16.msra.mxu0 0
      %528 = vmatprep.subr.bf16.mxu0 0
      %529 = vmatpush1.bf16.msra.mxu0 0
      %530 = vmatprep.subr.bf16.mxu0 0
      %531 = vmatpush1.bf16.msra.mxu0 0
      %532 = vmatprep.subr.bf16.mxu0 0
      %533 = vmatpush1.bf16.msra.mxu0 0
      %534 = vmatprep.subr.bf16.mxu0 0
      %535 = vmatpush1.bf16.msra.mxu0 0
      %536 = vmatprep.subr.bf16.mxu0 0
      %537 = vmatpush1.bf16.msra.mxu0 0
      %538 = vmatprep.subr.bf16.mxu0 0
      %539 = vmatpush1.bf16.msra.mxu0 0
      %540 = vmatprep.subr.bf16.mxu0 0
      %541 = vmatpush1.bf16.msra.mxu0 0
      %542 = vmatprep.subr.bf16.mxu0 0
      %543 = vmatpush1.bf16.msra.mxu0 0
      %544 = vmatprep.subr.bf16.mxu0 0
      %545 = vmatpush1.bf16.msra.mxu0 0
      %546 = vmatprep.subr.bf16.mxu0 0
      %547 = vmatpush1.bf16.msra.mxu0 0
      %548 = vmatprep.subr.bf16.mxu0 0
      %549 = vmatpush1.bf16.msra.mxu0 0
      %550 = vmatprep.subr.bf16.mxu0 0
      %551 = vmatpush1.bf16.msra.mxu0 0
      %552 = vmatprep.subr.bf16.mxu0 0
      %553 = vmatpush1.bf16.msra.mxu0 0
      %554 = vmatprep.mubr.bf16.mxu0 0
      %555 = vmatmul.mubr.bf16.gmra.mrb[0].mxu0 %v427
      %v556 = vpop.f32.mrb[0].mxu0
      %v557 = vadd.f32 0.0, %v556
      %v558 = vpop.f32.mrb[0].mxu0
      %v559 = vpop.f32.mrb[0].mxu0
      %v560 = vadd.f32 0.0, %v559
      %v561 = vpop.f32.mrb[0].mxu0
      %562 = vmatprep.mubr.bf16.mxu0 0
      %563 = vmatmul.mubr.bf16.gmra.mrb[0].mxu0 %v430
      %v564 = vpop.f32.mrb[0].mxu0
      %v565 = vadd.f32 0.0, %v564
      %v566 = vpop.f32.mrb[0].mxu0
      %v567 = vpop.f32.mrb[0].mxu0
      %v568 = vadd.f32 0.0, %v567
      %v569 = vpop.f32.mrb[0].mxu0
      %570 = vmatprep.mubr.bf16.mxu0 0
      %571 = vmatmul.mubr.bf16.gmra.mrb[0].mxu0 %v433
      %v572 = vpop.f32.mrb[0].mxu0
      %v573 = vadd.f32 0.0, %v572
      %v574 = vpop.f32.mrb[0].mxu0
      %v575 = vpop.f32.mrb[0].mxu0
      %v576 = vadd.f32 0.0, %v575
      %v577 = vpop.f32.mrb[0].mxu0
      %578 = vmatprep.mubr.bf16.mxu0 0
      %579 = vmatmul.mubr.bf16.gmra.mrb[0].mxu0 %v436
      %v580 = vpop.f32.mrb[0].mxu0
      %v581 = vadd.f32 0.0, %v580
      %v582 = vpop.f32.mrb[0].mxu0
      %v583 = vpop.f32.mrb[0].mxu0
      %v584 = vadd.f32 0.0, %v583
      %v585 = vpop.f32.mrb[0].mxu0
      %586 = vmatprep.mubr.bf16.mxu0 0
      %587 = vmatmul.mubr.bf16.gmra.mrb[0].mxu0 %v439
      %v588 = vpop.f32.mrb[0].mxu0
      %v589 = vadd.f32 0.0, %v588
      %v590 = vpop.f32.mrb[0].mxu0
      %v591 = vpop.f32.mrb[0].mxu0
      %v592 = vadd.f32 0.0, %v591
      %v593 = vpop.f32.mrb[0].mxu0
      %594 = vmatprep.mubr.bf16.mxu0 0
      %595 = vmatmul.mubr.bf16.gmra.mrb[0].mxu0 %v442
      %v596 = vpop.f32.mrb[0].mxu0
      %v597 = vadd.f32 0.0, %v596
      %v598 = vpop.f32.mrb[0].mxu0
      %v599 = vpop.f32.mrb[0].mxu0
      %v600 = vadd.f32 0.0, %v599
      %v601 = vpop.f32.mrb[0].mxu0
      %602 = vmatprep.mubr.bf16.mxu0 0
      %603 = vmatmul.mubr.bf16.gmra.mrb[0].mxu0 %v445
      %v604 = vpop.f32.mrb[0].mxu0
      %v605 = vadd.f32 0.0, %v604
      %v606 = vpop.f32.mrb[0].mxu0
      %v607 = vpop.f32.mrb[0].mxu0
      %v608 = vadd.f32 0.0, %v607
      %v609 = vpop.f32.mrb[0].mxu0
      %610 = vmatprep.mubr.bf16.mxu0 0
      %611 = vmatmul.mubr.bf16.gmra.mrb[0].mxu0 %v448
      %v612 = vpop.f32.mrb[0].mxu0
      %v613 = vadd.f32 0.0, %v612
      %v614 = vpop.f32.mrb[0].mxu0
      %v615 = vpop.f32.mrb[0].mxu0
      %v616 = vadd.f32 0.0, %v615
      %v617 = vpop.f32.mrb[0].mxu0
      %618 = vmatprep.mubr.bf16.mxu0 0
      %619 = vmatmul.mubr.bf16.gmra.mrb[0].mxu0 %v451
      %v620 = vpop.f32.mrb[0].mxu0
      %v621 = vadd.f32 0.0, %v620
      %v622 = vpop.f32.mrb[0].mxu0
      %v623 = vpop.f32.mrb[0].mxu0
      %v624 = vadd.f32 0.0, %v623
      %v625 = vpop.f32.mrb[0].mxu0
      %626 = vmatprep.mubr.bf16.mxu0 0
      %627 = vmatmul.mubr.bf16.gmra.mrb[0].mxu0 %v454
      %v628 = vpop.f32.mrb[0].mxu0
      %v629 = vadd.f32 0.0, %v628
      %v630 = vpop.f32.mrb[0].mxu0
      %v631 = vpop.f32.mrb[0].mxu0
      %v632 = vadd.f32 0.0, %v631
      %v633 = vpop.f32.mrb[0].mxu0
      %634 = vmatprep.mubr.bf16.mxu0 0
      %635 = vmatmul.mubr.bf16.gmra.mrb[0].mxu0 %v457
      %v636 = vpop.f32.mrb[0].mxu0
      %v637 = vadd.f32 0.0, %v636
      %v638 = vpop.f32.mrb[0].mxu0
      %v639 = vpop.f32.mrb[0].mxu0
      %v640 = vadd.f32 0.0, %v639
      %v641 = vpop.f32.mrb[0].mxu0
      %642 = vmatprep.mubr.bf16.mxu0 0
      %643 = vmatmul.mubr.bf16.gmra.mrb[0].mxu0 %v460
      %v644 = vpop.f32.mrb[0].mxu0
      %v645 = vadd.f32 0.0, %v644
      %v646 = vpop.f32.mrb[0].mxu0
      %v647 = vpop.f32.mrb[0].mxu0
      %v648 = vadd.f32 0.0, %v647
      %v649 = vpop.f32.mrb[0].mxu0
      %650 = vmatprep.mubr.bf16.mxu0 0
      %651 = vmatmul.mubr.bf16.gmra.mrb[0].mxu0 %v463
      %v652 = vpop.f32.mrb[0].mxu0
      %v653 = vadd.f32 0.0, %v652
      %v654 = vpop.f32.mrb[0].mxu0
      %v655 = vpop.f32.mrb[0].mxu0
      %v656 = vadd.f32 0.0, %v655
      %v657 = vpop.f32.mrb[0].mxu0
      %658 = vmatprep.mubr.bf16.mxu0 0
      %659 = vmatmul.mubr.bf16.gmra.mrb[0].mxu0 %v466
      %v660 = vpop.f32.mrb[0].mxu0
      %v661 = vadd.f32 0.0, %v660
      %v662 = vpop.f32.mrb[0].mxu0
      %v663 = vpop.f32.mrb[0].mxu0
      %v664 = vadd.f32 0.0, %v663
      %v665 = vpop.f32.mrb[0].mxu0
      %666 = vmatprep.mubr.bf16.mxu0 0
      %667 = vmatmul.mubr.bf16.gmra.mrb[0].mxu0 %v469
      %v668 = vpop.f32.mrb[0].mxu0
      %v669 = vadd.f32 0.0, %v668
      %v670 = vpop.f32.mrb[0].mxu0
      %v671 = vpop.f32.mrb[0].mxu0
      %v672 = vadd.f32 0.0, %v671
      %v673 = vpop.f32.mrb[0].mxu0
      %674 = vmatprep.mubr.bf16.mxu0 0
      %675 = vmatmul.mubr.bf16.gmra.mrb[0].mxu0 %v472
      %v676 = vpop.f32.mrb[0].mxu0
      %v677 = vadd.f32 0.0, %v676
      %v678 = vpop.f32.mrb[0].mxu0
      %v679 = vpop.f32.mrb[0].mxu0
      %v680 = vadd.f32 0.0, %v679
      %v681 = vpop.f32.mrb[0].mxu0
      %682 = vmatprep.mubr.bf16.mxu0 0
      %683 = vmatmul.mubr.bf16.gmra.mrb[0].mxu0 %v475
      %v684 = vpop.f32.mrb[0].mxu0
      %v685 = vadd.f32 0.0, %v684
      %v686 = vpop.f32.mrb[0].mxu0
      %v687 = vpop.f32.mrb[0].mxu0
      %v688 = vadd.f32 0.0, %v687
      %v689 = vpop.f32.mrb[0].mxu0
      %690 = vmatprep.mubr.bf16.mxu0 0
      %691 = vmatmul.mubr.bf16.gmra.mrb[0].mxu0 %v478
      %v692 = vpop.f32.mrb[0].mxu0
      %v693 = vadd.f32 0.0, %v692
      %v694 = vpop.f32.mrb[0].mxu0
      %v695 = vpop.f32.mrb[0].mxu0
      %v696 = vadd.f32 0.0, %v695
      %v697 = vpop.f32.mrb[0].mxu0
      %698 = vmatprep.mubr.bf16.mxu0 0
      %699 = vmatmul.mubr.bf16.gmra.mrb[0].mxu0 %v481
      %v700 = vpop.f32.mrb[0].mxu0
      %v701 = vadd.f32 0.0, %v700
      %v702 = vpop.f32.mrb[0].mxu0
      %v703 = vpop.f32.mrb[0].mxu0
      %v704 = vadd.f32 0.0, %v703
      %v705 = vpop.f32.mrb[0].mxu0
      %706 = vmatprep.mubr.bf16.mxu0 0
      %707 = vmatmul.mubr.bf16.gmra.mrb[0].mxu0 %v484
      %v708 = vpop.f32.mrb[0].mxu0
      %v709 = vadd.f32 0.0, %v708
      %v710 = vpop.f32.mrb[0].mxu0
      %v711 = vpop.f32.mrb[0].mxu0
      %v712 = vadd.f32 0.0, %v711
      %v713 = vpop.f32.mrb[0].mxu0
      %714 = vmatprep.mubr.bf16.mxu0 0
      %715 = vmatmul.mubr.bf16.gmra.mrb[0].mxu0 %v487
      %v716 = vpop.f32.mrb[0].mxu0
      %v717 = vadd.f32 0.0, %v716
      %v718 = vpop.f32.mrb[0].mxu0
      %v719 = vpop.f32.mrb[0].mxu0
      %v720 = vadd.f32 0.0, %v719
      %v721 = vpop.f32.mrb[0].mxu0
      %722 = vmatprep.mubr.bf16.mxu0 0
      %723 = vmatmul.mubr.bf16.gmra.mrb[0].mxu0 %v490
      %v724 = vpop.f32.mrb[0].mxu0
      %v725 = vadd.f32 0.0, %v724
      %v726 = vpop.f32.mrb[0].mxu0
      %v727 = vpop.f32.mrb[0].mxu0
      %v728 = vadd.f32 0.0, %v727
      %v729 = vpop.f32.mrb[0].mxu0
      %730 = vmatprep.mubr.bf16.mxu0 0
      %731 = vmatmul.mubr.bf16.gmra.mrb[0].mxu0 %v493
      %v732 = vpop.f32.mrb[0].mxu0
      %v733 = vadd.f32 0.0, %v732
      %v734 = vpop.f32.mrb[0].mxu0
      %v735 = vpop.f32.mrb[0].mxu0
      %v736 = vadd.f32 0.0, %v735
      %v737 = vpop.f32.mrb[0].mxu0
      %738 = vmatprep.mubr.bf16.mxu0 0
      %739 = vmatmul.mubr.bf16.gmra.mrb[0].mxu0 %v496
      %v740 = vpop.f32.mrb[0].mxu0
      %v741 = vadd.f32 0.0, %v740
      %v742 = vpop.f32.mrb[0].mxu0
      %v743 = vpop.f32.mrb[0].mxu0
      %v744 = vadd.f32 0.0, %v743
      %v745 = vpop.f32.mrb[0].mxu0
      %746 = vmatprep.mubr.bf16.mxu0 0
      %747 = vmatmul.mubr.bf16.gmra.mrb[0].mxu0 %v499
      %v748 = vpop.f32.mrb[0].mxu0
      %v749 = vadd.f32 0.0, %v748
      %v750 = vpop.f32.mrb[0].mxu0
      %v751 = vpop.f32.mrb[0].mxu0
      %v752 = vadd.f32 0.0, %v751
      %v753 = vpop.f32.mrb[0].mxu0
      %754 = vmatprep.mubr.bf16.mxu0 0
      %755 = vmatmul.mubr.bf16.gmra.mrb[0].mxu0 %v502
      %v756 = vpop.f32.mrb[0].mxu0
      %v757 = vadd.f32 0.0, %v756
      %v758 = vpop.f32.mrb[0].mxu0
      %v759 = vpop.f32.mrb[0].mxu0
      %v760 = vadd.f32 0.0, %v759
      %v761 = vpop.f32.mrb[0].mxu0
      %762 = vmatprep.mubr.bf16.mxu0 0
      %763 = vmatmul.mubr.bf16.gmra.mrb[0].mxu0 %v505
      %v764 = vpop.f32.mrb[0].mxu0
      %v765 = vadd.f32 0.0, %v764
      %v766 = vpop.f32.mrb[0].mxu0
      %v767 = vpop.f32.mrb[0].mxu0
      %v768 = vadd.f32 0.0, %v767
      %v769 = vpop.f32.mrb[0].mxu0
      %770 = vmatprep.mubr.bf16.mxu0 0
      %771 = vmatmul.mubr.bf16.gmra.mrb[0].mxu0 %v508
      %v772 = vpop.f32.mrb[0].mxu0
      %v773 = vadd.f32 0.0, %v772
      %v774 = vpop.f32.mrb[0].mxu0
      %v775 = vpop.f32.mrb[0].mxu0
      %v776 = vadd.f32 0.0, %v775
      %v777 = vpop.f32.mrb[0].mxu0
      %778 = vmatprep.mubr.bf16.mxu0 0
      %779 = vmatmul.mubr.bf16.gmra.mrb[0].mxu0 %v511
      %v780 = vpop.f32.mrb[0].mxu0
      %v781 = vadd.f32 0.0, %v780
      %v782 = vpop.f32.mrb[0].mxu0
      %v783 = vpop.f32.mrb[0].mxu0
      %v784 = vadd.f32 0.0, %v783
      %v785 = vpop.f32.mrb[0].mxu0
      %786 = vmatprep.mubr.bf16.mxu0 0
      %787 = vmatmul.mubr.bf16.gmra.mrb[0].mxu0 %v514
      %v788 = vpop.f32.mrb[0].mxu0
      %v789 = vadd.f32 0.0, %v788
      %v790 = vpop.f32.mrb[0].mxu0
      %v791 = vpop.f32.mrb[0].mxu0
      %v792 = vadd.f32 0.0, %v791
      %v793 = vpop.f32.mrb[0].mxu0
      %794 = vmatprep.mubr.bf16.mxu0 0
      %795 = vmatmul.mubr.bf16.gmra.mrb[0].mxu0 %v517
      %v796 = vpop.f32.mrb[0].mxu0
      %v797 = vadd.f32 0.0, %v796
      %v798 = vpop.f32.mrb[0].mxu0
      %v799 = vpop.f32.mrb[0].mxu0
      %v800 = vadd.f32 0.0, %v799
      %v801 = vpop.f32.mrb[0].mxu0
      %802 = vmatprep.mubr.bf16.mxu0 0
      %803 = vmatmul.mubr.bf16.gmra.mrb[0].mxu0 %v520
      %v804 = vpop.f32.mrb[0].mxu0
      %v805 = vadd.f32 0.0, %v804
      %v806 = vpop.f32.mrb[0].mxu0
      %v807 = vpop.f32.mrb[0].mxu0
      %v808 = vadd.f32 0.0, %v807
      %v809 = vpop.f32.mrb[0].mxu0
      %810 = vdwg.mxu0
      %v811 = vtanh.pop %v557
      %v812 = vtanh.pop %v560
      %v813 = vtanh.pop %v565
      %v814 = vtanh.pop %v568
      %v815 = vtanh.pop %v573
      %v816 = vtanh.pop %v576
      %v817 = vtanh.pop %v581
      %v818 = vtanh.pop %v584
      %v819 = vtanh.pop %v589
      %v820 = vtanh.pop %v592
      %v821 = vtanh.pop %v597
      %v822 = vtanh.pop %v600
      %v823 = vtanh.pop %v605
      %v824 = vtanh.pop %v608
      %v825 = vtanh.pop %v613
      %v826 = vtanh.pop %v616
      %v827 = vtanh.pop %v621
      %v828 = vtanh.pop %v624
      %v829 = vtanh.pop %v629
      %v830 = vtanh.pop %v632
      %v831 = vtanh.pop %v637
      %v832 = vtanh.pop %v640
      %v833 = vtanh.pop %v645
      %v834 = vtanh.pop %v648
      %v835 = vtanh.pop %v653
      %v836 = vtanh.pop %v656
      %v837 = vtanh.pop %v661
      %v838 = vtanh.pop %v664
      %v839 = vtanh.pop %v669
      %v840 = vtanh.pop %v672
      %v841 = vtanh.pop %v677
      %v842 = vtanh.pop %v680
      %v843 = vtanh.pop %v685
      %v844 = vtanh.pop %v688
      %v845 = vtanh.pop %v693
      %v846 = vtanh.pop %v696
      %v847 = vtanh.pop %v701
      %v848 = vtanh.pop %v704
      %v849 = vtanh.pop %v709
      %v850 = vtanh.pop %v712
      %v851 = vtanh.pop %v717
      %v852 = vtanh.pop %v720
      %v853 = vtanh.pop %v725
      %v854 = vtanh.pop %v728
      %v855 = vtanh.pop %v733
      %v856 = vtanh.pop %v736
      %v857 = vtanh.pop %v741
      %v858 = vtanh.pop %v744
      %v859 = vtanh.pop %v749
      %v860 = vtanh.pop %v752
      %v861 = vtanh.pop %v757
      %v862 = vtanh.pop %v760
      %v863 = vtanh.pop %v765
      %v864 = vtanh.pop %v768
      %v865 = vtanh.pop %v773
      %v866 = vtanh.pop %v776
      %v867 = vtanh.pop %v781
      %v868 = vtanh.pop %v784
      %v869 = vtanh.pop %v789
      %v870 = vtanh.pop %v792
      %v871 = vtanh.pop %v797
      %v872 = vtanh.pop %v800
      %v873 = vtanh.pop %v805
      %v874 = vtanh.pop %v808
      %vm875 = vcmask 23552
      %876 = vst.msk [vmem:[%s182] sm:$0xff] %vm875, %v811
      %877 = vst.msk [vmem:[%s182 + $0x8] sm:$0xff] %vm875, %v812
      %878 = vst.msk [vmem:[%s182 + $0x10] sm:$0xff] %vm875, %v813
      %879 = vst.msk [vmem:[%s182 + $0x18] sm:$0xff] %vm875, %v814
      %880 = vst.msk [vmem:[%s182 + $0x20] sm:$0xff] %vm875, %v815
      %881 = vst.msk [vmem:[%s182 + $0x28] sm:$0xff] %vm875, %v816
      %882 = vst.msk [vmem:[%s182 + $0x30] sm:$0xff] %vm875, %v817
      %883 = vst.msk [vmem:[%s182 + $0x38] sm:$0xff] %vm875, %v818
      %884 = vst.msk [vmem:[%s182 + $0x40] sm:$0xff] %vm875, %v819
      %885 = vst.msk [vmem:[%s182 + $0x48] sm:$0xff] %vm875, %v820
      %886 = vst.msk [vmem:[%s182 + $0x50] sm:$0xff] %vm875, %v821
      %887 = vst.msk [vmem:[%s182 + $0x58] sm:$0xff] %vm875, %v822
      %888 = vst.msk [vmem:[%s182 + $0x60] sm:$0xff] %vm875, %v823
      %889 = vst.msk [vmem:[%s182 + $0x68] sm:$0xff] %vm875, %v824
      %890 = vst.msk [vmem:[%s182 + $0x70] sm:$0xff] %vm875, %v825
      %891 = vst.msk [vmem:[%s182 + $0x78] sm:$0xff] %vm875, %v826
      %892 = vst.msk [vmem:[%s182 + $0x80] sm:$0xff] %vm875, %v827
      %893 = vst.msk [vmem:[%s182 + $0x88] sm:$0xff] %vm875, %v828
      %894 = vst.msk [vmem:[%s182 + $0x90] sm:$0xff] %vm875, %v829
      %895 = vst.msk [vmem:[%s182 + $0x98] sm:$0xff] %vm875, %v830
      %896 = vst.msk [vmem:[%s182 + $0xa0] sm:$0xff] %vm875, %v831
      %897 = vst.msk [vmem:[%s182 + $0xa8] sm:$0xff] %vm875, %v832
      %898 = vst.msk [vmem:[%s182 + $0xb0] sm:$0xff] %vm875, %v833
      %899 = vst.msk [vmem:[%s182 + $0xb8] sm:$0xff] %vm875, %v834
      %900 = vst.msk [vmem:[%s182 + $0xc0] sm:$0xff] %vm875, %v835
      %901 = vst.msk [vmem:[%s182 + $0xc8] sm:$0xff] %vm875, %v836
      %902 = vst.msk [vmem:[%s182 + $0xd0] sm:$0xff] %vm875, %v837
      %903 = vst.msk [vmem:[%s182 + $0xd8] sm:$0xff] %vm875, %v838
      %904 = vst.msk [vmem:[%s182 + $0xe0] sm:$0xff] %vm875, %v839
      %905 = vst.msk [vmem:[%s182 + $0xe8] sm:$0xff] %vm875, %v840
      %906 = vst.msk [vmem:[%s182 + $0xf0] sm:$0xff] %vm875, %v841
      %907 = vst.msk [vmem:[%s182 + $0xf8] sm:$0xff] %vm875, %v842
      %908 = vst.msk [vmem:[%s182 + $0x100] sm:$0xff] %vm875, %v843
      %909 = vst.msk [vmem:[%s182 + $0x108] sm:$0xff] %vm875, %v844
      %910 = vst.msk [vmem:[%s182 + $0x110] sm:$0xff] %vm875, %v845
      %911 = vst.msk [vmem:[%s182 + $0x118] sm:$0xff] %vm875, %v846
      %912 = vst.msk [vmem:[%s182 + $0x120] sm:$0xff] %vm875, %v847
      %913 = vst.msk [vmem:[%s182 + $0x128] sm:$0xff] %vm875, %v848
      %914 = vst.msk [vmem:[%s182 + $0x130] sm:$0xff] %vm875, %v849
      %915 = vst.msk [vmem:[%s182 + $0x138] sm:$0xff] %vm875, %v850
      %916 = vst.msk [vmem:[%s182 + $0x140] sm:$0xff] %vm875, %v851
      %917 = vst.msk [vmem:[%s182 + $0x148] sm:$0xff] %vm875, %v852
      %918 = vst.msk [vmem:[%s182 + $0x150] sm:$0xff] %vm875, %v853
      %919 = vst.msk [vmem:[%s182 + $0x158] sm:$0xff] %vm875, %v854
      %920 = vst.msk [vmem:[%s182 + $0x160] sm:$0xff] %vm875, %v855
      %921 = vst.msk [vmem:[%s182 + $0x168] sm:$0xff] %vm875, %v856
      %922 = vst.msk [vmem:[%s182 + $0x170] sm:$0xff] %vm875, %v857
      %923 = vst.msk [vmem:[%s182 + $0x178] sm:$0xff] %vm875, %v858
      %924 = vst.msk [vmem:[%s182 + $0x180] sm:$0xff] %vm875, %v859
      %925 = vst.msk [vmem:[%s182 + $0x188] sm:$0xff] %vm875, %v860
      %926 = vst.msk [vmem:[%s182 + $0x190] sm:$0xff] %vm875, %v861
      %927 = vst.msk [vmem:[%s182 + $0x198] sm:$0xff] %vm875, %v862
      %928 = vst.msk [vmem:[%s182 + $0x1a0] sm:$0xff] %vm875, %v863
      %929 = vst.msk [vmem:[%s182 + $0x1a8] sm:$0xff] %vm875, %v864
      %930 = vst.msk [vmem:[%s182 + $0x1b0] sm:$0xff] %vm875, %v865
      %931 = vst.msk [vmem:[%s182 + $0x1b8] sm:$0xff] %vm875, %v866
      %932 = vst.msk [vmem:[%s182 + $0x1c0] sm:$0xff] %vm875, %v867
      %933 = vst.msk [vmem:[%s182 + $0x1c8] sm:$0xff] %vm875, %v868
      %934 = vst.msk [vmem:[%s182 + $0x1d0] sm:$0xff] %vm875, %v869
      %935 = vst.msk [vmem:[%s182 + $0x1d8] sm:$0xff] %vm875, %v870
      %936 = vst.msk [vmem:[%s182 + $0x1e0] sm:$0xff] %vm875, %v871
      %937 = vst.msk [vmem:[%s182 + $0x1e8] sm:$0xff] %vm875, %v872
      %938 = vst.msk [vmem:[%s182 + $0x1f0] sm:$0xff] %vm875, %v873
      %939 = vst.msk [vmem:[%s182 + $0x1f8] sm:$0xff] %vm875, %v874
      %s940 = smul.u32 64, %s17
      %p941 = scmp.lt.s32.totalorder %s940, 255
      %s942 = scalar_select %p941, %s940, 255
      %p943 = scmp.lt.s32.totalorder %s18, 0
      %s944 = scalar_select %p943, %s18, 0
      %s945 = sadd.s32 %s944, %s942
      %s946 = smul.addr %s945, 8
      %s947 = scalar_lea.vmem %s2, %s946
      // Predicated region
      $region29: #{generator_forward.56} parent=27 // pred_check
        %p948 = pneg %p97
      $region30: #{generator_forward.56} parent=27 // pred_check_branch
        %950 = sbr.rel (%p948) target = $region32
      $region31: #{generator_forward.56} parent=27 // pred_region
        %s951 = smul.u32 64, %s17
      $region32: #{generator_forward.56} parent=27 // pred_fallthru
        _
    $region28: #{generator_forward.56} parent=5 // pred_fallthru
      _
    %p952 = scmp.le.s32.totalorder 2, %s8
    // Predicated region
    $region33: #{generator_forward.56} parent=5 // pred_check
      %p953 = pneg %p952
    $region34: #{generator_forward.56} parent=5 // pred_check_branch
      %955 = sbr.rel (%p953) target = $region36
    $region35: #{generator_forward.56} parent=5 // pred_region
      %s956 = ssub.s32 %s8, 2
      // Predicated region
      $region37: #{generator_forward.56} parent=35 // pred_check
        %p957 = pneg %p103
      $region38: #{generator_forward.56} parent=35 // pred_check_branch
        %959 = sbr.rel (%p957) target = $region40
      $region39: #{generator_forward.56} parent=35 // pred_region
        %s960 = smul.u32 64, %s19
        %p961 = scmp.lt.s32.totalorder %s960, 255
        %s962 = scalar_select %p961, %s960, 255
        %p963 = scmp.lt.s32.totalorder %s20, 0
        %s964 = scalar_select %p963, %s20, 0
        %s965 = sadd.s32 %s964, %s962
        %s966 = smul.addr %s965, 8
        %s967 = scalar_lea.vmem %s2, %s966
      $region40: #{generator_forward.56} parent=35 // pred_fallthru
        _
    $region36: #{generator_forward.56} parent=5 // pred_fallthru
      _
  $region6: #{generator_forward.56} parent=0 // loop_footer
    %s12 = sadd.s32 1, %s8
  $region7: #{generator_forward.56} parent=0 // loop_footer_branch
    %7 = sbr.rel target = $region3
  $region8: #{generator_forward.56} parent=0 // loop_exit
    _

</llo_original>
